<compile_context>
chip_gen: v6e
topology: v6e:2x2x1
jax: 0.10.0
libtpu: 0.0.40
codegen_flags: <defaults>
</compile_context>

<pallas_src>
import jax
import jax.numpy as jnp
import numpy as np
from jax import lax
from jax.experimental import pallas as pl
from jax.experimental.pallas import tpu as pltpu

# ----------------------- configuration (small demo sizes) -----------------------
B, C1, H, W_ = 2, 4, 16, 16           # input  (B, C1, H, W)
C2 = 8                                # output channels of C2f_SimAM
N_BOTTLE = 1                          # n=1 bottleneck (shortcut=False default)
E = 0.5
C_HID = int(C2 * E)                   # hidden channel count "self.c" = 4
HW = H * W_
E_LAMBDA = 1e-4                       # SimAM lambda
BN_EPS = 1e-5                         # nn.BatchNorm2d default eps
PAD = 128                             # lane-aligned zero border of the shift buffer

# Sublane padding of the channel axes.
SUB = 8
C1P = ((C1 + SUB - 1) // SUB) * SUB   # 8
CP = ((C_HID + SUB - 1) // SUB) * SUB  # 8
assert C2 % SUB == 0                  # 8 output channels, already aligned
assert PAD >= W_ + 1, "vertical taps must land inside the zero border"
assert HW % 128 == 0 and PAD % 128 == 0

# MXU precision: at 4-8 channels the MXU is <1% utilized and, after the
# im2col / cv2 fusion, only 4 matmuls remain per grid step, so HIGHEST costs
# nothing measurable here and keeps a strict f32 reference check that guards
# the risky structural parts (border masks, im2col weight packing).  At
# production C2f channel counts switch this to lax.Precision.DEFAULT
# (single bf16 MXU pass) and loosen the test tolerance accordingly.
MATMUL_PRECISION = lax.Precision.HIGHEST


# ----------------------------- in-kernel helpers -----------------------------
def _sigmoid(x):
    # exp is EUP work; the divide lowers to the EUP reciprocal path already.
    return 1.0 / (1.0 + jnp.exp(-x))


def _silu(x):
    return x * _sigmoid(x)


def _dot(a, b):
    return jnp.dot(a, b, precision=MATMUL_PRECISION,
                   preferred_element_type=jnp.float32)


def _conv3x3_same(xin, w_ref, b_ref, pad_ref, cols_ref, mask_l, mask_r):
    """3x3 stride-1 'same' conv on a flattened (CP, H*W) map via im2col.

    w_ref   : (CP, 9*CP) weights; column t*CP+ci holds w[co, ci, t//3, t%3].
    pad_ref : (CP, HW + 2*PAD) line buffer; borders are already zero, interior
              is fully overwritten here.
    cols_ref: (9*CP, HW) im2col scratch.
    mask_l / mask_r: column masks killing the horizontal wrap of the flattened
              shift for dx = -1 / +1.  Vertical out-of-range taps (dy = +-1)
              read the zero border (PAD >= W+1), so no row mask is needed.
    """
    hw = xin.shape[1]
    pad_ref[:, PAD:PAD + hw] = xin
    for t in range(9):
        dy = t // 3 - 1
        dx = t % 3 - 1
        k = dy * W_ + dx
        s = pad_ref[:, PAD + k:PAD + k + hw]   # s[c, p] = x[c, p + k] (0 outside)
        if dx == -1:
            s = jnp.where(mask_l, s, 0.0)
        elif dx == 1:
            s = jnp.where(mask_r, s, 0.0)
        cols_ref[t * CP:(t + 1) * CP, :] = s
    # single K = 9*CP matmul; accumulation happens inside the MXU.
    return _dot(w_ref[...], cols_ref[...]) + b_ref[...]


# --------------------------------- the kernel ---------------------------------
def c2f_simam_kernel(x_ref,
                     w1_ref, b1_ref,
                     w3a_ref, b3a_ref, w3b_ref, b3b_ref,
                     w2_ref, b2_ref,
                     o_ref, pad_ref, cols_ref):
    x = x_ref[...]                                            # (C1P, HW)

    # Zero only the two PAD-wide borders of the shift buffer (full (8,128)
    # tile stores); the interior is always fully overwritten by each conv.
    # Done once per grid step (not gated on program_id==0: under "parallel"
    # semantics each core runs its own grid subset with its own scratch).
    border = jnp.zeros((CP, PAD), jnp.float32)
    pad_ref[:, 0:PAD] = border
    pad_ref[:, PAD + HW:] = border

    # Horizontal 'same'-padding column masks, computed once and shared by both
    # 3x3 convs (dx = 0 taps need no mask at all).
    jj = lax.broadcasted_iota(jnp.int32, (CP, HW), 1) % W_
    mask_l = jj >= 1              # dx = -1: column 0 has no left neighbour
    mask_r = jj <= W_ - 2         # dx = +1: column W-1 has no right neighbour

    # cv1 : one 1x1 conv (BN folded) + SiLU producing [y0_pad ; y1_pad].
    t01 = _silu(_dot(w1_ref[...], x) + b1_ref[...])           # (2*CP, HW)
    y1 = t01[CP:, :]                                          # (CP, HW)

    # Bottleneck (shortcut=False): two 3x3 same convs (+ folded BN) + SiLU.
    m1 = _silu(_conv3x3_same(y1, w3a_ref, b3a_ref, pad_ref, cols_ref,
                             mask_l, mask_r))
    m2 = _silu(_conv3x3_same(m1, w3b_ref, b3b_ref, pad_ref, cols_ref,
                             mask_l, mask_r))

    # cv2 : single 1x1 conv on concat([y0, y1, m2]); the operands are laid out
    # contiguously in the (reused) im2col scratch -> one K = 3*CP matmul.
    cols_ref[0:2 * CP, :] = t01
    cols_ref[2 * CP:3 * CP, :] = m2
    z = _silu(_dot(w2_ref[...], cols_ref[0:3 * CP, :]) + b2_ref[...])  # (C2, HW)

    # SimAM attention (per-channel spatial statistics).
    n = jnp.float32(HW - 1)
    mu = jnp.mean(z, axis=1, keepdims=True)                   # (C2, 1)
    d = (z - mu) ** 2
    denom = 4.0 * (jnp.sum(d, axis=1, keepdims=True) / n + E_LAMBDA)
    y_att = d / denom + 0.5
    o_ref[...] = z * _sigmoid(y_att)


# ------------------------------ host-side wrapper ------------------------------
def c2f_simam_pallas(x_flat, kparams):
    def full_spec(arr):
        nd = arr.ndim
        return pl.BlockSpec(arr.shape, lambda b, _nd=nd: (0,) * _nd)

    in_specs = [pl.BlockSpec((None, C1P, HW), lambda b: (b, 0, 0))]
    in_specs += [full_spec(a) for a in kparams]

    return pl.pallas_call(
        c2f_simam_kernel,
        out_shape=jax.ShapeDtypeStruct((B, C2, HW), jnp.float32),
        grid=(B,),
        in_specs=in_specs,
        out_specs=pl.BlockSpec((None, C2, HW), lambda b: (b, 0, 0)),
        scratch_shapes=[pltpu.VMEM((CP, HW + 2 * PAD), jnp.float32),
                        pltpu.VMEM((9 * CP, HW), jnp.float32)],
        # Batch steps are independent -> "parallel" lets v7x's two TensorCores
        # each take one image; a no-op on single-TC v5e/v6e.
        compiler_params=pltpu.CompilerParams(dimension_semantics=("parallel",)),
    )(x_flat, *kparams)


# ----------------------- deterministic parameter creation -----------------------
def folded_conv(key, cout, cin, ksize):
    """Conv2d(bias=False) + eval-mode BatchNorm2d, folded into (W, b)."""
    kw, kg, kb, km, kv = jax.random.split(key, 5)
    w = jax.random.normal(kw, (cout, cin, ksize, ksize), jnp.float32)
    w = w / np.sqrt(cin * ksize * ksize)
    gamma = 1.0 + 0.1 * jax.random.normal(kg, (cout,), jnp.float32)
    beta = 0.05 * jax.random.normal(kb, (cout,), jnp.float32)
    rmean = 0.05 * jax.random.normal(km, (cout,), jnp.float32)
    rvar = jax.random.uniform(kv, (cout,), jnp.float32, minval=0.5, maxval=1.5)
    scale = gamma / jnp.sqrt(rvar + BN_EPS)
    return w * scale[:, None, None, None], beta - rmean * scale


def pack_for_kernel(wcv1, bcv1, wb1, bb1, wb2, bb2, wcv2, bcv2):
    """Pad all channel axes to multiples of 8 and pre-flatten weights so the
    kernel does exactly four matmuls: cv1 (K=C1P), two im2col 3x3 (K=9*CP),
    cv2 (K=3*CP)."""
    # cv1: (2*CP, C1P) producing [y0_pad ; y1_pad] in one matmul.
    w1 = jnp.zeros((2 * CP, C1P), jnp.float32)
    w1 = w1.at[0:C_HID, 0:C1].set(wcv1[:C_HID, :, 0, 0])
    w1 = w1.at[CP:CP + C_HID, 0:C1].set(wcv1[C_HID:, :, 0, 0])
    b1 = jnp.zeros((2 * CP, 1), jnp.float32)
    b1 = b1.at[0:C_HID, 0].set(bcv1[:C_HID])
    b1 = b1.at[CP:CP + C_HID, 0].set(bcv1[C_HID:])

    # 3x3 convs: (CP, 9*CP) with column t*CP+ci = w[co, ci, t//3, t%3].
    def pack3x3(w, b):
        wtap = jnp.transpose(w, (0, 2, 3, 1)).reshape(C_HID, 9, C_HID)  # [co,t,ci]
        wf = jnp.zeros((CP, 9 * CP), jnp.float32)
        for t in range(9):
            wf = wf.at[0:C_HID, t * CP:t * CP + C_HID].set(wtap[:, t, :])
        bf = jnp.zeros((CP, 1), jnp.float32).at[0:C_HID, 0].set(b)
        return wf, bf

    w3a, b3a = pack3x3(wb1, bb1)
    w3b, b3b = pack3x3(wb2, bb2)

    # cv2: (C2, 3*CP) acting on the padded concat [y0_pad; y1_pad; m2_pad].
    w2 = jnp.zeros((C2, 3 * CP), jnp.float32)
    for seg in range(3):
        w2 = w2.at[:, seg * CP:seg * CP + C_HID].set(
            wcv2[:, seg * C_HID:(seg + 1) * C_HID, 0, 0])
    b2 = bcv2[:, None]
    return (w1, b1, w3a, b3a, w3b, b3b, w2, b2)


# ------------------------------ pure-JAX reference ------------------------------
def _conv_bn_silu_ref(x, w, b, pad):
    y = lax.conv_general_dilated(
        x, w, window_strides=(1, 1), padding=[(pad, pad), (pad, pad)],
        dimension_numbers=("NCHW", "OIHW", "NCHW"),
        precision=lax.Precision.HIGHEST)
    y = y + b[None, :, None, None]
    return y * jax.nn.sigmoid(y)


def c2f_simam_ref(x, raw):
    wcv1, bcv1, wb1, bb1, wb2, bb2, wcv2, bcv2 = raw
    t = _conv_bn_silu_ref(x, wcv1, bcv1, 0)
    y0, y1 = t[:, :C_HID], t[:, C_HID:]
    m1 = _conv_bn_silu_ref(y1, wb1, bb1, 1)
    m2 = _conv_bn_silu_ref(m1, wb2, bb2, 1)
    z = _conv_bn_silu_ref(jnp.concatenate([y0, y1, m2], axis=1), wcv2, bcv2, 0)
    mu = jnp.mean(z, axis=(2, 3), keepdims=True)
    d = (z - mu) ** 2
    n = H * W_ - 1
    y = d / (4.0 * (jnp.sum(d, axis=(2, 3), keepdims=True) / n + E_LAMBDA)) + 0.5
    return z * jax.nn.sigmoid(y)


# ------------------------------------ main ------------------------------------
if __name__ == "__main__":
    key = jax.random.PRNGKey(0)
    kx, kp = jax.random.split(key)
    x = jax.random.normal(kx, (B, C1, H, W_), jnp.float32)

    kc = jax.random.split(kp, 4)
    wcv1, bcv1 = folded_conv(kc[0], 2 * C_HID, C1, 1)                      # cv1
    wb1, bb1 = folded_conv(kc[1], C_HID, C_HID, 3)                         # m[0].cv1
    wb2, bb2 = folded_conv(kc[2], C_HID, C_HID, 3)                         # m[0].cv2
    wcv2, bcv2 = folded_conv(kc[3], C2, (2 + N_BOTTLE) * C_HID, 1)         # cv2
    raw = (wcv1, bcv1, wb1, bb1, wb2, bb2, wcv2, bcv2)

    kparams = pack_for_kernel(*raw)
    # zero-pad the input channel axis up to C1P sublanes
    x_flat = jnp.zeros((B, C1P, HW), jnp.float32).at[:, :C1, :].set(
        x.reshape(B, C1, HW))

    out_flat = jax.block_until_ready(c2f_simam_pallas(x_flat, kparams))
    out = out_flat.reshape(B, C2, H, W_)

    ref = jax.block_until_ready(c2f_simam_ref(x, raw))
    max_err = float(jnp.max(jnp.abs(out - ref)))
    assert out.shape == (B, C2, H, W_)
    assert np.isfinite(max_err) and max_err < 1e-3, f"mismatch vs reference: {max_err}"

    print("KERNEL_OK")
</pallas_src>

<mosaic_0001>
module attributes {stable_mosaic.version = 11 : i64} {
  func.func @c2f_simam_kernel(%arg0: i32, %arg1: memref<1x8x256xf32, #tpu.memory_space<vmem>>, %arg2: memref<16x8xf32, #tpu.memory_space<vmem>>, %arg3: memref<16x1xf32, #tpu.memory_space<vmem>>, %arg4: memref<8x72xf32, #tpu.memory_space<vmem>>, %arg5: memref<8x1xf32, #tpu.memory_space<vmem>>, %arg6: memref<8x72xf32, #tpu.memory_space<vmem>>, %arg7: memref<8x1xf32, #tpu.memory_space<vmem>>, %arg8: memref<8x24xf32, #tpu.memory_space<vmem>>, %arg9: memref<8x1xf32, #tpu.memory_space<vmem>>, %arg10: memref<1x8x256xf32, #tpu.memory_space<vmem>>, %arg11: memref<8x512xf32, #tpu.memory_space<vmem>>, %arg12: memref<72x256xf32, #tpu.memory_space<vmem>>) attributes {dimension_semantics = [#tpu.dimension_semantics<parallel>], iteration_bounds = array<i64: 2>, scalar_prefetch = 0 : i64, scratch_operands = 2 : i64, tpu.core_type = #tpu.core_type<tc>, window_params = [{transform_indices = @transform_0, window_bounds = array<i64: 1, 8, 256>}, {pipeline_mode = #tpu.pipeline_mode<synchronous>, transform_indices = @transform_1, window_bounds = array<i64: 16, 8>}, {pipeline_mode = #tpu.pipeline_mode<synchronous>, transform_indices = @transform_2, window_bounds = array<i64: 16, 1>}, {pipeline_mode = #tpu.pipeline_mode<synchronous>, transform_indices = @transform_3, window_bounds = array<i64: 8, 72>}, {pipeline_mode = #tpu.pipeline_mode<synchronous>, transform_indices = @transform_4, window_bounds = array<i64: 8, 1>}, {pipeline_mode = #tpu.pipeline_mode<synchronous>, transform_indices = @transform_5, window_bounds = array<i64: 8, 72>}, {pipeline_mode = #tpu.pipeline_mode<synchronous>, transform_indices = @transform_6, window_bounds = array<i64: 8, 1>}, {pipeline_mode = #tpu.pipeline_mode<synchronous>, transform_indices = @transform_7, window_bounds = array<i64: 8, 24>}, {pipeline_mode = #tpu.pipeline_mode<synchronous>, transform_indices = @transform_8, window_bounds = array<i64: 8, 1>}, {transform_indices = @transform_9, window_bounds = array<i64: 1, 8, 256>}]} {
    %c0 = arith.constant 0 : index
    %c0_0 = arith.constant 0 : index
    %c0_1 = arith.constant 0 : index
    %0 = vector.load %arg1[%c0, %c0_0, %c0_1] : memref<1x8x256xf32, #tpu.memory_space<vmem>>, vector<1x8x256xf32>
    %1 = vector.shape_cast %0 : vector<1x8x256xf32> to vector<8x256xf32>
    %cst = arith.constant 0.000000e+00 : f32
    %2 = vector.broadcast %cst : f32 to vector<8x128xf32>
    %c0_2 = arith.constant 0 : index
    %c0_3 = arith.constant 0 : index
    %3 = vector.load %arg11[%c0_2, %c0_3] : memref<8x512xf32, #tpu.memory_space<vmem>>, vector<8x128xf32>
    tpu.vector_store %arg11[%c0_2, %c0_3], %2 {strides = array<i32>} : memref<8x512xf32, #tpu.memory_space<vmem>>, vector<8x128xf32>,
    %c0_4 = arith.constant 0 : index
    %c384 = arith.constant 384 : index
    %4 = vector.load %arg11[%c0_4, %c384] : memref<8x512xf32, #tpu.memory_space<vmem>>, vector<8x128xf32>
    tpu.vector_store %arg11[%c0_4, %c384], %2 {strides = array<i32>} : memref<8x512xf32, #tpu.memory_space<vmem>>, vector<8x128xf32>,
    %5 = tpu.iota {dimensions = array<i32: 1>} : vector<8x256xi32>
    %c16_i32 = arith.constant 16 : i32
    %c0_i32 = arith.constant 0 : i32
    %6 = arith.cmpi eq, %c16_i32, %c0_i32 : i32
    %c1_i32 = arith.constant 1 : i32
    %7 = arith.select %6, %c1_i32, %c16_i32 : i32
    %8 = vector.broadcast %7 : i32 to vector<8x256xi32>
    %9 = arith.remsi %5, %8 : vector<8x256xi32>
    %c0_i32_5 = arith.constant 0 : i32
    %10 = vector.broadcast %c0_i32_5 : i32 to vector<8x256xi32>
    %11 = arith.cmpi ne, %9, %10 : vector<8x256xi32>
    %c0_i32_6 = arith.constant 0 : i32
    %12 = vector.broadcast %c0_i32_6 : i32 to vector<8x256xi32>
    %13 = arith.cmpi slt, %9, %12 : vector<8x256xi32>
    %c0_i32_7 = arith.constant 0 : i32
    %14 = arith.cmpi slt, %7, %c0_i32_7 : i32
    %15 = vector.broadcast %14 : i1 to vector<8x256xi1>
    %16 = vector.broadcast %15 : vector<8x256xi1> to vector<8x256xi1>
    %17 = arith.xori %13, %16 : vector<8x256xi1>
    %18 = arith.andi %17, %11 : vector<8x256xi1>
    %19 = vector.broadcast %7 : i32 to vector<8x256xi32>
    %20 = arith.addi %9, %19 : vector<8x256xi32>
    %21 = arith.select %18, %20, %9 : vector<8x256xi1>, vector<8x256xi32>
    %c1_i32_8 = arith.constant 1 : i32
    %22 = vector.broadcast %c1_i32_8 : i32 to vector<8x256xi32>
    %23 = arith.cmpi sge, %21, %22 : vector<8x256xi32>
    %c14_i32 = arith.constant 14 : i32
    %24 = vector.broadcast %c14_i32 : i32 to vector<8x256xi32>
    %25 = arith.cmpi sle, %21, %24 : vector<8x256xi32>
    %c0_9 = arith.constant 0 : index
    %c0_10 = arith.constant 0 : index
    %26 = vector.load %arg2[%c0_9, %c0_10] : memref<16x8xf32, #tpu.memory_space<vmem>>, vector<16x8xf32>
    %cst_11 = arith.constant dense<0.000000e+00> : vector<16x256xf32>
    %27 = tpu.matmul %26, %1, %cst_11 {dimension_numbers = #tpu.dot_dimension_numbers<[1], [0], [0], [1], [0, 0, 1, 1], [], []>, precision = #tpu.contract_precision<fp32>} : vector<16x8xf32>, vector<8x256xf32>, vector<16x256xf32> -> vector<16x256xf32>
    %c0_12 = arith.constant 0 : index
    %c0_13 = arith.constant 0 : index
    %28 = vector.load %arg3[%c0_12, %c0_13] : memref<16x1xf32, #tpu.memory_space<vmem>>, vector<16x1xf32>
    %29 = vector.broadcast %28 : vector<16x1xf32> to vector<16x256xf32>
    %30 = arith.addf %27, %29 : vector<16x256xf32>
    %cst_14 = arith.constant 0.000000e+00 : f32
    %31 = vector.broadcast %cst_14 : f32 to vector<16x256xf32>
    %32 = arith.subf %31, %30 : vector<16x256xf32>
    %33 = math.exp %32 : vector<16x256xf32>
    %cst_15 = arith.constant 1.000000e+00 : f32
    %34 = vector.broadcast %cst_15 : f32 to vector<16x256xf32>
    %35 = arith.addf %34, %33 : vector<16x256xf32>
    %cst_16 = arith.constant 1.000000e+00 : f32
    %36 = vector.broadcast %cst_16 : f32 to vector<16x256xf32>
    %37 = arith.divf %36, %35 : vector<16x256xf32>
    %38 = arith.mulf %30, %37 : vector<16x256xf32>
    %39 = vector.extract_strided_slice %38 {offsets = [8, 0], sizes = [8, 256], strides = [1, 1]} : vector<16x256xf32> to vector<8x256xf32>
    %c0_17 = arith.constant 0 : index
    %c128 = arith.constant 128 : index
    %40 = vector.load %arg11[%c0_17, %c128] : memref<8x512xf32, #tpu.memory_space<vmem>>, vector<8x256xf32>
    tpu.vector_store %arg11[%c0_17, %c128], %39 {strides = array<i32>} : memref<8x512xf32, #tpu.memory_space<vmem>>, vector<8x256xf32>,
    %c0_18 = arith.constant 0 : index
    %c111 = arith.constant 111 : index
    %41 = vector.load %arg11[%c0_18, %c111] : memref<8x512xf32, #tpu.memory_space<vmem>>, vector<8x256xf32>
    %cst_19 = arith.constant 0.000000e+00 : f32
    %42 = vector.broadcast %cst_19 : f32 to vector<8x256xf32>
    %43 = arith.select %23, %41, %42 : vector<8x256xi1>, vector<8x256xf32>
    %c0_20 = arith.constant 0 : index
    %c0_21 = arith.constant 0 : index
    %44 = vector.load %arg12[%c0_20, %c0_21] : memref<72x256xf32, #tpu.memory_space<vmem>>, vector<8x256xf32>
    tpu.vector_store %arg12[%c0_20, %c0_21], %43 {strides = array<i32>} : memref<72x256xf32, #tpu.memory_space<vmem>>, vector<8x256xf32>,
    %c0_22 = arith.constant 0 : index
    %c112 = arith.constant 112 : index
    %45 = vector.load %arg11[%c0_22, %c112] : memref<8x512xf32, #tpu.memory_space<vmem>>, vector<8x256xf32>
    %c8 = arith.constant 8 : index
    %c0_23 = arith.constant 0 : index
    %46 = vector.load %arg12[%c8, %c0_23] : memref<72x256xf32, #tpu.memory_space<vmem>>, vector<8x256xf32>
    tpu.vector_store %arg12[%c8, %c0_23], %45 {strides = array<i32>} : memref<72x256xf32, #tpu.memory_space<vmem>>, vector<8x256xf32>,
    %c0_24 = arith.constant 0 : index
    %c113 = arith.constant 113 : index
    %47 = vector.load %arg11[%c0_24, %c113] : memref<8x512xf32, #tpu.memory_space<vmem>>, vector<8x256xf32>
    %cst_25 = arith.constant 0.000000e+00 : f32
    %48 = vector.broadcast %cst_25 : f32 to vector<8x256xf32>
    %49 = arith.select %25, %47, %48 : vector<8x256xi1>, vector<8x256xf32>
    %c16 = arith.constant 16 : index
    %c0_26 = arith.constant 0 : index
    %50 = vector.load %arg12[%c16, %c0_26] : memref<72x256xf32, #tpu.memory_space<vmem>>, vector<8x256xf32>
    tpu.vector_store %arg12[%c16, %c0_26], %49 {strides = array<i32>} : memref<72x256xf32, #tpu.memory_space<vmem>>, vector<8x256xf32>,
    %c0_27 = arith.constant 0 : index
    %c127 = arith.constant 127 : index
    %51 = vector.load %arg11[%c0_27, %c127] : memref<8x512xf32, #tpu.memory_space<vmem>>, vector<8x256xf32>
    %cst_28 = arith.constant 0.000000e+00 : f32
    %52 = vector.broadcast %cst_28 : f32 to vector<8x256xf32>
    %53 = arith.select %23, %51, %52 : vector<8x256xi1>, vector<8x256xf32>
    %c24 = arith.constant 24 : index
    %c0_29 = arith.constant 0 : index
    %54 = vector.load %arg12[%c24, %c0_29] : memref<72x256xf32, #tpu.memory_space<vmem>>, vector<8x256xf32>
    tpu.vector_store %arg12[%c24, %c0_29], %53 {strides = array<i32>} : memref<72x256xf32, #tpu.memory_space<vmem>>, vector<8x256xf32>,
    %c0_30 = arith.constant 0 : index
    %c128_31 = arith.constant 128 : index
    %55 = vector.load %arg11[%c0_30, %c128_31] : memref<8x512xf32, #tpu.memory_space<vmem>>, vector<8x256xf32>
    %c32 = arith.constant 32 : index
    %c0_32 = arith.constant 0 : index
    %56 = vector.load %arg12[%c32, %c0_32] : memref<72x256xf32, #tpu.memory_space<vmem>>, vector<8x256xf32>
    tpu.vector_store %arg12[%c32, %c0_32], %55 {strides = array<i32>} : memref<72x256xf32, #tpu.memory_space<vmem>>, vector<8x256xf32>,
    %c0_33 = arith.constant 0 : index
    %c129 = arith.constant 129 : index
    %57 = vector.load %arg11[%c0_33, %c129] : memref<8x512xf32, #tpu.memory_space<vmem>>, vector<8x256xf32>
    %cst_34 = arith.constant 0.000000e+00 : f32
    %58 = vector.broadcast %cst_34 : f32 to vector<8x256xf32>
    %59 = arith.select %25, %57, %58 : vector<8x256xi1>, vector<8x256xf32>
    %c40 = arith.constant 40 : index
    %c0_35 = arith.constant 0 : index
    %60 = vector.load %arg12[%c40, %c0_35] : memref<72x256xf32, #tpu.memory_space<vmem>>, vector<8x256xf32>
    tpu.vector_store %arg12[%c40, %c0_35], %59 {strides = array<i32>} : memref<72x256xf32, #tpu.memory_space<vmem>>, vector<8x256xf32>,
    %c0_36 = arith.constant 0 : index
    %c143 = arith.constant 143 : index
    %61 = vector.load %arg11[%c0_36, %c143] : memref<8x512xf32, #tpu.memory_space<vmem>>, vector<8x256xf32>
    %cst_37 = arith.constant 0.000000e+00 : f32
    %62 = vector.broadcast %cst_37 : f32 to vector<8x256xf32>
    %63 = arith.select %23, %61, %62 : vector<8x256xi1>, vector<8x256xf32>
    %c48 = arith.constant 48 : index
    %c0_38 = arith.constant 0 : index
    %64 = vector.load %arg12[%c48, %c0_38] : memref<72x256xf32, #tpu.memory_space<vmem>>, vector<8x256xf32>
    tpu.vector_store %arg12[%c48, %c0_38], %63 {strides = array<i32>} : memref<72x256xf32, #tpu.memory_space<vmem>>, vector<8x256xf32>,
    %c0_39 = arith.constant 0 : index
    %c144 = arith.constant 144 : index
    %65 = vector.load %arg11[%c0_39, %c144] : memref<8x512xf32, #tpu.memory_space<vmem>>, vector<8x256xf32>
    %c56 = arith.constant 56 : index
    %c0_40 = arith.constant 0 : index
    %66 = vector.load %arg12[%c56, %c0_40] : memref<72x256xf32, #tpu.memory_space<vmem>>, vector<8x256xf32>
    tpu.vector_store %arg12[%c56, %c0_40], %65 {strides = array<i32>} : memref<72x256xf32, #tpu.memory_space<vmem>>, vector<8x256xf32>,
    %c0_41 = arith.constant 0 : index
    %c145 = arith.constant 145 : index
    %67 = vector.load %arg11[%c0_41, %c145] : memref<8x512xf32, #tpu.memory_space<vmem>>, vector<8x256xf32>
    %cst_42 = arith.constant 0.000000e+00 : f32
    %68 = vector.broadcast %cst_42 : f32 to vector<8x256xf32>
    %69 = arith.select %25, %67, %68 : vector<8x256xi1>, vector<8x256xf32>
    %c64 = arith.constant 64 : index
    %c0_43 = arith.constant 0 : index
    %70 = vector.load %arg12[%c64, %c0_43] : memref<72x256xf32, #tpu.memory_space<vmem>>, vector<8x256xf32>
    tpu.vector_store %arg12[%c64, %c0_43], %69 {strides = array<i32>} : memref<72x256xf32, #tpu.memory_space<vmem>>, vector<8x256xf32>,
    %c0_44 = arith.constant 0 : index
    %c0_45 = arith.constant 0 : index
    %71 = vector.load %arg4[%c0_44, %c0_45] : memref<8x72xf32, #tpu.memory_space<vmem>>, vector<8x72xf32>
    %c0_46 = arith.constant 0 : index
    %c0_47 = arith.constant 0 : index
    %72 = vector.load %arg12[%c0_46, %c0_47] : memref<72x256xf32, #tpu.memory_space<vmem>>, vector<72x256xf32>
    %cst_48 = arith.constant dense<0.000000e+00> : vector<8x256xf32>
    %73 = tpu.matmul %71, %72, %cst_48 {dimension_numbers = #tpu.dot_dimension_numbers<[1], [0], [0], [1], [0, 0, 1, 1], [], []>, precision = #tpu.contract_precision<fp32>} : vector<8x72xf32>, vector<72x256xf32>, vector<8x256xf32> -> vector<8x256xf32>
    %c0_49 = arith.constant 0 : index
    %c0_50 = arith.constant 0 : index
    %74 = vector.load %arg5[%c0_49, %c0_50] : memref<8x1xf32, #tpu.memory_space<vmem>>, vector<8x1xf32>
    %75 = vector.broadcast %74 : vector<8x1xf32> to vector<8x256xf32>
    %76 = arith.addf %73, %75 : vector<8x256xf32>
    %cst_51 = arith.constant 0.000000e+00 : f32
    %77 = vector.broadcast %cst_51 : f32 to vector<8x256xf32>
    %78 = arith.subf %77, %76 : vector<8x256xf32>
    %79 = math.exp %78 : vector<8x256xf32>
    %cst_52 = arith.constant 1.000000e+00 : f32
    %80 = vector.broadcast %cst_52 : f32 to vector<8x256xf32>
    %81 = arith.addf %80, %79 : vector<8x256xf32>
    %cst_53 = arith.constant 1.000000e+00 : f32
    %82 = vector.broadcast %cst_53 : f32 to vector<8x256xf32>
    %83 = arith.divf %82, %81 : vector<8x256xf32>
    %84 = arith.mulf %76, %83 : vector<8x256xf32>
    %c0_54 = arith.constant 0 : index
    %c128_55 = arith.constant 128 : index
    %85 = vector.load %arg11[%c0_54, %c128_55] : memref<8x512xf32, #tpu.memory_space<vmem>>, vector<8x256xf32>
    tpu.vector_store %arg11[%c0_54, %c128_55], %84 {strides = array<i32>} : memref<8x512xf32, #tpu.memory_space<vmem>>, vector<8x256xf32>,
    %c0_56 = arith.constant 0 : index
    %c111_57 = arith.constant 111 : index
    %86 = vector.load %arg11[%c0_56, %c111_57] : memref<8x512xf32, #tpu.memory_space<vmem>>, vector<8x256xf32>
    %cst_58 = arith.constant 0.000000e+00 : f32
    %87 = vector.broadcast %cst_58 : f32 to vector<8x256xf32>
    %88 = arith.select %23, %86, %87 : vector<8x256xi1>, vector<8x256xf32>
    %c0_59 = arith.constant 0 : index
    %c0_60 = arith.constant 0 : index
    %89 = vector.load %arg12[%c0_59, %c0_60] : memref<72x256xf32, #tpu.memory_space<vmem>>, vector<8x256xf32>
    tpu.vector_store %arg12[%c0_59, %c0_60], %88 {strides = array<i32>} : memref<72x256xf32, #tpu.memory_space<vmem>>, vector<8x256xf32>,
    %c0_61 = arith.constant 0 : index
    %c112_62 = arith.constant 112 : index
    %90 = vector.load %arg11[%c0_61, %c112_62] : memref<8x512xf32, #tpu.memory_space<vmem>>, vector<8x256xf32>
    %c8_63 = arith.constant 8 : index
    %c0_64 = arith.constant 0 : index
    %91 = vector.load %arg12[%c8_63, %c0_64] : memref<72x256xf32, #tpu.memory_space<vmem>>, vector<8x256xf32>
    tpu.vector_store %arg12[%c8_63, %c0_64], %90 {strides = array<i32>} : memref<72x256xf32, #tpu.memory_space<vmem>>, vector<8x256xf32>,
    %c0_65 = arith.constant 0 : index
    %c113_66 = arith.constant 113 : index
    %92 = vector.load %arg11[%c0_65, %c113_66] : memref<8x512xf32, #tpu.memory_space<vmem>>, vector<8x256xf32>
    %cst_67 = arith.constant 0.000000e+00 : f32
    %93 = vector.broadcast %cst_67 : f32 to vector<8x256xf32>
    %94 = arith.select %25, %92, %93 : vector<8x256xi1>, vector<8x256xf32>
    %c16_68 = arith.constant 16 : index
    %c0_69 = arith.constant 0 : index
    %95 = vector.load %arg12[%c16_68, %c0_69] : memref<72x256xf32, #tpu.memory_space<vmem>>, vector<8x256xf32>
    tpu.vector_store %arg12[%c16_68, %c0_69], %94 {strides = array<i32>} : memref<72x256xf32, #tpu.memory_space<vmem>>, vector<8x256xf32>,
    %c0_70 = arith.constant 0 : index
    %c127_71 = arith.constant 127 : index
    %96 = vector.load %arg11[%c0_70, %c127_71] : memref<8x512xf32, #tpu.memory_space<vmem>>, vector<8x256xf32>
    %cst_72 = arith.constant 0.000000e+00 : f32
    %97 = vector.broadcast %cst_72 : f32 to vector<8x256xf32>
    %98 = arith.select %23, %96, %97 : vector<8x256xi1>, vector<8x256xf32>
    %c24_73 = arith.constant 24 : index
    %c0_74 = arith.constant 0 : index
    %99 = vector.load %arg12[%c24_73, %c0_74] : memref<72x256xf32, #tpu.memory_space<vmem>>, vector<8x256xf32>
    tpu.vector_store %arg12[%c24_73, %c0_74], %98 {strides = array<i32>} : memref<72x256xf32, #tpu.memory_space<vmem>>, vector<8x256xf32>,
    %c0_75 = arith.constant 0 : index
    %c128_76 = arith.constant 128 : index
    %100 = vector.load %arg11[%c0_75, %c128_76] : memref<8x512xf32, #tpu.memory_space<vmem>>, vector<8x256xf32>
    %c32_77 = arith.constant 32 : index
    %c0_78 = arith.constant 0 : index
    %101 = vector.load %arg12[%c32_77, %c0_78] : memref<72x256xf32, #tpu.memory_space<vmem>>, vector<8x256xf32>
    tpu.vector_store %arg12[%c32_77, %c0_78], %100 {strides = array<i32>} : memref<72x256xf32, #tpu.memory_space<vmem>>, vector<8x256xf32>,
    %c0_79 = arith.constant 0 : index
    %c129_80 = arith.constant 129 : index
    %102 = vector.load %arg11[%c0_79, %c129_80] : memref<8x512xf32, #tpu.memory_space<vmem>>, vector<8x256xf32>
    %cst_81 = arith.constant 0.000000e+00 : f32
    %103 = vector.broadcast %cst_81 : f32 to vector<8x256xf32>
    %104 = arith.select %25, %102, %103 : vector<8x256xi1>, vector<8x256xf32>
    %c40_82 = arith.constant 40 : index
    %c0_83 = arith.constant 0 : index
    %105 = vector.load %arg12[%c40_82, %c0_83] : memref<72x256xf32, #tpu.memory_space<vmem>>, vector<8x256xf32>
    tpu.vector_store %arg12[%c40_82, %c0_83], %104 {strides = array<i32>} : memref<72x256xf32, #tpu.memory_space<vmem>>, vector<8x256xf32>,
    %c0_84 = arith.constant 0 : index
    %c143_85 = arith.constant 143 : index
    %106 = vector.load %arg11[%c0_84, %c143_85] : memref<8x512xf32, #tpu.memory_space<vmem>>, vector<8x256xf32>
    %cst_86 = arith.constant 0.000000e+00 : f32
    %107 = vector.broadcast %cst_86 : f32 to vector<8x256xf32>
    %108 = arith.select %23, %106, %107 : vector<8x256xi1>, vector<8x256xf32>
    %c48_87 = arith.constant 48 : index
    %c0_88 = arith.constant 0 : index
    %109 = vector.load %arg12[%c48_87, %c0_88] : memref<72x256xf32, #tpu.memory_space<vmem>>, vector<8x256xf32>
    tpu.vector_store %arg12[%c48_87, %c0_88], %108 {strides = array<i32>} : memref<72x256xf32, #tpu.memory_space<vmem>>, vector<8x256xf32>,
    %c0_89 = arith.constant 0 : index
    %c144_90 = arith.constant 144 : index
    %110 = vector.load %arg11[%c0_89, %c144_90] : memref<8x512xf32, #tpu.memory_space<vmem>>, vector<8x256xf32>
    %c56_91 = arith.constant 56 : index
    %c0_92 = arith.constant 0 : index
    %111 = vector.load %arg12[%c56_91, %c0_92] : memref<72x256xf32, #tpu.memory_space<vmem>>, vector<8x256xf32>
    tpu.vector_store %arg12[%c56_91, %c0_92], %110 {strides = array<i32>} : memref<72x256xf32, #tpu.memory_space<vmem>>, vector<8x256xf32>,
    %c0_93 = arith.constant 0 : index
    %c145_94 = arith.constant 145 : index
    %112 = vector.load %arg11[%c0_93, %c145_94] : memref<8x512xf32, #tpu.memory_space<vmem>>, vector<8x256xf32>
    %cst_95 = arith.constant 0.000000e+00 : f32
    %113 = vector.broadcast %cst_95 : f32 to vector<8x256xf32>
    %114 = arith.select %25, %112, %113 : vector<8x256xi1>, vector<8x256xf32>
    %c64_96 = arith.constant 64 : index
    %c0_97 = arith.constant 0 : index
    %115 = vector.load %arg12[%c64_96, %c0_97] : memref<72x256xf32, #tpu.memory_space<vmem>>, vector<8x256xf32>
    tpu.vector_store %arg12[%c64_96, %c0_97], %114 {strides = array<i32>} : memref<72x256xf32, #tpu.memory_space<vmem>>, vector<8x256xf32>,
    %c0_98 = arith.constant 0 : index
    %c0_99 = arith.constant 0 : index
    %116 = vector.load %arg6[%c0_98, %c0_99] : memref<8x72xf32, #tpu.memory_space<vmem>>, vector<8x72xf32>
    %c0_100 = arith.constant 0 : index
    %c0_101 = arith.constant 0 : index
    %117 = vector.load %arg12[%c0_100, %c0_101] : memref<72x256xf32, #tpu.memory_space<vmem>>, vector<72x256xf32>
    %cst_102 = arith.constant dense<0.000000e+00> : vector<8x256xf32>
    %118 = tpu.matmul %116, %117, %cst_102 {dimension_numbers = #tpu.dot_dimension_numbers<[1], [0], [0], [1], [0, 0, 1, 1], [], []>, precision = #tpu.contract_precision<fp32>} : vector<8x72xf32>, vector<72x256xf32>, vector<8x256xf32> -> vector<8x256xf32>
    %c0_103 = arith.constant 0 : index
    %c0_104 = arith.constant 0 : index
    %119 = vector.load %arg7[%c0_103, %c0_104] : memref<8x1xf32, #tpu.memory_space<vmem>>, vector<8x1xf32>
    %120 = vector.broadcast %119 : vector<8x1xf32> to vector<8x256xf32>
    %121 = arith.addf %118, %120 : vector<8x256xf32>
    %cst_105 = arith.constant 0.000000e+00 : f32
    %122 = vector.broadcast %cst_105 : f32 to vector<8x256xf32>
    %123 = arith.subf %122, %121 : vector<8x256xf32>
    %124 = math.exp %123 : vector<8x256xf32>
    %cst_106 = arith.constant 1.000000e+00 : f32
    %125 = vector.broadcast %cst_106 : f32 to vector<8x256xf32>
    %126 = arith.addf %125, %124 : vector<8x256xf32>
    %cst_107 = arith.constant 1.000000e+00 : f32
    %127 = vector.broadcast %cst_107 : f32 to vector<8x256xf32>
    %128 = arith.divf %127, %126 : vector<8x256xf32>
    %129 = arith.mulf %121, %128 : vector<8x256xf32>
    %c0_108 = arith.constant 0 : index
    %c0_109 = arith.constant 0 : index
    %130 = vector.load %arg12[%c0_108, %c0_109] : memref<72x256xf32, #tpu.memory_space<vmem>>, vector<16x256xf32>
    tpu.vector_store %arg12[%c0_108, %c0_109], %38 {strides = array<i32>} : memref<72x256xf32, #tpu.memory_space<vmem>>, vector<16x256xf32>,
    %c16_110 = arith.constant 16 : index
    %c0_111 = arith.constant 0 : index
    %131 = vector.load %arg12[%c16_110, %c0_111] : memref<72x256xf32, #tpu.memory_space<vmem>>, vector<8x256xf32>
    tpu.vector_store %arg12[%c16_110, %c0_111], %129 {strides = array<i32>} : memref<72x256xf32, #tpu.memory_space<vmem>>, vector<8x256xf32>,
    %c0_112 = arith.constant 0 : index
    %c0_113 = arith.constant 0 : index
    %132 = vector.load %arg8[%c0_112, %c0_113] : memref<8x24xf32, #tpu.memory_space<vmem>>, vector<8x24xf32>
    %c0_114 = arith.constant 0 : index
    %c0_115 = arith.constant 0 : index
    %133 = vector.load %arg12[%c0_114, %c0_115] : memref<72x256xf32, #tpu.memory_space<vmem>>, vector<24x256xf32>
    %cst_116 = arith.constant dense<0.000000e+00> : vector<8x256xf32>
    %134 = tpu.matmul %132, %133, %cst_116 {dimension_numbers = #tpu.dot_dimension_numbers<[1], [0], [0], [1], [0, 0, 1, 1], [], []>, precision = #tpu.contract_precision<fp32>} : vector<8x24xf32>, vector<24x256xf32>, vector<8x256xf32> -> vector<8x256xf32>
    %c0_117 = arith.constant 0 : index
    %c0_118 = arith.constant 0 : index
    %135 = vector.load %arg9[%c0_117, %c0_118] : memref<8x1xf32, #tpu.memory_space<vmem>>, vector<8x1xf32>
    %136 = vector.broadcast %135 : vector<8x1xf32> to vector<8x256xf32>
    %137 = arith.addf %134, %136 : vector<8x256xf32>
    %cst_119 = arith.constant 0.000000e+00 : f32
    %138 = vector.broadcast %cst_119 : f32 to vector<8x256xf32>
    %139 = arith.subf %138, %137 : vector<8x256xf32>
    %140 = math.exp %139 : vector<8x256xf32>
    %cst_120 = arith.constant 1.000000e+00 : f32
    %141 = vector.broadcast %cst_120 : f32 to vector<8x256xf32>
    %142 = arith.addf %141, %140 : vector<8x256xf32>
    %cst_121 = arith.constant 1.000000e+00 : f32
    %143 = vector.broadcast %cst_121 : f32 to vector<8x256xf32>
    %144 = arith.divf %143, %142 : vector<8x256xf32>
    %145 = arith.mulf %137, %144 : vector<8x256xf32>
    %cst_122 = arith.constant dense<0.000000e+00> : vector<8xf32>
    %146 = vector.multi_reduction <add>, %145, %cst_122 [1] : vector<8x256xf32> to vector<8xf32>
    %147 = vector.shape_cast %146 : vector<8xf32> to vector<8x1xf32>
    %cst_123 = arith.constant 2.560000e+02 : f32
    %148 = vector.broadcast %cst_123 : f32 to vector<8x1xf32>
    %149 = arith.divf %147, %148 : vector<8x1xf32>
    %150 = vector.broadcast %149 : vector<8x1xf32> to vector<8x256xf32>
    %151 = arith.subf %145, %150 : vector<8x256xf32>
    %152 = arith.mulf %151, %151 : vector<8x256xf32>
    %cst_124 = arith.constant dense<0.000000e+00> : vector<8xf32>
    %153 = vector.multi_reduction <add>, %152, %cst_124 [1] : vector<8x256xf32> to vector<8xf32>
    %154 = vector.shape_cast %153 : vector<8xf32> to vector<8x1xf32>
    %cst_125 = arith.constant 2.550000e+02 : f32
    %155 = vector.broadcast %cst_125 : f32 to vector<8x1xf32>
    %156 = arith.divf %154, %155 : vector<8x1xf32>
    %cst_126 = arith.constant 9.99999974E-5 : f32
    %157 = vector.broadcast %cst_126 : f32 to vector<8x1xf32>
    %158 = arith.addf %156, %157 : vector<8x1xf32>
    %cst_127 = arith.constant 4.000000e+00 : f32
    %159 = vector.broadcast %cst_127 : f32 to vector<8x1xf32>
    %160 = arith.mulf %159, %158 : vector<8x1xf32>
    %161 = vector.broadcast %160 : vector<8x1xf32> to vector<8x256xf32>
    %162 = arith.divf %152, %161 : vector<8x256xf32>
    %cst_128 = arith.constant 5.000000e-01 : f32
    %163 = vector.broadcast %cst_128 : f32 to vector<8x256xf32>
    %164 = arith.addf %162, %163 : vector<8x256xf32>
    %cst_129 = arith.constant 0.000000e+00 : f32
    %165 = vector.broadcast %cst_129 : f32 to vector<8x256xf32>
    %166 = arith.subf %165, %164 : vector<8x256xf32>
    %167 = math.exp %166 : vector<8x256xf32>
    %cst_130 = arith.constant 1.000000e+00 : f32
    %168 = vector.broadcast %cst_130 : f32 to vector<8x256xf32>
    %169 = arith.addf %168, %167 : vector<8x256xf32>
    %cst_131 = arith.constant 1.000000e+00 : f32
    %170 = vector.broadcast %cst_131 : f32 to vector<8x256xf32>
    %171 = arith.divf %170, %169 : vector<8x256xf32>
    %172 = arith.mulf %145, %171 : vector<8x256xf32>
    %c0_132 = arith.constant 0 : index
    %c0_133 = arith.constant 0 : index
    %c0_134 = arith.constant 0 : index
    %173 = vector.load %arg10[%c0_132, %c0_133, %c0_134] : memref<1x8x256xf32, #tpu.memory_space<vmem>>, vector<1x8x256xf32>
    %174 = vector.shape_cast %173 : vector<1x8x256xf32> to vector<8x256xf32>
    %175 = vector.shape_cast %172 : vector<8x256xf32> to vector<1x8x256xf32>
    tpu.vector_store %arg10[%c0_132, %c0_133, %c0_134], %175 {strides = array<i32>} : memref<1x8x256xf32, #tpu.memory_space<vmem>>, vector<1x8x256xf32>,
    return
  }
  func.func @transform_0(%arg0: i32) -> (i32, i32, i32) {
    %c0_i32 = arith.constant 0 : i32
    %c0_i32_0 = arith.constant 0 : i32
    %c0_i32_1 = arith.constant 0 : i32
    return %arg0, %c0_i32, %c0_i32_0 : i32, i32, i32
  }
  func.func @transform_1(%arg0: i32) -> (i32, i32) {
    %c0_i32 = arith.constant 0 : i32
    %c0_i32_0 = arith.constant 0 : i32
    %c0_i32_1 = arith.constant 0 : i32
    return %c0_i32, %c0_i32_0 : i32, i32
  }
  func.func @transform_2(%arg0: i32) -> (i32, i32) {
    %c0_i32 = arith.constant 0 : i32
    %c0_i32_0 = arith.constant 0 : i32
    %c0_i32_1 = arith.constant 0 : i32
    return %c0_i32, %c0_i32_0 : i32, i32
  }
  func.func @transform_3(%arg0: i32) -> (i32, i32) {
    %c0_i32 = arith.constant 0 : i32
    %c0_i32_0 = arith.constant 0 : i32
    %c0_i32_1 = arith.constant 0 : i32
    return %c0_i32, %c0_i32_0 : i32, i32
  }
  func.func @transform_4(%arg0: i32) -> (i32, i32) {
    %c0_i32 = arith.constant 0 : i32
    %c0_i32_0 = arith.constant 0 : i32
    %c0_i32_1 = arith.constant 0 : i32
    return %c0_i32, %c0_i32_0 : i32, i32
  }
  func.func @transform_5(%arg0: i32) -> (i32, i32) {
    %c0_i32 = arith.constant 0 : i32
    %c0_i32_0 = arith.constant 0 : i32
    %c0_i32_1 = arith.constant 0 : i32
    return %c0_i32, %c0_i32_0 : i32, i32
  }
  func.func @transform_6(%arg0: i32) -> (i32, i32) {
    %c0_i32 = arith.constant 0 : i32
    %c0_i32_0 = arith.constant 0 : i32
    %c0_i32_1 = arith.constant 0 : i32
    return %c0_i32, %c0_i32_0 : i32, i32
  }
  func.func @transform_7(%arg0: i32) -> (i32, i32) {
    %c0_i32 = arith.constant 0 : i32
    %c0_i32_0 = arith.constant 0 : i32
    %c0_i32_1 = arith.constant 0 : i32
    return %c0_i32, %c0_i32_0 : i32, i32
  }
  func.func @transform_8(%arg0: i32) -> (i32, i32) {
    %c0_i32 = arith.constant 0 : i32
    %c0_i32_0 = arith.constant 0 : i32
    %c0_i32_1 = arith.constant 0 : i32
    return %c0_i32, %c0_i32_0 : i32, i32
  }
  func.func @transform_9(%arg0: i32) -> (i32, i32, i32) {
    %c0_i32 = arith.constant 0 : i32
    %c0_i32_0 = arith.constant 0 : i32
    %c0_i32_1 = arith.constant 0 : i32
    return %arg0, %c0_i32, %c0_i32_0 : i32, i32, i32
  }
}

</mosaic_0001>

<llo_original>
// kernel: tpu_custom_call.1
$region0: #{tpu_custom_call.1}
  #allocation0 [shape = 'u32[]', space=smem, size = 0x4, offset = 0x4, fixed_abs, tag = 'smem constant byte address 0x4 - core index']
  #allocation1 [shape = 'u32[144,128]{1,0:T(1,128)}', space=vmem, size = 0x12000, scoped, tag = 'internal scratch']
  #allocation2 [shape = 'f32[8,512]{1,0:T(8,128)}', space=vmem, size = 0x4000, scoped, tag = 'scratch operand']
  #allocation3 [shape = 'f32[72,256]{1,0:T(8,128)}', space=vmem, size = 0x12000, scoped, tag = 'scratch operand']
  %s0 = inlined_call_operand.vmem [shape: f32[2,8,256], index: 0, kind: input, shape index: {}]
  %s1 = inlined_call_operand.vmem [shape: f32[16,8], index: 1, kind: input, shape index: {}]
  %s2 = inlined_call_operand.vmem [shape: f32[16,1], index: 2, kind: input, shape index: {}]
  %s3 = inlined_call_operand.vmem [shape: f32[8,72], index: 3, kind: input, shape index: {}]
  %s4 = inlined_call_operand.vmem [shape: f32[8,1], index: 4, kind: input, shape index: {}]
  %s5 = inlined_call_operand.vmem [shape: f32[8,72], index: 5, kind: input, shape index: {}]
  %s6 = inlined_call_operand.vmem [shape: f32[8,1], index: 6, kind: input, shape index: {}]
  %s7 = inlined_call_operand.vmem [shape: f32[8,24], index: 7, kind: input, shape index: {}]
  %s8 = inlined_call_operand.vmem [shape: f32[8,1], index: 8, kind: input, shape index: {}]
  %s9 = inlined_call_operand.hbm [shape: f32[2,8,256], index: 9, kind: output, shape index: {}]
  %s10 = sld [smem:[#allocation0]]
  $region69: #{tpu_custom_call.1} parent=0
    _
  %s12 = ssub.s32 1, %s10
  %s13 = scalar_select 0, %s12, %s10
  $region1: #{tpu_custom_call.1} parent=0
    #allocation4 [shape = 'u8[16384]{0}', space=vmem, size = 0x4000, scoped, tag = 'output window, operand 0']
    #allocation5 [shape = 's32[2]{0}', space=sflag, size = 0x8, scoped, tag = 'scoped memory for tpu_custom_call.1']
    %14 = vsyncpa [#allocation5], 0
    %s15 = scalar_lea.sflag [#allocation5], 1
    %16 = vsyncpa %s15, 0
    loop: start=0, step=1, limit=4
    $region2: #{tpu_custom_call.1} parent=1 // loop_pre_header
      _
    $region3: #{tpu_custom_call.1} parent=1 // loop_header
      %s18 = sphi 0, %s22
      %p19 = scmp.ge.s32.totalorder %s18, 4
      %s28 = sphi 0, %s30
      %s31 = sphi 0, %s28
      %s32 = sphi 0, %s31
      %s48 = sphi 0, %s32
      %s52 = sphi 0, %s52
      %s54 = sphi 0, %s52
      %s55 = sphi 0, %s54
      %s69 = sphi 0, %s55
      %s73 = sphi 0, %s73
      %s75 = sphi 0, %s73
      %s76 = sphi 0, %s75
      %s90 = sphi 0, %s76
      %s94 = sphi 0, %s94
      %s96 = sphi 0, %s94
      %s97 = sphi 0, %s96
      %s111 = sphi 0, %s97
      %s115 = sphi 0, %s115
      %s117 = sphi 0, %s115
      %s118 = sphi 0, %s117
      %s132 = sphi 0, %s118
      %s136 = sphi 0, %s136
      %s138 = sphi 0, %s136
      %s139 = sphi 0, %s138
      %s153 = sphi 0, %s139
      %s157 = sphi 0, %s157
      %s159 = sphi 0, %s157
      %s160 = sphi 0, %s159
      %s174 = sphi 0, %s160
      %s178 = sphi 0, %s178
      %s180 = sphi 0, %s178
      %s181 = sphi 0, %s180
      %s195 = sphi 0, %s181
      %s199 = sphi 0, %s199
      %s201 = sphi 0, %s199
      %s202 = sphi 0, %s201
      %s216 = sphi 0, %s202
      %s222 = sphi 0, %s224
      %s225 = sphi 0, %s222
      %s226 = sphi 0, %s225
      %s242 = sphi 0, %s226
    $region4: #{tpu_custom_call.1} parent=1 // loop_header_branch
      %21 = sbr.rel (%p19) target = $region8
    $region5: #{tpu_custom_call.1} parent=1 // loop_body
      %s23 = ssub.s32 %s18, 1
      %s24 = ssub.s32 %s18, 2
      %s25 = sadd.s32 %s18, 1
      %s26 = ssub.s32 %s18, %s25
      %p27 = scmp.eq.s32.totalorder %s26, 0
      %s29 = sadd.s32 %s28, 1
      %s30 = scalar_select %p27, %s28, %s29
      %p33 = pneg %p27
      %p34 = scmp.eq.s32.totalorder %s18, 1
      %p35 = por %p33, %p34
      %p36 = scmp.ne.s32.totalorder %s28, %s31
      %p37 = scmp.eq.s32.totalorder %s18, 0
      %p38 = por %p36, %p37
      %p39 = scmp.ne.s32.totalorder %s28, %s31
      %p40 = scmp.eq.s32.totalorder %s23, 1
      %p41 = por %p39, %p40
      %p42 = scmp.ne.s32.totalorder %s31, %s32
      %p43 = scmp.eq.s32.totalorder %s23, 0
      %p44 = por %p42, %p43
      %p45 = scmp.ne.s32.totalorder %s31, %s32
      %p46 = scmp.eq.s32.totalorder %s24, 1
      %p47 = por %p45, %p46
      %p49 = scmp.ne.s32.totalorder %s32, %s48
      %p50 = scmp.eq.s32.totalorder %s24, 0
      %p51 = por %p49, %p50
      %s53 = sadd.s32 %s52, 1
      %p56 = scmp.eq.s32.totalorder %s18, 1
      %p57 = scmp.ne.s32.totalorder %s52, %s54
      %p58 = scmp.eq.s32.totalorder %s18, 0
      %p59 = por %p57, %p58
      %p60 = scmp.ne.s32.totalorder %s52, %s54
      %p61 = scmp.eq.s32.totalorder %s23, 1
      %p62 = por %p60, %p61
      %p63 = scmp.ne.s32.totalorder %s54, %s55
      %p64 = scmp.eq.s32.totalorder %s23, 0
      %p65 = por %p63, %p64
      %p66 = scmp.ne.s32.totalorder %s54, %s55
      %p67 = scmp.eq.s32.totalorder %s24, 1
      %p68 = por %p66, %p67
      %p70 = scmp.ne.s32.totalorder %s55, %s69
      %p71 = scmp.eq.s32.totalorder %s24, 0
      %p72 = por %p70, %p71
      %s74 = sadd.s32 %s73, 1
      %p77 = scmp.eq.s32.totalorder %s18, 1
      %p78 = scmp.ne.s32.totalorder %s73, %s75
      %p79 = scmp.eq.s32.totalorder %s18, 0
      %p80 = por %p78, %p79
      %p81 = scmp.ne.s32.totalorder %s73, %s75
      %p82 = scmp.eq.s32.totalorder %s23, 1
      %p83 = por %p81, %p82
      %p84 = scmp.ne.s32.totalorder %s75, %s76
      %p85 = scmp.eq.s32.totalorder %s23, 0
      %p86 = por %p84, %p85
      %p87 = scmp.ne.s32.totalorder %s75, %s76
      %p88 = scmp.eq.s32.totalorder %s24, 1
      %p89 = por %p87, %p88
      %p91 = scmp.ne.s32.totalorder %s76, %s90
      %p92 = scmp.eq.s32.totalorder %s24, 0
      %p93 = por %p91, %p92
      %s95 = sadd.s32 %s94, 1
      %p98 = scmp.eq.s32.totalorder %s18, 1
      %p99 = scmp.ne.s32.totalorder %s94, %s96
      %p100 = scmp.eq.s32.totalorder %s18, 0
      %p101 = por %p99, %p100
      %p102 = scmp.ne.s32.totalorder %s94, %s96
      %p103 = scmp.eq.s32.totalorder %s23, 1
      %p104 = por %p102, %p103
      %p105 = scmp.ne.s32.totalorder %s96, %s97
      %p106 = scmp.eq.s32.totalorder %s23, 0
      %p107 = por %p105, %p106
      %p108 = scmp.ne.s32.totalorder %s96, %s97
      %p109 = scmp.eq.s32.totalorder %s24, 1
      %p110 = por %p108, %p109
      %p112 = scmp.ne.s32.totalorder %s97, %s111
      %p113 = scmp.eq.s32.totalorder %s24, 0
      %p114 = por %p112, %p113
      %s116 = sadd.s32 %s115, 1
      %p119 = scmp.eq.s32.totalorder %s18, 1
      %p120 = scmp.ne.s32.totalorder %s115, %s117
      %p121 = scmp.eq.s32.totalorder %s18, 0
      %p122 = por %p120, %p121
      %p123 = scmp.ne.s32.totalorder %s115, %s117
      %p124 = scmp.eq.s32.totalorder %s23, 1
      %p125 = por %p123, %p124
      %p126 = scmp.ne.s32.totalorder %s117, %s118
      %p127 = scmp.eq.s32.totalorder %s23, 0
      %p128 = por %p126, %p127
      %p129 = scmp.ne.s32.totalorder %s117, %s118
      %p130 = scmp.eq.s32.totalorder %s24, 1
      %p131 = por %p129, %p130
      %p133 = scmp.ne.s32.totalorder %s118, %s132
      %p134 = scmp.eq.s32.totalorder %s24, 0
      %p135 = por %p133, %p134
      %s137 = sadd.s32 %s136, 1
      %p140 = scmp.eq.s32.totalorder %s18, 1
      %p141 = scmp.ne.s32.totalorder %s136, %s138
      %p142 = scmp.eq.s32.totalorder %s18, 0
      %p143 = por %p141, %p142
      %p144 = scmp.ne.s32.totalorder %s136, %s138
      %p145 = scmp.eq.s32.totalorder %s23, 1
      %p146 = por %p144, %p145
      %p147 = scmp.ne.s32.totalorder %s138, %s139
      %p148 = scmp.eq.s32.totalorder %s23, 0
      %p149 = por %p147, %p148
      %p150 = scmp.ne.s32.totalorder %s138, %s139
      %p151 = scmp.eq.s32.totalorder %s24, 1
      %p152 = por %p150, %p151
      %p154 = scmp.ne.s32.totalorder %s139, %s153
      %p155 = scmp.eq.s32.totalorder %s24, 0
      %p156 = por %p154, %p155
      %s158 = sadd.s32 %s157, 1
      %p161 = scmp.eq.s32.totalorder %s18, 1
      %p162 = scmp.ne.s32.totalorder %s157, %s159
      %p163 = scmp.eq.s32.totalorder %s18, 0
      %p164 = por %p162, %p163
      %p165 = scmp.ne.s32.totalorder %s157, %s159
      %p166 = scmp.eq.s32.totalorder %s23, 1
      %p167 = por %p165, %p166
      %p168 = scmp.ne.s32.totalorder %s159, %s160
      %p169 = scmp.eq.s32.totalorder %s23, 0
      %p170 = por %p168, %p169
      %p171 = scmp.ne.s32.totalorder %s159, %s160
      %p172 = scmp.eq.s32.totalorder %s24, 1
      %p173 = por %p171, %p172
      %p175 = scmp.ne.s32.totalorder %s160, %s174
      %p176 = scmp.eq.s32.totalorder %s24, 0
      %p177 = por %p175, %p176
      %s179 = sadd.s32 %s178, 1
      %p182 = scmp.eq.s32.totalorder %s18, 1
      %p183 = scmp.ne.s32.totalorder %s178, %s180
      %p184 = scmp.eq.s32.totalorder %s18, 0
      %p185 = por %p183, %p184
      %p186 = scmp.ne.s32.totalorder %s178, %s180
      %p187 = scmp.eq.s32.totalorder %s23, 1
      %p188 = por %p186, %p187
      %p189 = scmp.ne.s32.totalorder %s180, %s181
      %p190 = scmp.eq.s32.totalorder %s23, 0
      %p191 = por %p189, %p190
      %p192 = scmp.ne.s32.totalorder %s180, %s181
      %p193 = scmp.eq.s32.totalorder %s24, 1
      %p194 = por %p192, %p193
      %p196 = scmp.ne.s32.totalorder %s181, %s195
      %p197 = scmp.eq.s32.totalorder %s24, 0
      %p198 = por %p196, %p197
      %s200 = sadd.s32 %s199, 1
      %p203 = scmp.eq.s32.totalorder %s18, 1
      %p204 = scmp.ne.s32.totalorder %s199, %s201
      %p205 = scmp.eq.s32.totalorder %s18, 0
      %p206 = por %p204, %p205
      %p207 = scmp.ne.s32.totalorder %s199, %s201
      %p208 = scmp.eq.s32.totalorder %s23, 1
      %p209 = por %p207, %p208
      %p210 = scmp.ne.s32.totalorder %s201, %s202
      %p211 = scmp.eq.s32.totalorder %s23, 0
      %p212 = por %p210, %p211
      %p213 = scmp.ne.s32.totalorder %s201, %s202
      %p214 = scmp.eq.s32.totalorder %s24, 1
      %p215 = por %p213, %p214
      %p217 = scmp.ne.s32.totalorder %s202, %s216
      %p218 = scmp.eq.s32.totalorder %s24, 0
      %p219 = por %p217, %p218
      %s220 = ssub.s32 %s18, %s25
      %p221 = scmp.eq.s32.totalorder %s220, 0
      %s223 = sadd.s32 %s222, 1
      %s224 = scalar_select %p221, %s222, %s223
      %p227 = pneg %p221
      %p228 = scmp.eq.s32.totalorder %s18, 1
      %p229 = por %p227, %p228
      %p230 = scmp.ne.s32.totalorder %s222, %s225
      %p231 = scmp.eq.s32.totalorder %s18, 0
      %p232 = por %p230, %p231
      %p233 = scmp.ne.s32.totalorder %s222, %s225
      %p234 = scmp.eq.s32.totalorder %s23, 1
      %p235 = por %p233, %p234
      %p236 = scmp.ne.s32.totalorder %s225, %s226
      %p237 = scmp.eq.s32.totalorder %s23, 0
      %p238 = por %p236, %p237
      %p239 = scmp.ne.s32.totalorder %s225, %s226
      %p240 = scmp.eq.s32.totalorder %s24, 1
      %p241 = por %p239, %p240
      %p243 = scmp.ne.s32.totalorder %s226, %s242
      %p244 = scmp.eq.s32.totalorder %s24, 0
      %p245 = por %p243, %p244
      %p246 = scmp.le.s32.totalorder 1, %s18
      %p247 = scmp.lt.s32.totalorder %s18, 3
      %p248 = pnand %p246, %p247
      %p249 = pneg %p248
      // Predicated region
      $region9: #{tpu_custom_call.1} parent=5 // pred_check
        _
      $region10: #{tpu_custom_call.1} parent=5 // pred_check_branch
        %251 = sbr.rel (%p248) target = $region12
      $region11: #{tpu_custom_call.1} parent=5 // pred_region
        %s252 = ssub.s32 %s18, 1
        // Predicated region
        $region13: #{tpu_custom_call.1} parent=11 // pred_check
          %p253 = pneg %p65
        $region14: #{tpu_custom_call.1} parent=11 // pred_check_branch
          %255 = sbr.rel (%p253) target = $region16
        $region15: #{tpu_custom_call.1} parent=11 // pred_region
          _
        $region16: #{tpu_custom_call.1} parent=11 // pred_fallthru
          _
        // Predicated region
        $region17: #{tpu_custom_call.1} parent=11 // pred_check
          %p256 = pneg %p86
        $region18: #{tpu_custom_call.1} parent=11 // pred_check_branch
          %258 = sbr.rel (%p256) target = $region20
        $region19: #{tpu_custom_call.1} parent=11 // pred_region
          _
        $region20: #{tpu_custom_call.1} parent=11 // pred_fallthru
          _
        // Predicated region
        $region21: #{tpu_custom_call.1} parent=11 // pred_check
          %p259 = pneg %p107
        $region22: #{tpu_custom_call.1} parent=11 // pred_check_branch
          %261 = sbr.rel (%p259) target = $region24
        $region23: #{tpu_custom_call.1} parent=11 // pred_region
          _
        $region24: #{tpu_custom_call.1} parent=11 // pred_fallthru
          _
        // Predicated region
        $region25: #{tpu_custom_call.1} parent=11 // pred_check
          %p262 = pneg %p128
        $region26: #{tpu_custom_call.1} parent=11 // pred_check_branch
          %264 = sbr.rel (%p262) target = $region28
        $region27: #{tpu_custom_call.1} parent=11 // pred_region
          _
        $region28: #{tpu_custom_call.1} parent=11 // pred_fallthru
          _
        // Predicated region
        $region29: #{tpu_custom_call.1} parent=11 // pred_check
          %p265 = pneg %p149
        $region30: #{tpu_custom_call.1} parent=11 // pred_check_branch
          %267 = sbr.rel (%p265) target = $region32
        $region31: #{tpu_custom_call.1} parent=11 // pred_region
          _
        $region32: #{tpu_custom_call.1} parent=11 // pred_fallthru
          _
        // Predicated region
        $region33: #{tpu_custom_call.1} parent=11 // pred_check
          %p268 = pneg %p170
        $region34: #{tpu_custom_call.1} parent=11 // pred_check_branch
          %270 = sbr.rel (%p268) target = $region36
        $region35: #{tpu_custom_call.1} parent=11 // pred_region
          _
        $region36: #{tpu_custom_call.1} parent=11 // pred_fallthru
          _
        // Predicated region
        $region37: #{tpu_custom_call.1} parent=11 // pred_check
          %p271 = pneg %p191
        $region38: #{tpu_custom_call.1} parent=11 // pred_check_branch
          %273 = sbr.rel (%p271) target = $region40
        $region39: #{tpu_custom_call.1} parent=11 // pred_region
          _
        $region40: #{tpu_custom_call.1} parent=11 // pred_fallthru
          _
        // Predicated region
        $region41: #{tpu_custom_call.1} parent=11 // pred_check
          %p274 = pneg %p212
        $region42: #{tpu_custom_call.1} parent=11 // pred_check_branch
          %276 = sbr.rel (%p274) target = $region44
        $region43: #{tpu_custom_call.1} parent=11 // pred_region
          _
        $region44: #{tpu_custom_call.1} parent=11 // pred_fallthru
          _
      $region12: #{tpu_custom_call.1} parent=5 // pred_fallthru
        _
      %p277 = scmp.lt.s32.totalorder %s18, 2
      // Predicated region
      $region45: #{tpu_custom_call.1} parent=5 // pred_check
        %p278 = pneg %p277
      $region46: #{tpu_custom_call.1} parent=5 // pred_check_branch
        %280 = sbr.rel (%p278) target = $region48
      $region47: #{tpu_custom_call.1} parent=5 // pred_region
        // Predicated region
        $region49: #{tpu_custom_call.1} parent=47 // pred_check
          %p281 = pneg %p38
        $region50: #{tpu_custom_call.1} parent=47 // pred_check_branch
          %283 = sbr.rel (%p281) target = $region52
        $region51: #{tpu_custom_call.1} parent=47 // pred_region
          %p284 = scmp.lt.s32.totalorder %s18, 1
          %s285 = scalar_select %p284, %s18, 1
          %s286 = smul.addr %s285, 2
          %s287 = smul.addr %s286, 8
          %s288 = scalar_lea.vmem %s0, %s287
        $region52: #{tpu_custom_call.1} parent=47 // pred_fallthru
          _
      $region48: #{tpu_custom_call.1} parent=5 // pred_fallthru
        _
      %p289 = scmp.le.s32.totalorder 1, %s18
      %p290 = scmp.lt.s32.totalorder %s18, 3
      %p291 = pnand %p289, %p290
      %p292 = pneg %p291
      // Predicated region
      $region53: #{tpu_custom_call.1} parent=5 // pred_check
        _
      $region54: #{tpu_custom_call.1} parent=5 // pred_check_branch
        %294 = sbr.rel (%p291) target = $region56
      $region55: #{tpu_custom_call.1} parent=5 // pred_region
        %s295 = ssub.s32 %s18, 1
        %p296 = scmp.lt.s32.totalorder %s23, 1
        %s297 = scalar_select %p296, %s23, 1
        %s298 = smul.addr %s297, 2
        %s299 = smul.addr %s298, 8
        %s300 = scalar_lea.vmem %s0, %s299
        %p301 = pneg %p44
        %p302 = pneg %p41
        %p303 = pneg %p65
        %p304 = pneg %p62
        %p305 = pneg %p86
        %p306 = pneg %p83
        %p307 = pneg %p107
        %p308 = pneg %p104
        %p309 = pneg %p128
        %p310 = pneg %p125
        %p311 = pneg %p149
        %p312 = pneg %p146
        %p313 = pneg %p170
        %p314 = pneg %p167
        %p315 = pneg %p191
        %p316 = pneg %p188
        %p317 = pneg %p212
        %p318 = pneg %p209
        %p319 = pneg %p238
        %p320 = pneg %p235
        %s321 = sand.u32 %s225, 1
        %s322 = scalar_lea.sflag [#allocation5], %s321
        %s323 = sand.u32 %s225, 1
        %s324 = smul.addr %s323, 16
        %s325 = scalar_lea.vmem [#allocation4], %s324
        %p326 = scmp.lt.s32.totalorder %s23, 1
        %s327 = scalar_select %p326, %s23, 1
        %s328 = smul.addr %s327, 2
        %s329 = smul.addr %s328, 8
        %s330 = scalar_lea.vmem %s0, %s329
        %v331 = vld [vmem:[%s330] sm:$0xff]
        %v332 = vld [vmem:[%s330 + $0x8] sm:$0xff]
        %333 = vst [vmem:[#allocation2] sm:$0xff] 0.0
        %334 = vst [vmem:[#allocation2 + $0x18] sm:$0xff] 0.0
        %v335 = vlaneseq
        %v336 = vand.u32 %v335, 127
        %v337 = vadd.s32 %v336, 128
        %vm338 = vcmp.lt.s32.totalorder %v336, 0
        %v339 = vsub.s32 0, %v336
        %v340 = vsel %vm338, %v339, %v336
        %v341 = vshrl.u32 %v340, 4
        %v342 = vand.u32 %v340, 15
        %v343 = vsub.s32 0, %v342
        %v344 = vsel %vm338, %v343, %v342
        %vm345 = vcmp.lt.s32.totalorder %v337, 0
        %v346 = vsub.s32 0, %v337
        %v347 = vsel %vm345, %v346, %v337
        %v348 = vshrl.u32 %v347, 4
        %v349 = vand.u32 %v347, 15
        %v350 = vsub.s32 0, %v349
        %v351 = vsel %vm345, %v350, %v349
        %vm352 = vcmp.ne.s32.totalorder %v344, 0
        %vm353 = vcmp.ne.s32.totalorder %v351, 0
        %vm354 = vcmp.lt.s32.totalorder %v344, 0
        %vm355 = vcmp.lt.s32.totalorder %v351, 0
        %vm356 = vmand %vm354, %vm352
        %vm357 = vmand %vm355, %vm353
        %v358 = vadd.s32 %v344, 16
        %v359 = vadd.s32 %v351, 16
        %v360 = vsel %vm356, %v358, %v344
        %v361 = vsel %vm357, %v359, %v351
        %vm362 = vcmp.ge.s32.totalorder %v360, 1
        %vm363 = vcmp.ge.s32.totalorder %v361, 1
        %vm364 = vcmp.le.s32.totalorder %v360, 14
        %vm365 = vcmp.le.s32.totalorder %v361, 14
        %v366 = vld [vmem:[%s1] sm:$0xff]
        %v367 = vld [vmem:[%s1 + $0x8] sm:$0xff]
        %v368 = vld [vmem:[%s2] sm:$0xff]
        %v369 = vld [vmem:[%s2 + $0x8] sm:$0xff]
        %371 = vset.pattern.permute.xlu0 0
        %372 = vperm.xlu0 %371, %v368
        %v373 = vpop.permute.xlu0 %372
        %376 = vset.pattern.permute.xlu0 0
        %377 = vperm.xlu0 %376, %v369
        %v378 = vpop.permute.xlu0 %377
        %vm380 = vcmask 64512
        %v382 = vsel %vm380, %v366, 0
        %v385 = vsel %vm380, %v367, 0
        %387 = vmatprep.subr.mxu0 0.0
        %388 = vmatpush1.msra.mxu0 0.0
        %389 = vmatprep.subr.mxu0 0.0
        %390 = vmatpush1.msra.mxu0 0.0
        %391 = vmatprep.subr.mxu0 0.0
        %392 = vmatpush1.msra.mxu0 0.0
        %393 = vmatprep.subr.mxu0 0.0
        %394 = vmatpush1.msra.mxu0 0.0
        %395 = vmatprep.subr.mxu0 0.0
        %396 = vmatpush1.msra.mxu0 0.0
        %397 = vmatprep.subr.mxu0 0.0
        %398 = vmatpush1.msra.mxu0 0.0
        %399 = vmatprep.subr.mxu0 0.0
        %400 = vmatpush1.msra.mxu0 0.0
        %401 = vmatprep.subr.mxu0 0.0
        %402 = vmatpush1.msra.mxu0 0.0
        %403 = vmatprep.subr.mxu0 0.0
        %404 = vmatpush1.msra.mxu0 0.0
        %405 = vmatprep.subr.mxu0 0.0
        %406 = vmatpush1.msra.mxu0 0.0
        %407 = vmatprep.subr.mxu0 0.0
        %408 = vmatpush1.msra.mxu0 0.0
        %409 = vmatprep.subr.mxu0 0.0
        %410 = vmatpush1.msra.mxu0 0.0
        %411 = vmatprep.subr.mxu0 0.0
        %412 = vmatpush1.msra.mxu0 0.0
        %413 = vmatprep.subr.mxu0 0.0
        %414 = vmatpush1.msra.mxu0 0.0
        %415 = vmatprep.subr.mxu0 0.0
        %416 = vmatpush1.msra.mxu0 0.0
        %v417 = vand.u32 %v332, 4294901760
        %418 = vmatprep.subr.mxu0 %v417
        %v419 = vand.u32 %v331, 4294901760
        %420 = vmatpush1.msra.mxu0 %v419
        %421 = vmatprep.subr.mxu0 0.0
        %422 = vmatpush2.msra.mxu0 0.0
        %423 = vmatprep.subr.mxu0 0.0
        %424 = vmatpush2.msra.mxu0 0.0
        %425 = vmatprep.subr.mxu0 0.0
        %426 = vmatpush2.msra.mxu0 0.0
        %427 = vmatprep.subr.mxu0 0.0
        %428 = vmatpush2.msra.mxu0 0.0
        %429 = vmatprep.subr.mxu0 0.0
        %430 = vmatpush2.msra.mxu0 0.0
        %431 = vmatprep.subr.mxu0 0.0
        %432 = vmatpush2.msra.mxu0 0.0
        %433 = vmatprep.subr.mxu0 0.0
        %434 = vmatpush2.msra.mxu0 0.0
        %435 = vmatprep.subr.mxu0 0.0
        %436 = vmatpush2.msra.mxu0 0.0
        %437 = vmatprep.subr.mxu0 0.0
        %438 = vmatpush2.msra.mxu0 0.0
        %439 = vmatprep.subr.mxu0 0.0
        %440 = vmatpush2.msra.mxu0 0.0
        %441 = vmatprep.subr.mxu0 0.0
        %442 = vmatpush2.msra.mxu0 0.0
        %443 = vmatprep.subr.mxu0 0.0
        %444 = vmatpush2.msra.mxu0 0.0
        %445 = vmatprep.subr.mxu0 0.0
        %446 = vmatpush2.msra.mxu0 0.0
        %447 = vmatprep.subr.mxu0 0.0
        %448 = vmatpush2.msra.mxu0 0.0
        %449 = vmatprep.subr.mxu0 0.0
        %450 = vmatpush2.msra.mxu0 0.0
        %451 = vmatprep.subr.mxu0 0.0
        %452 = vmatpush2.msra.mxu0 0.0
        %453 = vmatprep.mubr.f32.mxu0 0.0
        %v454 = vand.u32 %v382, 4294901760
        %v455 = vsub.f32 %v382, %v454
        %v456 = vand.u32 %v455, 4294901760
        %v457 = vsub.f32 %v455, %v456
        %v458 = vand.u32 %v457, 4294901760
        %459 = vmatmul.mubr.f32.gmra.mxu0 %v458
        %v460 = vpop.f32.mrf.mxu0
        %v461 = vadd.f32 %v373, %v460
        %v462 = vpop.f32.mrf.mxu0
        %v463 = vadd.f32 %v373, %v462
        %464 = vmatprep.mubr.f32.mxu0 0.0
        %v465 = vand.u32 %v385, 4294901760
        %v466 = vsub.f32 %v385, %v465
        %v467 = vand.u32 %v466, 4294901760
        %v468 = vsub.f32 %v466, %v467
        %v469 = vand.u32 %v468, 4294901760
        %470 = vmatmul.mubr.f32.gmra.mxu0 %v469
        %v471 = vpop.f32.mrf.mxu0
        %v472 = vadd.f32 %v378, %v471
        %v473 = vpop.f32.mrf.mxu0
        %v474 = vadd.f32 %v378, %v473
        %475 = vdwg.mxu0
        %476 = vmatprep.subr.mxu0 0.0
        %477 = vmatpush1.msra.mxu0 0.0
        %478 = vmatprep.subr.mxu0 0.0
        %479 = vmatpush1.msra.mxu0 0.0
        %480 = vmatprep.subr.mxu0 0.0
        %481 = vmatpush1.msra.mxu0 0.0
        %482 = vmatprep.subr.mxu0 0.0
        %483 = vmatpush1.msra.mxu0 0.0
        %484 = vmatprep.subr.mxu0 0.0
        %485 = vmatpush1.msra.mxu0 0.0
        %486 = vmatprep.subr.mxu0 0.0
        %487 = vmatpush1.msra.mxu0 0.0
        %488 = vmatprep.subr.mxu0 0.0
        %489 = vmatpush1.msra.mxu0 0.0
        %490 = vmatprep.subr.mxu0 0.0
        %491 = vmatpush1.msra.mxu0 0.0
        %492 = vmatprep.subr.mxu0 0.0
        %493 = vmatpush1.msra.mxu0 0.0
        %494 = vmatprep.subr.mxu0 0.0
        %495 = vmatpush1.msra.mxu0 0.0
        %496 = vmatprep.subr.mxu0 0.0
        %497 = vmatpush1.msra.mxu0 0.0
        %498 = vmatprep.subr.mxu0 0.0
        %499 = vmatpush1.msra.mxu0 0.0
        %500 = vmatprep.subr.mxu0 0.0
        %501 = vmatpush1.msra.mxu0 0.0
        %502 = vmatprep.subr.mxu0 0.0
        %503 = vmatpush1.msra.mxu0 0.0
        %504 = vmatprep.subr.mxu0 0.0
        %505 = vmatpush1.msra.mxu0 0.0
        %v506 = vand.u32 %v332, 4294901760
        %v507 = vsub.f32 %v332, %v506
        %v508 = vand.u32 %v507, 4294901760
        %v509 = vsub.f32 %v507, %v508
        %v510 = vand.u32 %v509, 4294901760
        %511 = vmatprep.subr.mxu0 %v510
        %v512 = vand.u32 %v331, 4294901760
        %v513 = vsub.f32 %v331, %v512
        %v514 = vand.u32 %v513, 4294901760
        %v515 = vsub.f32 %v513, %v514
        %v516 = vand.u32 %v515, 4294901760
        %517 = vmatpush1.msra.mxu0 %v516
        %518 = vmatprep.subr.mxu0 0.0
        %519 = vmatpush2.msra.mxu0 0.0
        %520 = vmatprep.subr.mxu0 0.0
        %521 = vmatpush2.msra.mxu0 0.0
        %522 = vmatprep.subr.mxu0 0.0
        %523 = vmatpush2.msra.mxu0 0.0
        %524 = vmatprep.subr.mxu0 0.0
        %525 = vmatpush2.msra.mxu0 0.0
        %526 = vmatprep.subr.mxu0 0.0
        %527 = vmatpush2.msra.mxu0 0.0
        %528 = vmatprep.subr.mxu0 0.0
        %529 = vmatpush2.msra.mxu0 0.0
        %530 = vmatprep.subr.mxu0 0.0
        %531 = vmatpush2.msra.mxu0 0.0
        %532 = vmatprep.subr.mxu0 0.0
        %533 = vmatpush2.msra.mxu0 0.0
        %534 = vmatprep.subr.mxu0 0.0
        %535 = vmatpush2.msra.mxu0 0.0
        %536 = vmatprep.subr.mxu0 0.0
        %537 = vmatpush2.msra.mxu0 0.0
        %538 = vmatprep.subr.mxu0 0.0
        %539 = vmatpush2.msra.mxu0 0.0
        %540 = vmatprep.subr.mxu0 0.0
        %541 = vmatpush2.msra.mxu0 0.0
        %542 = vmatprep.subr.mxu0 0.0
        %543 = vmatpush2.msra.mxu0 0.0
        %544 = vmatprep.subr.mxu0 0.0
        %545 = vmatpush2.msra.mxu0 0.0
        %546 = vmatprep.subr.mxu0 0.0
        %547 = vmatpush2.msra.mxu0 0.0
        %548 = vmatprep.subr.mxu0 0.0
        %549 = vmatpush2.msra.mxu0 0.0
        %550 = vmatprep.mubr.f32.mxu0 0.0
        %v551 = vand.u32 %v382, 4294901760
        %552 = vmatmul.mubr.f32.gmra.mxu0 %v551
        %v553 = vpop.f32.mrf.mxu0
        %v554 = vadd.f32 %v461, %v553
        %v555 = vpop.f32.mrf.mxu0
        %v556 = vadd.f32 %v463, %v555
        %557 = vmatprep.mubr.f32.mxu0 0.0
        %v558 = vand.u32 %v385, 4294901760
        %559 = vmatmul.mubr.f32.gmra.mxu0 %v558
        %v560 = vpop.f32.mrf.mxu0
        %v561 = vadd.f32 %v472, %v560
        %v562 = vpop.f32.mrf.mxu0
        %v563 = vadd.f32 %v474, %v562
        %564 = vdwg.mxu0
        %565 = vmatprep.subr.mxu0 0.0
        %566 = vmatpush1.msra.mxu0 0.0
        %567 = vmatprep.subr.mxu0 0.0
        %568 = vmatpush1.msra.mxu0 0.0
        %569 = vmatprep.subr.mxu0 0.0
        %570 = vmatpush1.msra.mxu0 0.0
        %571 = vmatprep.subr.mxu0 0.0
        %572 = vmatpush1.msra.mxu0 0.0
        %573 = vmatprep.subr.mxu0 0.0
        %574 = vmatpush1.msra.mxu0 0.0
        %575 = vmatprep.subr.mxu0 0.0
        %576 = vmatpush1.msra.mxu0 0.0
        %577 = vmatprep.subr.mxu0 0.0
        %578 = vmatpush1.msra.mxu0 0.0
        %579 = vmatprep.subr.mxu0 0.0
        %580 = vmatpush1.msra.mxu0 0.0
        %581 = vmatprep.subr.mxu0 0.0
        %582 = vmatpush1.msra.mxu0 0.0
        %583 = vmatprep.subr.mxu0 0.0
        %584 = vmatpush1.msra.mxu0 0.0
        %585 = vmatprep.subr.mxu0 0.0
        %586 = vmatpush1.msra.mxu0 0.0
        %587 = vmatprep.subr.mxu0 0.0
        %588 = vmatpush1.msra.mxu0 0.0
        %589 = vmatprep.subr.mxu0 0.0
        %590 = vmatpush1.msra.mxu0 0.0
        %591 = vmatprep.subr.mxu0 0.0
        %592 = vmatpush1.msra.mxu0 0.0
        %593 = vmatprep.subr.mxu0 0.0
        %594 = vmatpush1.msra.mxu0 0.0
        %v595 = vand.u32 %v332, 4294901760
        %v596 = vsub.f32 %v332, %v595
        %597 = vmatprep.subr.mxu0 %v596
        %v598 = vand.u32 %v331, 4294901760
        %v599 = vsub.f32 %v331, %v598
        %600 = vmatpush1.msra.mxu0 %v599
        %601 = vmatprep.subr.mxu0 0.0
        %602 = vmatpush2.msra.mxu0 0.0
        %603 = vmatprep.subr.mxu0 0.0
        %604 = vmatpush2.msra.mxu0 0.0
        %605 = vmatprep.subr.mxu0 0.0
        %606 = vmatpush2.msra.mxu0 0.0
        %607 = vmatprep.subr.mxu0 0.0
        %608 = vmatpush2.msra.mxu0 0.0
        %609 = vmatprep.subr.mxu0 0.0
        %610 = vmatpush2.msra.mxu0 0.0
        %611 = vmatprep.subr.mxu0 0.0
        %612 = vmatpush2.msra.mxu0 0.0
        %613 = vmatprep.subr.mxu0 0.0
        %614 = vmatpush2.msra.mxu0 0.0
        %615 = vmatprep.subr.mxu0 0.0
        %616 = vmatpush2.msra.mxu0 0.0
        %617 = vmatprep.subr.mxu0 0.0
        %618 = vmatpush2.msra.mxu0 0.0
        %619 = vmatprep.subr.mxu0 0.0
        %620 = vmatpush2.msra.mxu0 0.0
        %621 = vmatprep.subr.mxu0 0.0
        %622 = vmatpush2.msra.mxu0 0.0
        %623 = vmatprep.subr.mxu0 0.0
        %624 = vmatpush2.msra.mxu0 0.0
        %625 = vmatprep.subr.mxu0 0.0
        %626 = vmatpush2.msra.mxu0 0.0
        %627 = vmatprep.subr.mxu0 0.0
        %628 = vmatpush2.msra.mxu0 0.0
        %629 = vmatprep.subr.mxu0 0.0
        %630 = vmatpush2.msra.mxu0 0.0
        %631 = vmatprep.subr.mxu0 0.0
        %632 = vmatpush2.msra.mxu0 0.0
        %633 = vmatprep.mubr.f32.mxu0 0.0
        %v634 = vand.u32 %v382, 4294901760
        %v635 = vsub.f32 %v382, %v634
        %636 = vmatmul.mubr.f32.gmra.mxu0 %v635
        %v637 = vpop.f32.mrf.mxu0
        %v638 = vadd.f32 %v554, %v637
        %v639 = vpop.f32.mrf.mxu0
        %v640 = vadd.f32 %v556, %v639
        %641 = vmatprep.mubr.f32.mxu0 0.0
        %v642 = vand.u32 %v385, 4294901760
        %v643 = vsub.f32 %v385, %v642
        %644 = vmatmul.mubr.f32.gmra.mxu0 %v643
        %v645 = vpop.f32.mrf.mxu0
        %v646 = vadd.f32 %v561, %v645
        %v647 = vpop.f32.mrf.mxu0
        %v648 = vadd.f32 %v563, %v647
        %649 = vdwg.mxu0
        %650 = vmatprep.subr.mxu0 0.0
        %651 = vmatpush1.msra.mxu0 0.0
        %652 = vmatprep.subr.mxu0 0.0
        %653 = vmatpush1.msra.mxu0 0.0
        %654 = vmatprep.subr.mxu0 0.0
        %655 = vmatpush1.msra.mxu0 0.0
        %656 = vmatprep.subr.mxu0 0.0
        %657 = vmatpush1.msra.mxu0 0.0
        %658 = vmatprep.subr.mxu0 0.0
        %659 = vmatpush1.msra.mxu0 0.0
        %660 = vmatprep.subr.mxu0 0.0
        %661 = vmatpush1.msra.mxu0 0.0
        %662 = vmatprep.subr.mxu0 0.0
        %663 = vmatpush1.msra.mxu0 0.0
        %664 = vmatprep.subr.mxu0 0.0
        %665 = vmatpush1.msra.mxu0 0.0
        %666 = vmatprep.subr.mxu0 0.0
        %667 = vmatpush1.msra.mxu0 0.0
        %668 = vmatprep.subr.mxu0 0.0
        %669 = vmatpush1.msra.mxu0 0.0
        %670 = vmatprep.subr.mxu0 0.0
        %671 = vmatpush1.msra.mxu0 0.0
        %672 = vmatprep.subr.mxu0 0.0
        %673 = vmatpush1.msra.mxu0 0.0
        %674 = vmatprep.subr.mxu0 0.0
        %675 = vmatpush1.msra.mxu0 0.0
        %676 = vmatprep.subr.mxu0 0.0
        %677 = vmatpush1.msra.mxu0 0.0
        %678 = vmatprep.subr.mxu0 0.0
        %679 = vmatpush1.msra.mxu0 0.0
        %v680 = vand.u32 %v332, 4294901760
        %681 = vmatprep.subr.mxu0 %v680
        %v682 = vand.u32 %v331, 4294901760
        %683 = vmatpush1.msra.mxu0 %v682
        %684 = vmatprep.subr.mxu0 0.0
        %685 = vmatpush2.msra.mxu0 0.0
        %686 = vmatprep.subr.mxu0 0.0
        %687 = vmatpush2.msra.mxu0 0.0
        %688 = vmatprep.subr.mxu0 0.0
        %689 = vmatpush2.msra.mxu0 0.0
        %690 = vmatprep.subr.mxu0 0.0
        %691 = vmatpush2.msra.mxu0 0.0
        %692 = vmatprep.subr.mxu0 0.0
        %693 = vmatpush2.msra.mxu0 0.0
        %694 = vmatprep.subr.mxu0 0.0
        %695 = vmatpush2.msra.mxu0 0.0
        %696 = vmatprep.subr.mxu0 0.0
        %697 = vmatpush2.msra.mxu0 0.0
        %698 = vmatprep.subr.mxu0 0.0
        %699 = vmatpush2.msra.mxu0 0.0
        %700 = vmatprep.subr.mxu0 0.0
        %701 = vmatpush2.msra.mxu0 0.0
        %702 = vmatprep.subr.mxu0 0.0
        %703 = vmatpush2.msra.mxu0 0.0
        %704 = vmatprep.subr.mxu0 0.0
        %705 = vmatpush2.msra.mxu0 0.0
        %706 = vmatprep.subr.mxu0 0.0
        %707 = vmatpush2.msra.mxu0 0.0
        %708 = vmatprep.subr.mxu0 0.0
        %709 = vmatpush2.msra.mxu0 0.0
        %710 = vmatprep.subr.mxu0 0.0
        %711 = vmatpush2.msra.mxu0 0.0
        %712 = vmatprep.subr.mxu0 0.0
        %713 = vmatpush2.msra.mxu0 0.0
        %714 = vmatprep.subr.mxu0 0.0
        %715 = vmatpush2.msra.mxu0 0.0
        %716 = vmatprep.mubr.f32.mxu0 0.0
        %v717 = vand.u32 %v382, 4294901760
        %v718 = vsub.f32 %v382, %v717
        %v719 = vand.u32 %v718, 4294901760
        %720 = vmatmul.mubr.f32.gmra.mxu0 %v719
        %v721 = vpop.f32.mrf.mxu0
        %v722 = vadd.f32 %v638, %v721
        %v723 = vpop.f32.mrf.mxu0
        %v724 = vadd.f32 %v640, %v723
        %725 = vmatprep.mubr.f32.mxu0 0.0
        %v726 = vand.u32 %v385, 4294901760
        %v727 = vsub.f32 %v385, %v726
        %v728 = vand.u32 %v727, 4294901760
        %729 = vmatmul.mubr.f32.gmra.mxu0 %v728
        %v730 = vpop.f32.mrf.mxu0
        %v731 = vadd.f32 %v646, %v730
        %v732 = vpop.f32.mrf.mxu0
        %v733 = vadd.f32 %v648, %v732
        %734 = vdwg.mxu0
        %735 = vmatprep.subr.mxu0 0.0
        %736 = vmatpush1.msra.mxu0 0.0
        %737 = vmatprep.subr.mxu0 0.0
        %738 = vmatpush1.msra.mxu0 0.0
        %739 = vmatprep.subr.mxu0 0.0
        %740 = vmatpush1.msra.mxu0 0.0
        %741 = vmatprep.subr.mxu0 0.0
        %742 = vmatpush1.msra.mxu0 0.0
        %743 = vmatprep.subr.mxu0 0.0
        %744 = vmatpush1.msra.mxu0 0.0
        %745 = vmatprep.subr.mxu0 0.0
        %746 = vmatpush1.msra.mxu0 0.0
        %747 = vmatprep.subr.mxu0 0.0
        %748 = vmatpush1.msra.mxu0 0.0
        %749 = vmatprep.subr.mxu0 0.0
        %750 = vmatpush1.msra.mxu0 0.0
        %751 = vmatprep.subr.mxu0 0.0
        %752 = vmatpush1.msra.mxu0 0.0
        %753 = vmatprep.subr.mxu0 0.0
        %754 = vmatpush1.msra.mxu0 0.0
        %755 = vmatprep.subr.mxu0 0.0
        %756 = vmatpush1.msra.mxu0 0.0
        %757 = vmatprep.subr.mxu0 0.0
        %758 = vmatpush1.msra.mxu0 0.0
        %759 = vmatprep.subr.mxu0 0.0
        %760 = vmatpush1.msra.mxu0 0.0
        %761 = vmatprep.subr.mxu0 0.0
        %762 = vmatpush1.msra.mxu0 0.0
        %763 = vmatprep.subr.mxu0 0.0
        %764 = vmatpush1.msra.mxu0 0.0
        %v765 = vand.u32 %v332, 4294901760
        %v766 = vsub.f32 %v332, %v765
        %v767 = vand.u32 %v766, 4294901760
        %768 = vmatprep.subr.mxu0 %v767
        %v769 = vand.u32 %v331, 4294901760
        %v770 = vsub.f32 %v331, %v769
        %v771 = vand.u32 %v770, 4294901760
        %772 = vmatpush1.msra.mxu0 %v771
        %773 = vmatprep.subr.mxu0 0.0
        %774 = vmatpush2.msra.mxu0 0.0
        %775 = vmatprep.subr.mxu0 0.0
        %776 = vmatpush2.msra.mxu0 0.0
        %777 = vmatprep.subr.mxu0 0.0
        %778 = vmatpush2.msra.mxu0 0.0
        %779 = vmatprep.subr.mxu0 0.0
        %780 = vmatpush2.msra.mxu0 0.0
        %781 = vmatprep.subr.mxu0 0.0
        %782 = vmatpush2.msra.mxu0 0.0
        %783 = vmatprep.subr.mxu0 0.0
        %784 = vmatpush2.msra.mxu0 0.0
        %785 = vmatprep.subr.mxu0 0.0
        %786 = vmatpush2.msra.mxu0 0.0
        %787 = vmatprep.subr.mxu0 0.0
        %788 = vmatpush2.msra.mxu0 0.0
        %789 = vmatprep.subr.mxu0 0.0
        %790 = vmatpush2.msra.mxu0 0.0
        %791 = vmatprep.subr.mxu0 0.0
        %792 = vmatpush2.msra.mxu0 0.0
        %793 = vmatprep.subr.mxu0 0.0
        %794 = vmatpush2.msra.mxu0 0.0
        %795 = vmatprep.subr.mxu0 0.0
        %796 = vmatpush2.msra.mxu0 0.0
        %797 = vmatprep.subr.mxu0 0.0
        %798 = vmatpush2.msra.mxu0 0.0
        %799 = vmatprep.subr.mxu0 0.0
        %800 = vmatpush2.msra.mxu0 0.0
        %801 = vmatprep.subr.mxu0 0.0
        %802 = vmatpush2.msra.mxu0 0.0
        %803 = vmatprep.subr.mxu0 0.0
        %804 = vmatpush2.msra.mxu0 0.0
        %805 = vmatprep.mubr.f32.mxu0 0.0
        %v806 = vand.u32 %v382, 4294901760
        %807 = vmatmul.mubr.f32.gmra.mxu0 %v806
        %v808 = vpop.f32.mrf.mxu0
        %v809 = vadd.f32 %v722, %v808
        %v810 = vpop.f32.mrf.mxu0
        %v811 = vadd.f32 %v724, %v810
        %812 = vmatprep.mubr.f32.mxu0 0.0
        %v813 = vand.u32 %v385, 4294901760
        %814 = vmatmul.mubr.f32.gmra.mxu0 %v813
        %v815 = vpop.f32.mrf.mxu0
        %v816 = vadd.f32 %v731, %v815
        %v817 = vpop.f32.mrf.mxu0
        %v818 = vadd.f32 %v733, %v817
        %819 = vdwg.mxu0
        %820 = vmatprep.subr.mxu0 0.0
        %821 = vmatpush1.msra.mxu0 0.0
        %822 = vmatprep.subr.mxu0 0.0
        %823 = vmatpush1.msra.mxu0 0.0
        %824 = vmatprep.subr.mxu0 0.0
        %825 = vmatpush1.msra.mxu0 0.0
        %826 = vmatprep.subr.mxu0 0.0
        %827 = vmatpush1.msra.mxu0 0.0
        %828 = vmatprep.subr.mxu0 0.0
        %829 = vmatpush1.msra.mxu0 0.0
        %830 = vmatprep.subr.mxu0 0.0
        %831 = vmatpush1.msra.mxu0 0.0
        %832 = vmatprep.subr.mxu0 0.0
        %833 = vmatpush1.msra.mxu0 0.0
        %834 = vmatprep.subr.mxu0 0.0
        %835 = vmatpush1.msra.mxu0 0.0
        %836 = vmatprep.subr.mxu0 0.0
        %837 = vmatpush1.msra.mxu0 0.0
        %838 = vmatprep.subr.mxu0 0.0
        %839 = vmatpush1.msra.mxu0 0.0
        %840 = vmatprep.subr.mxu0 0.0
        %841 = vmatpush1.msra.mxu0 0.0
        %842 = vmatprep.subr.mxu0 0.0
        %843 = vmatpush1.msra.mxu0 0.0
        %844 = vmatprep.subr.mxu0 0.0
        %845 = vmatpush1.msra.mxu0 0.0
        %846 = vmatprep.subr.mxu0 0.0
        %847 = vmatpush1.msra.mxu0 0.0
        %848 = vmatprep.subr.mxu0 0.0
        %849 = vmatpush1.msra.mxu0 0.0
        %v850 = vand.u32 %v332, 4294901760
        %851 = vmatprep.subr.mxu0 %v850
        %v852 = vand.u32 %v331, 4294901760
        %853 = vmatpush1.msra.mxu0 %v852
        %854 = vmatprep.subr.mxu0 0.0
        %855 = vmatpush2.msra.mxu0 0.0
        %856 = vmatprep.subr.mxu0 0.0
        %857 = vmatpush2.msra.mxu0 0.0
        %858 = vmatprep.subr.mxu0 0.0
        %859 = vmatpush2.msra.mxu0 0.0
        %860 = vmatprep.subr.mxu0 0.0
        %861 = vmatpush2.msra.mxu0 0.0
        %862 = vmatprep.subr.mxu0 0.0
        %863 = vmatpush2.msra.mxu0 0.0
        %864 = vmatprep.subr.mxu0 0.0
        %865 = vmatpush2.msra.mxu0 0.0
        %866 = vmatprep.subr.mxu0 0.0
        %867 = vmatpush2.msra.mxu0 0.0
        %868 = vmatprep.subr.mxu0 0.0
        %869 = vmatpush2.msra.mxu0 0.0
        %870 = vmatprep.subr.mxu0 0.0
        %871 = vmatpush2.msra.mxu0 0.0
        %872 = vmatprep.subr.mxu0 0.0
        %873 = vmatpush2.msra.mxu0 0.0
        %874 = vmatprep.subr.mxu0 0.0
        %875 = vmatpush2.msra.mxu0 0.0
        %876 = vmatprep.subr.mxu0 0.0
        %877 = vmatpush2.msra.mxu0 0.0
        %878 = vmatprep.subr.mxu0 0.0
        %879 = vmatpush2.msra.mxu0 0.0
        %880 = vmatprep.subr.mxu0 0.0
        %881 = vmatpush2.msra.mxu0 0.0
        %882 = vmatprep.subr.mxu0 0.0
        %883 = vmatpush2.msra.mxu0 0.0
        %884 = vmatprep.subr.mxu0 0.0
        %885 = vmatpush2.msra.mxu0 0.0
        %886 = vmatprep.mubr.f32.mxu0 0.0
        %v887 = vand.u32 %v382, 4294901760
        %888 = vmatmul.mubr.f32.gmra.mxu0 %v887
        %v889 = vpop.f32.mrf.mxu0
        %v890 = vadd.f32 %v809, %v889
        %v891 = vpop.f32.mrf.mxu0
        %v892 = vadd.f32 %v811, %v891
        %893 = vmatprep.mubr.f32.mxu0 0.0
        %v894 = vand.u32 %v385, 4294901760
        %895 = vmatmul.mubr.f32.gmra.mxu0 %v894
        %v896 = vpop.f32.mrf.mxu0
        %v897 = vadd.f32 %v816, %v896
        %v898 = vpop.f32.mrf.mxu0
        %v899 = vadd.f32 %v818, %v898
        %900 = vdwg.mxu0
        %v901 = vsub.f32 0.0, %v890
        %v902 = vsub.f32 0.0, %v892
        %v903 = vsub.f32 0.0, %v897
        %v904 = vsub.f32 0.0, %v899
        %v905 = vmul.f32 %v901, 1.442695
        %v906 = vpow.pop %v905
        %v907 = vmul.f32 %v902, 1.442695
        %v908 = vpow.pop %v907
        %v909 = vmul.f32 %v903, 1.442695
        %v910 = vpow.pop %v909
        %v911 = vmul.f32 %v904, 1.442695
        %v912 = vpow.pop %v911
        %v913 = vadd.f32 %v906, 1.0
        %v914 = vadd.f32 %v908, 1.0
        %v915 = vadd.f32 %v910, 1.0
        %v916 = vadd.f32 %v912, 1.0
        %v917 = vrcp.pop %v913
        %v918 = vmul.f32 1.0, %v917
        %v919 = vrcp.pop %v914
        %v920 = vmul.f32 1.0, %v919
        %v921 = vrcp.pop %v915
        %v922 = vmul.f32 1.0, %v921
        %v923 = vrcp.pop %v916
        %v924 = vmul.f32 1.0, %v923
        %v925 = vmul.f32 %v890, %v918
        %v926 = vmul.f32 %v892, %v920
        %v927 = vmul.f32 %v897, %v922
        %v928 = vmul.f32 %v899, %v924
        %929 = vst [vmem:[#allocation2 + $0x8] sm:$0xff] %v927
        %930 = vst [vmem:[#allocation2 + $0x10] sm:$0xff] %v928
        %v931 = vld [vmem:[#allocation2] sm:$0xff]
        %v932 = vld [vmem:[#allocation2 + $0x8] sm:$0xff]
        %v933 = vld [vmem:[#allocation2 + $0x10] sm:$0xff]
        %937 = vrot.lane.b32.xlu0 %v931, 17
        %v938 = vpop.permute.xlu0 %937
        %939 = vrot.lane.b32.xlu0 %v932, 17
        %v940 = vpop.permute.xlu0 %939
        %941 = vrot.lane.b32.xlu0 %v933, 17
        %v942 = vpop.permute.xlu0 %941
        %vm943 = vcmask 138240
        %v944 = vsel %vm943, %v938, %v940
        %v945 = vsel %vm943, %v940, %v942
        %v948 = vsel %vm362, %v944, 0.0
        %v949 = vsel %vm363, %v945, 0.0
        %950 = vst [vmem:[#allocation3] sm:$0xff] %v948
        %951 = vst [vmem:[#allocation3 + $0x8] sm:$0xff] %v949
        %v952 = vld [vmem:[#allocation2] sm:$0xff]
        %v953 = vld [vmem:[#allocation2 + $0x8] sm:$0xff]
        %v954 = vld [vmem:[#allocation2 + $0x10] sm:$0xff]
        %958 = vrot.lane.b32.xlu0 %v952, 16
        %v959 = vpop.permute.xlu0 %958
        %960 = vrot.lane.b32.xlu0 %v953, 16
        %v961 = vpop.permute.xlu0 %960
        %962 = vrot.lane.b32.xlu0 %v954, 16
        %v963 = vpop.permute.xlu0 %962
        %vm964 = vcmask 130048
        %v965 = vsel %vm964, %v959, %v961
        %v966 = vsel %vm964, %v961, %v963
        %969 = vst [vmem:[#allocation3 + $0x10] sm:$0xff] %v965
        %970 = vst [vmem:[#allocation3 + $0x18] sm:$0xff] %v966
        %v971 = vld [vmem:[#allocation2] sm:$0xff]
        %v972 = vld [vmem:[#allocation2 + $0x8] sm:$0xff]
        %v973 = vld [vmem:[#allocation2 + $0x10] sm:$0xff]
        %977 = vrot.lane.b32.xlu0 %v971, 15
        %v978 = vpop.permute.xlu0 %977
        %979 = vrot.lane.b32.xlu0 %v972, 15
        %v980 = vpop.permute.xlu0 %979
        %981 = vrot.lane.b32.xlu0 %v973, 15
        %v982 = vpop.permute.xlu0 %981
        %vm983 = vcmask 121856
        %v984 = vsel %vm983, %v978, %v980
        %v985 = vsel %vm983, %v980, %v982
        %v988 = vsel %vm364, %v984, 0.0
        %v989 = vsel %vm365, %v985, 0.0
        %990 = vst [vmem:[#allocation3 + $0x20] sm:$0xff] %v988
        %991 = vst [vmem:[#allocation3 + $0x28] sm:$0xff] %v989
        %v992 = vld [vmem:[#allocation2] sm:$0xff]
        %v993 = vld [vmem:[#allocation2 + $0x8] sm:$0xff]
        %v994 = vld [vmem:[#allocation2 + $0x10] sm:$0xff]
        %998 = vrot.lane.b32.xlu0 %v992, 1
        %v999 = vpop.permute.xlu0 %998
        %1000 = vrot.lane.b32.xlu0 %v993, 1
        %v1001 = vpop.permute.xlu0 %1000
        %1002 = vrot.lane.b32.xlu0 %v994, 1
        %v1003 = vpop.permute.xlu0 %1002
        %vm1004 = vcmask 7168
        %v1005 = vsel %vm1004, %v999, %v1001
        %v1006 = vsel %vm1004, %v1001, %v1003
        %v1009 = vsel %vm362, %v1005, 0.0
        %v1010 = vsel %vm363, %v1006, 0.0
        %1011 = vst [vmem:[#allocation3 + $0x30] sm:$0xff] %v1009
        %1012 = vst [vmem:[#allocation3 + $0x38] sm:$0xff] %v1010
        %v1013 = vld [vmem:[#allocation2 + $0x8] sm:$0xff]
        %v1014 = vld [vmem:[#allocation2 + $0x10] sm:$0xff]
        %1015 = vst [vmem:[#allocation3 + $0x40] sm:$0xff] %v1013
        %1016 = vst [vmem:[#allocation3 + $0x48] sm:$0xff] %v1014
        %v1017 = vld [vmem:[#allocation2 + $0x8] sm:$0xff]
        %v1018 = vld [vmem:[#allocation2 + $0x10] sm:$0xff]
        %v1019 = vld [vmem:[#allocation2 + $0x18] sm:$0xff]
        %1023 = vrot.lane.b32.xlu0 %v1017, 127
        %v1024 = vpop.permute.xlu0 %1023
        %1025 = vrot.lane.b32.xlu0 %v1018, 127
        %v1026 = vpop.permute.xlu0 %1025
        %1027 = vrot.lane.b32.xlu0 %v1019, 127
        %v1028 = vpop.permute.xlu0 %1027
        %vm1029 = vcmask 1039360
        %v1030 = vsel %vm1029, %v1024, %v1026
        %v1031 = vsel %vm1029, %v1026, %v1028
        %v1034 = vsel %vm364, %v1030, 0.0
        %v1035 = vsel %vm365, %v1031, 0.0
        %1036 = vst [vmem:[#allocation3 + $0x50] sm:$0xff] %v1034
        %1037 = vst [vmem:[#allocation3 + $0x58] sm:$0xff] %v1035
        %v1038 = vld [vmem:[#allocation2 + $0x8] sm:$0xff]
        %v1039 = vld [vmem:[#allocation2 + $0x10] sm:$0xff]
        %v1040 = vld [vmem:[#allocation2 + $0x18] sm:$0xff]
        %1044 = vrot.lane.b32.xlu0 %v1038, 113
        %v1045 = vpop.permute.xlu0 %1044
        %1046 = vrot.lane.b32.xlu0 %v1039, 113
        %v1047 = vpop.permute.xlu0 %1046
        %1048 = vrot.lane.b32.xlu0 %v1040, 113
        %v1049 = vpop.permute.xlu0 %1048
        %vm1050 = vcmask 924672
        %v1051 = vsel %vm1050, %v1045, %v1047
        %v1052 = vsel %vm1050, %v1047, %v1049
        %v1055 = vsel %vm362, %v1051, 0.0
        %v1056 = vsel %vm363, %v1052, 0.0
        %1057 = vst [vmem:[#allocation3 + $0x60] sm:$0xff] %v1055
        %1058 = vst [vmem:[#allocation3 + $0x68] sm:$0xff] %v1056
        %v1059 = vld [vmem:[#allocation2 + $0x8] sm:$0xff]
        %v1060 = vld [vmem:[#allocation2 + $0x10] sm:$0xff]
        %v1061 = vld [vmem:[#allocation2 + $0x18] sm:$0xff]
        %1065 = vrot.lane.b32.xlu0 %v1059, 112
        %v1066 = vpop.permute.xlu0 %1065
        %1067 = vrot.lane.b32.xlu0 %v1060, 112
        %v1068 = vpop.permute.xlu0 %1067
        %1069 = vrot.lane.b32.xlu0 %v1061, 112
        %v1070 = vpop.permute.xlu0 %1069
        %vm1071 = vcmask 916480
        %v1072 = vsel %vm1071, %v1066, %v1068
        %v1073 = vsel %vm1071, %v1068, %v1070
        %1076 = vst [vmem:[#allocation3 + $0x70] sm:$0xff] %v1072
        %1077 = vst [vmem:[#allocation3 + $0x78] sm:$0xff] %v1073
        %v1078 = vld [vmem:[#allocation2 + $0x8] sm:$0xff]
        %v1079 = vld [vmem:[#allocation2 + $0x10] sm:$0xff]
        %v1080 = vld [vmem:[#allocation2 + $0x18] sm:$0xff]
        %1084 = vrot.lane.b32.xlu0 %v1078, 111
        %v1085 = vpop.permute.xlu0 %1084
        %1086 = vrot.lane.b32.xlu0 %v1079, 111
        %v1087 = vpop.permute.xlu0 %1086
        %1088 = vrot.lane.b32.xlu0 %v1080, 111
        %v1089 = vpop.permute.xlu0 %1088
        %vm1090 = vcmask 908288
        %v1091 = vsel %vm1090, %v1085, %v1087
        %v1092 = vsel %vm1090, %v1087, %v1089
        %v1095 = vsel %vm364, %v1091, 0.0
        %v1096 = vsel %vm365, %v1092, 0.0
        %1097 = vst [vmem:[#allocation3 + $0x80] sm:$0xff] %v1095
        %1098 = vst [vmem:[#allocation3 + $0x88] sm:$0xff] %v1096
        %v1099 = vld [vmem:[%s3] sm:$0xff]
        %v1100 = vld [vmem:[#allocation3] sm:$0xff]
        %v1101 = vld [vmem:[#allocation3 + $0x8] sm:$0xff]
        %v1102 = vld [vmem:[#allocation3 + $0x10] sm:$0xff]
        %v1103 = vld [vmem:[#allocation3 + $0x18] sm:$0xff]
        %v1104 = vld [vmem:[#allocation3 + $0x20] sm:$0xff]
        %v1105 = vld [vmem:[#allocation3 + $0x28] sm:$0xff]
        %v1106 = vld [vmem:[#allocation3 + $0x30] sm:$0xff]
        %v1107 = vld [vmem:[#allocation3 + $0x38] sm:$0xff]
        %v1108 = vld [vmem:[#allocation3 + $0x40] sm:$0xff]
        %v1109 = vld [vmem:[#allocation3 + $0x48] sm:$0xff]
        %v1110 = vld [vmem:[#allocation3 + $0x50] sm:$0xff]
        %v1111 = vld [vmem:[#allocation3 + $0x58] sm:$0xff]
        %v1112 = vld [vmem:[#allocation3 + $0x60] sm:$0xff]
        %v1113 = vld [vmem:[#allocation3 + $0x68] sm:$0xff]
        %v1114 = vld [vmem:[#allocation3 + $0x70] sm:$0xff]
        %v1115 = vld [vmem:[#allocation3 + $0x78] sm:$0xff]
        %v1116 = vld [vmem:[#allocation3 + $0x80] sm:$0xff]
        %v1117 = vld [vmem:[#allocation3 + $0x88] sm:$0xff]
        %v1118 = vld [vmem:[%s4] sm:$0xff]
        %1120 = vset.pattern.permute.xlu0 0
        %1121 = vperm.xlu0 %1120, %v1118
        %v1122 = vpop.permute.xlu0 %1121
        %vm1124 = vcmask 588800
        %v1126 = vsel %vm1124, %v1099, 0
        %1128 = vmatprep.subr.mxu0 0.0
        %1129 = vmatpush1.msra.mxu0 0.0
        %1130 = vmatprep.subr.mxu0 0.0
        %1131 = vmatpush1.msra.mxu0 0.0
        %1132 = vmatprep.subr.mxu0 0.0
        %1133 = vmatpush1.msra.mxu0 0.0
        %1134 = vmatprep.subr.mxu0 0.0
        %1135 = vmatpush1.msra.mxu0 0.0
        %1136 = vmatprep.subr.mxu0 0.0
        %1137 = vmatpush1.msra.mxu0 0.0
        %1138 = vmatprep.subr.mxu0 0.0
        %1139 = vmatpush1.msra.mxu0 0.0
        %1140 = vmatprep.subr.mxu0 0.0
        %1141 = vmatpush1.msra.mxu0 0.0
        %v1142 = vand.u32 %v1117, 4294901760
        %1143 = vmatprep.subr.mxu0 %v1142
        %v1144 = vand.u32 %v1116, 4294901760
        %1145 = vmatpush1.msra.mxu0 %v1144
        %v1146 = vand.u32 %v1115, 4294901760
        %1147 = vmatprep.subr.mxu0 %v1146
        %v1148 = vand.u32 %v1114, 4294901760
        %1149 = vmatpush1.msra.mxu0 %v1148
        %v1150 = vand.u32 %v1113, 4294901760
        %1151 = vmatprep.subr.mxu0 %v1150
        %v1152 = vand.u32 %v1112, 4294901760
        %1153 = vmatpush1.msra.mxu0 %v1152
        %v1154 = vand.u32 %v1111, 4294901760
        %1155 = vmatprep.subr.mxu0 %v1154
        %v1156 = vand.u32 %v1110, 4294901760
        %1157 = vmatpush1.msra.mxu0 %v1156
        %v1158 = vand.u32 %v1109, 4294901760
        %1159 = vmatprep.subr.mxu0 %v1158
        %v1160 = vand.u32 %v1108, 4294901760
        %1161 = vmatpush1.msra.mxu0 %v1160
        %v1162 = vand.u32 %v1107, 4294901760
        %1163 = vmatprep.subr.mxu0 %v1162
        %v1164 = vand.u32 %v1106, 4294901760
        %1165 = vmatpush1.msra.mxu0 %v1164
        %v1166 = vand.u32 %v1105, 4294901760
        %1167 = vmatprep.subr.mxu0 %v1166
        %v1168 = vand.u32 %v1104, 4294901760
        %1169 = vmatpush1.msra.mxu0 %v1168
        %v1170 = vand.u32 %v1103, 4294901760
        %1171 = vmatprep.subr.mxu0 %v1170
        %v1172 = vand.u32 %v1102, 4294901760
        %1173 = vmatpush1.msra.mxu0 %v1172
        %v1174 = vand.u32 %v1101, 4294901760
        %1175 = vmatprep.subr.mxu0 %v1174
        %v1176 = vand.u32 %v1100, 4294901760
        %1177 = vmatpush1.msra.mxu0 %v1176
        %1178 = vmatprep.subr.mxu0 0.0
        %1179 = vmatpush2.msra.mxu0 0.0
        %1180 = vmatprep.subr.mxu0 0.0
        %1181 = vmatpush2.msra.mxu0 0.0
        %1182 = vmatprep.subr.mxu0 0.0
        %1183 = vmatpush2.msra.mxu0 0.0
        %1184 = vmatprep.subr.mxu0 0.0
        %1185 = vmatpush2.msra.mxu0 0.0
        %1186 = vmatprep.subr.mxu0 0.0
        %1187 = vmatpush2.msra.mxu0 0.0
        %1188 = vmatprep.subr.mxu0 0.0
        %1189 = vmatpush2.msra.mxu0 0.0
        %1190 = vmatprep.subr.mxu0 0.0
        %1191 = vmatpush2.msra.mxu0 0.0
        %1192 = vmatprep.subr.mxu0 0.0
        %1193 = vmatpush2.msra.mxu0 0.0
        %1194 = vmatprep.subr.mxu0 0.0
        %1195 = vmatpush2.msra.mxu0 0.0
        %1196 = vmatprep.subr.mxu0 0.0
        %1197 = vmatpush2.msra.mxu0 0.0
        %1198 = vmatprep.subr.mxu0 0.0
        %1199 = vmatpush2.msra.mxu0 0.0
        %1200 = vmatprep.subr.mxu0 0.0
        %1201 = vmatpush2.msra.mxu0 0.0
        %1202 = vmatprep.subr.mxu0 0.0
        %1203 = vmatpush2.msra.mxu0 0.0
        %1204 = vmatprep.subr.mxu0 0.0
        %1205 = vmatpush2.msra.mxu0 0.0
        %1206 = vmatprep.subr.mxu0 0.0
        %1207 = vmatpush2.msra.mxu0 0.0
        %1208 = vmatprep.subr.mxu0 0.0
        %1209 = vmatpush2.msra.mxu0 0.0
        %1210 = vmatprep.mubr.f32.mxu0 0.0
        %v1211 = vand.u32 %v1126, 4294901760
        %v1212 = vsub.f32 %v1126, %v1211
        %v1213 = vand.u32 %v1212, 4294901760
        %v1214 = vsub.f32 %v1212, %v1213
        %v1215 = vand.u32 %v1214, 4294901760
        %1216 = vmatmul.mubr.f32.gmra.mxu0 %v1215
        %v1217 = vpop.f32.mrf.mxu0
        %v1218 = vadd.f32 %v1122, %v1217
        %v1219 = vpop.f32.mrf.mxu0
        %v1220 = vadd.f32 %v1122, %v1219
        %1221 = vdwg.mxu0
        %1222 = vmatprep.subr.mxu0 0.0
        %1223 = vmatpush1.msra.mxu0 0.0
        %1224 = vmatprep.subr.mxu0 0.0
        %1225 = vmatpush1.msra.mxu0 0.0
        %1226 = vmatprep.subr.mxu0 0.0
        %1227 = vmatpush1.msra.mxu0 0.0
        %1228 = vmatprep.subr.mxu0 0.0
        %1229 = vmatpush1.msra.mxu0 0.0
        %1230 = vmatprep.subr.mxu0 0.0
        %1231 = vmatpush1.msra.mxu0 0.0
        %1232 = vmatprep.subr.mxu0 0.0
        %1233 = vmatpush1.msra.mxu0 0.0
        %1234 = vmatprep.subr.mxu0 0.0
        %1235 = vmatpush1.msra.mxu0 0.0
        %v1236 = vand.u32 %v1117, 4294901760
        %v1237 = vsub.f32 %v1117, %v1236
        %v1238 = vand.u32 %v1237, 4294901760
        %v1239 = vsub.f32 %v1237, %v1238
        %v1240 = vand.u32 %v1239, 4294901760
        %1241 = vmatprep.subr.mxu0 %v1240
        %v1242 = vand.u32 %v1116, 4294901760
        %v1243 = vsub.f32 %v1116, %v1242
        %v1244 = vand.u32 %v1243, 4294901760
        %v1245 = vsub.f32 %v1243, %v1244
        %v1246 = vand.u32 %v1245, 4294901760
        %1247 = vmatpush1.msra.mxu0 %v1246
        %v1248 = vand.u32 %v1115, 4294901760
        %v1249 = vsub.f32 %v1115, %v1248
        %v1250 = vand.u32 %v1249, 4294901760
        %v1251 = vsub.f32 %v1249, %v1250
        %v1252 = vand.u32 %v1251, 4294901760
        %1253 = vmatprep.subr.mxu0 %v1252
        %v1254 = vand.u32 %v1114, 4294901760
        %v1255 = vsub.f32 %v1114, %v1254
        %v1256 = vand.u32 %v1255, 4294901760
        %v1257 = vsub.f32 %v1255, %v1256
        %v1258 = vand.u32 %v1257, 4294901760
        %1259 = vmatpush1.msra.mxu0 %v1258
        %v1260 = vand.u32 %v1113, 4294901760
        %v1261 = vsub.f32 %v1113, %v1260
        %v1262 = vand.u32 %v1261, 4294901760
        %v1263 = vsub.f32 %v1261, %v1262
        %v1264 = vand.u32 %v1263, 4294901760
        %1265 = vmatprep.subr.mxu0 %v1264
        %v1266 = vand.u32 %v1112, 4294901760
        %v1267 = vsub.f32 %v1112, %v1266
        %v1268 = vand.u32 %v1267, 4294901760
        %v1269 = vsub.f32 %v1267, %v1268
        %v1270 = vand.u32 %v1269, 4294901760
        %1271 = vmatpush1.msra.mxu0 %v1270
        %v1272 = vand.u32 %v1111, 4294901760
        %v1273 = vsub.f32 %v1111, %v1272
        %v1274 = vand.u32 %v1273, 4294901760
        %v1275 = vsub.f32 %v1273, %v1274
        %v1276 = vand.u32 %v1275, 4294901760
        %1277 = vmatprep.subr.mxu0 %v1276
        %v1278 = vand.u32 %v1110, 4294901760
        %v1279 = vsub.f32 %v1110, %v1278
        %v1280 = vand.u32 %v1279, 4294901760
        %v1281 = vsub.f32 %v1279, %v1280
        %v1282 = vand.u32 %v1281, 4294901760
        %1283 = vmatpush1.msra.mxu0 %v1282
        %v1284 = vand.u32 %v1109, 4294901760
        %v1285 = vsub.f32 %v1109, %v1284
        %v1286 = vand.u32 %v1285, 4294901760
        %v1287 = vsub.f32 %v1285, %v1286
        %v1288 = vand.u32 %v1287, 4294901760
        %1289 = vmatprep.subr.mxu0 %v1288
        %v1290 = vand.u32 %v1108, 4294901760
        %v1291 = vsub.f32 %v1108, %v1290
        %v1292 = vand.u32 %v1291, 4294901760
        %v1293 = vsub.f32 %v1291, %v1292
        %v1294 = vand.u32 %v1293, 4294901760
        %1295 = vmatpush1.msra.mxu0 %v1294
        %v1296 = vand.u32 %v1107, 4294901760
        %v1297 = vsub.f32 %v1107, %v1296
        %v1298 = vand.u32 %v1297, 4294901760
        %v1299 = vsub.f32 %v1297, %v1298
        %v1300 = vand.u32 %v1299, 4294901760
        %1301 = vmatprep.subr.mxu0 %v1300
        %v1302 = vand.u32 %v1106, 4294901760
        %v1303 = vsub.f32 %v1106, %v1302
        %v1304 = vand.u32 %v1303, 4294901760
        %v1305 = vsub.f32 %v1303, %v1304
        %v1306 = vand.u32 %v1305, 4294901760
        %1307 = vmatpush1.msra.mxu0 %v1306
        %v1308 = vand.u32 %v1105, 4294901760
        %v1309 = vsub.f32 %v1105, %v1308
        %v1310 = vand.u32 %v1309, 4294901760
        %v1311 = vsub.f32 %v1309, %v1310
        %v1312 = vand.u32 %v1311, 4294901760
        %1313 = vmatprep.subr.mxu0 %v1312
        %v1314 = vand.u32 %v1104, 4294901760
        %v1315 = vsub.f32 %v1104, %v1314
        %v1316 = vand.u32 %v1315, 4294901760
        %v1317 = vsub.f32 %v1315, %v1316
        %v1318 = vand.u32 %v1317, 4294901760
        %1319 = vmatpush1.msra.mxu0 %v1318
        %v1320 = vand.u32 %v1103, 4294901760
        %v1321 = vsub.f32 %v1103, %v1320
        %v1322 = vand.u32 %v1321, 4294901760
        %v1323 = vsub.f32 %v1321, %v1322
        %v1324 = vand.u32 %v1323, 4294901760
        %1325 = vmatprep.subr.mxu0 %v1324
        %v1326 = vand.u32 %v1102, 4294901760
        %v1327 = vsub.f32 %v1102, %v1326
        %v1328 = vand.u32 %v1327, 4294901760
        %v1329 = vsub.f32 %v1327, %v1328
        %v1330 = vand.u32 %v1329, 4294901760
        %1331 = vmatpush1.msra.mxu0 %v1330
        %v1332 = vand.u32 %v1101, 4294901760
        %v1333 = vsub.f32 %v1101, %v1332
        %v1334 = vand.u32 %v1333, 4294901760
        %v1335 = vsub.f32 %v1333, %v1334
        %v1336 = vand.u32 %v1335, 4294901760
        %1337 = vmatprep.subr.mxu0 %v1336
        %v1338 = vand.u32 %v1100, 4294901760
        %v1339 = vsub.f32 %v1100, %v1338
        %v1340 = vand.u32 %v1339, 4294901760
        %v1341 = vsub.f32 %v1339, %v1340
        %v1342 = vand.u32 %v1341, 4294901760
        %1343 = vmatpush1.msra.mxu0 %v1342
        %1344 = vmatprep.subr.mxu0 0.0
        %1345 = vmatpush2.msra.mxu0 0.0
        %1346 = vmatprep.subr.mxu0 0.0
        %1347 = vmatpush2.msra.mxu0 0.0
        %1348 = vmatprep.subr.mxu0 0.0
        %1349 = vmatpush2.msra.mxu0 0.0
        %1350 = vmatprep.subr.mxu0 0.0
        %1351 = vmatpush2.msra.mxu0 0.0
        %1352 = vmatprep.subr.mxu0 0.0
        %1353 = vmatpush2.msra.mxu0 0.0
        %1354 = vmatprep.subr.mxu0 0.0
        %1355 = vmatpush2.msra.mxu0 0.0
        %1356 = vmatprep.subr.mxu0 0.0
        %1357 = vmatpush2.msra.mxu0 0.0
        %1358 = vmatprep.subr.mxu0 0.0
        %1359 = vmatpush2.msra.mxu0 0.0
        %1360 = vmatprep.subr.mxu0 0.0
        %1361 = vmatpush2.msra.mxu0 0.0
        %1362 = vmatprep.subr.mxu0 0.0
        %1363 = vmatpush2.msra.mxu0 0.0
        %1364 = vmatprep.subr.mxu0 0.0
        %1365 = vmatpush2.msra.mxu0 0.0
        %1366 = vmatprep.subr.mxu0 0.0
        %1367 = vmatpush2.msra.mxu0 0.0
        %1368 = vmatprep.subr.mxu0 0.0
        %1369 = vmatpush2.msra.mxu0 0.0
        %1370 = vmatprep.subr.mxu0 0.0
        %1371 = vmatpush2.msra.mxu0 0.0
        %1372 = vmatprep.subr.mxu0 0.0
        %1373 = vmatpush2.msra.mxu0 0.0
        %1374 = vmatprep.subr.mxu0 0.0
        %1375 = vmatpush2.msra.mxu0 0.0
        %1376 = vmatprep.mubr.f32.mxu0 0.0
        %v1377 = vand.u32 %v1126, 4294901760
        %1378 = vmatmul.mubr.f32.gmra.mxu0 %v1377
        %v1379 = vpop.f32.mrf.mxu0
        %v1380 = vadd.f32 %v1218, %v1379
        %v1381 = vpop.f32.mrf.mxu0
        %v1382 = vadd.f32 %v1220, %v1381
        %1383 = vdwg.mxu0
        %1384 = vmatprep.subr.mxu0 0.0
        %1385 = vmatpush1.msra.mxu0 0.0
        %1386 = vmatprep.subr.mxu0 0.0
        %1387 = vmatpush1.msra.mxu0 0.0
        %1388 = vmatprep.subr.mxu0 0.0
        %1389 = vmatpush1.msra.mxu0 0.0
        %1390 = vmatprep.subr.mxu0 0.0
        %1391 = vmatpush1.msra.mxu0 0.0
        %1392 = vmatprep.subr.mxu0 0.0
        %1393 = vmatpush1.msra.mxu0 0.0
        %1394 = vmatprep.subr.mxu0 0.0
        %1395 = vmatpush1.msra.mxu0 0.0
        %1396 = vmatprep.subr.mxu0 0.0
        %1397 = vmatpush1.msra.mxu0 0.0
        %v1398 = vand.u32 %v1117, 4294901760
        %v1399 = vsub.f32 %v1117, %v1398
        %1400 = vmatprep.subr.mxu0 %v1399
        %v1401 = vand.u32 %v1116, 4294901760
        %v1402 = vsub.f32 %v1116, %v1401
        %1403 = vmatpush1.msra.mxu0 %v1402
        %v1404 = vand.u32 %v1115, 4294901760
        %v1405 = vsub.f32 %v1115, %v1404
        %1406 = vmatprep.subr.mxu0 %v1405
        %v1407 = vand.u32 %v1114, 4294901760
        %v1408 = vsub.f32 %v1114, %v1407
        %1409 = vmatpush1.msra.mxu0 %v1408
        %v1410 = vand.u32 %v1113, 4294901760
        %v1411 = vsub.f32 %v1113, %v1410
        %1412 = vmatprep.subr.mxu0 %v1411
        %v1413 = vand.u32 %v1112, 4294901760
        %v1414 = vsub.f32 %v1112, %v1413
        %1415 = vmatpush1.msra.mxu0 %v1414
        %v1416 = vand.u32 %v1111, 4294901760
        %v1417 = vsub.f32 %v1111, %v1416
        %1418 = vmatprep.subr.mxu0 %v1417
        %v1419 = vand.u32 %v1110, 4294901760
        %v1420 = vsub.f32 %v1110, %v1419
        %1421 = vmatpush1.msra.mxu0 %v1420
        %v1422 = vand.u32 %v1109, 4294901760
        %v1423 = vsub.f32 %v1109, %v1422
        %1424 = vmatprep.subr.mxu0 %v1423
        %v1425 = vand.u32 %v1108, 4294901760
        %v1426 = vsub.f32 %v1108, %v1425
        %1427 = vmatpush1.msra.mxu0 %v1426
        %v1428 = vand.u32 %v1107, 4294901760
        %v1429 = vsub.f32 %v1107, %v1428
        %1430 = vmatprep.subr.mxu0 %v1429
        %v1431 = vand.u32 %v1106, 4294901760
        %v1432 = vsub.f32 %v1106, %v1431
        %1433 = vmatpush1.msra.mxu0 %v1432
        %v1434 = vand.u32 %v1105, 4294901760
        %v1435 = vsub.f32 %v1105, %v1434
        %1436 = vmatprep.subr.mxu0 %v1435
        %v1437 = vand.u32 %v1104, 4294901760
        %v1438 = vsub.f32 %v1104, %v1437
        %1439 = vmatpush1.msra.mxu0 %v1438
        %v1440 = vand.u32 %v1103, 4294901760
        %v1441 = vsub.f32 %v1103, %v1440
        %1442 = vmatprep.subr.mxu0 %v1441
        %v1443 = vand.u32 %v1102, 4294901760
        %v1444 = vsub.f32 %v1102, %v1443
        %1445 = vmatpush1.msra.mxu0 %v1444
        %v1446 = vand.u32 %v1101, 4294901760
        %v1447 = vsub.f32 %v1101, %v1446
        %1448 = vmatprep.subr.mxu0 %v1447
        %v1449 = vand.u32 %v1100, 4294901760
        %v1450 = vsub.f32 %v1100, %v1449
        %1451 = vmatpush1.msra.mxu0 %v1450
        %1452 = vmatprep.subr.mxu0 0.0
        %1453 = vmatpush2.msra.mxu0 0.0
        %1454 = vmatprep.subr.mxu0 0.0
        %1455 = vmatpush2.msra.mxu0 0.0
        %1456 = vmatprep.subr.mxu0 0.0
        %1457 = vmatpush2.msra.mxu0 0.0
        %1458 = vmatprep.subr.mxu0 0.0
        %1459 = vmatpush2.msra.mxu0 0.0
        %1460 = vmatprep.subr.mxu0 0.0
        %1461 = vmatpush2.msra.mxu0 0.0
        %1462 = vmatprep.subr.mxu0 0.0
        %1463 = vmatpush2.msra.mxu0 0.0
        %1464 = vmatprep.subr.mxu0 0.0
        %1465 = vmatpush2.msra.mxu0 0.0
        %1466 = vmatprep.subr.mxu0 0.0
        %1467 = vmatpush2.msra.mxu0 0.0
        %1468 = vmatprep.subr.mxu0 0.0
        %1469 = vmatpush2.msra.mxu0 0.0
        %1470 = vmatprep.subr.mxu0 0.0
        %1471 = vmatpush2.msra.mxu0 0.0
        %1472 = vmatprep.subr.mxu0 0.0
        %1473 = vmatpush2.msra.mxu0 0.0
        %1474 = vmatprep.subr.mxu0 0.0
        %1475 = vmatpush2.msra.mxu0 0.0
        %1476 = vmatprep.subr.mxu0 0.0
        %1477 = vmatpush2.msra.mxu0 0.0
        %1478 = vmatprep.subr.mxu0 0.0
        %1479 = vmatpush2.msra.mxu0 0.0
        %1480 = vmatprep.subr.mxu0 0.0
        %1481 = vmatpush2.msra.mxu0 0.0
        %1482 = vmatprep.subr.mxu0 0.0
        %1483 = vmatpush2.msra.mxu0 0.0
        %1484 = vmatprep.mubr.f32.mxu0 0.0
        %v1485 = vand.u32 %v1126, 4294901760
        %v1486 = vsub.f32 %v1126, %v1485
        %1487 = vmatmul.mubr.f32.gmra.mxu0 %v1486
        %v1488 = vpop.f32.mrf.mxu0
        %v1489 = vadd.f32 %v1380, %v1488
        %v1490 = vpop.f32.mrf.mxu0
        %v1491 = vadd.f32 %v1382, %v1490
        %1492 = vdwg.mxu0
        %1493 = vmatprep.subr.mxu0 0.0
        %1494 = vmatpush1.msra.mxu0 0.0
        %1495 = vmatprep.subr.mxu0 0.0
        %1496 = vmatpush1.msra.mxu0 0.0
        %1497 = vmatprep.subr.mxu0 0.0
        %1498 = vmatpush1.msra.mxu0 0.0
        %1499 = vmatprep.subr.mxu0 0.0
        %1500 = vmatpush1.msra.mxu0 0.0
        %1501 = vmatprep.subr.mxu0 0.0
        %1502 = vmatpush1.msra.mxu0 0.0
        %1503 = vmatprep.subr.mxu0 0.0
        %1504 = vmatpush1.msra.mxu0 0.0
        %1505 = vmatprep.subr.mxu0 0.0
        %1506 = vmatpush1.msra.mxu0 0.0
        %v1507 = vand.u32 %v1117, 4294901760
        %1508 = vmatprep.subr.mxu0 %v1507
        %v1509 = vand.u32 %v1116, 4294901760
        %1510 = vmatpush1.msra.mxu0 %v1509
        %v1511 = vand.u32 %v1115, 4294901760
        %1512 = vmatprep.subr.mxu0 %v1511
        %v1513 = vand.u32 %v1114, 4294901760
        %1514 = vmatpush1.msra.mxu0 %v1513
        %v1515 = vand.u32 %v1113, 4294901760
        %1516 = vmatprep.subr.mxu0 %v1515
        %v1517 = vand.u32 %v1112, 4294901760
        %1518 = vmatpush1.msra.mxu0 %v1517
        %v1519 = vand.u32 %v1111, 4294901760
        %1520 = vmatprep.subr.mxu0 %v1519
        %v1521 = vand.u32 %v1110, 4294901760
        %1522 = vmatpush1.msra.mxu0 %v1521
        %v1523 = vand.u32 %v1109, 4294901760
        %1524 = vmatprep.subr.mxu0 %v1523
        %v1525 = vand.u32 %v1108, 4294901760
        %1526 = vmatpush1.msra.mxu0 %v1525
        %v1527 = vand.u32 %v1107, 4294901760
        %1528 = vmatprep.subr.mxu0 %v1527
        %v1529 = vand.u32 %v1106, 4294901760
        %1530 = vmatpush1.msra.mxu0 %v1529
        %v1531 = vand.u32 %v1105, 4294901760
        %1532 = vmatprep.subr.mxu0 %v1531
        %v1533 = vand.u32 %v1104, 4294901760
        %1534 = vmatpush1.msra.mxu0 %v1533
        %v1535 = vand.u32 %v1103, 4294901760
        %1536 = vmatprep.subr.mxu0 %v1535
        %v1537 = vand.u32 %v1102, 4294901760
        %1538 = vmatpush1.msra.mxu0 %v1537
        %v1539 = vand.u32 %v1101, 4294901760
        %1540 = vmatprep.subr.mxu0 %v1539
        %v1541 = vand.u32 %v1100, 4294901760
        %1542 = vmatpush1.msra.mxu0 %v1541
        %1543 = vmatprep.subr.mxu0 0.0
        %1544 = vmatpush2.msra.mxu0 0.0
        %1545 = vmatprep.subr.mxu0 0.0
        %1546 = vmatpush2.msra.mxu0 0.0
        %1547 = vmatprep.subr.mxu0 0.0
        %1548 = vmatpush2.msra.mxu0 0.0
        %1549 = vmatprep.subr.mxu0 0.0
        %1550 = vmatpush2.msra.mxu0 0.0
        %1551 = vmatprep.subr.mxu0 0.0
        %1552 = vmatpush2.msra.mxu0 0.0
        %1553 = vmatprep.subr.mxu0 0.0
        %1554 = vmatpush2.msra.mxu0 0.0
        %1555 = vmatprep.subr.mxu0 0.0
        %1556 = vmatpush2.msra.mxu0 0.0
        %1557 = vmatprep.subr.mxu0 0.0
        %1558 = vmatpush2.msra.mxu0 0.0
        %1559 = vmatprep.subr.mxu0 0.0
        %1560 = vmatpush2.msra.mxu0 0.0
        %1561 = vmatprep.subr.mxu0 0.0
        %1562 = vmatpush2.msra.mxu0 0.0
        %1563 = vmatprep.subr.mxu0 0.0
        %1564 = vmatpush2.msra.mxu0 0.0
        %1565 = vmatprep.subr.mxu0 0.0
        %1566 = vmatpush2.msra.mxu0 0.0
        %1567 = vmatprep.subr.mxu0 0.0
        %1568 = vmatpush2.msra.mxu0 0.0
        %1569 = vmatprep.subr.mxu0 0.0
        %1570 = vmatpush2.msra.mxu0 0.0
        %1571 = vmatprep.subr.mxu0 0.0
        %1572 = vmatpush2.msra.mxu0 0.0
        %1573 = vmatprep.subr.mxu0 0.0
        %1574 = vmatpush2.msra.mxu0 0.0
        %1575 = vmatprep.mubr.f32.mxu0 0.0
        %v1576 = vand.u32 %v1126, 4294901760
        %v1577 = vsub.f32 %v1126, %v1576
        %v1578 = vand.u32 %v1577, 4294901760
        %1579 = vmatmul.mubr.f32.gmra.mxu0 %v1578
        %v1580 = vpop.f32.mrf.mxu0
        %v1581 = vadd.f32 %v1489, %v1580
        %v1582 = vpop.f32.mrf.mxu0
        %v1583 = vadd.f32 %v1491, %v1582
        %1584 = vdwg.mxu0
        %1585 = vmatprep.subr.mxu0 0.0
        %1586 = vmatpush1.msra.mxu0 0.0
        %1587 = vmatprep.subr.mxu0 0.0
        %1588 = vmatpush1.msra.mxu0 0.0
        %1589 = vmatprep.subr.mxu0 0.0
        %1590 = vmatpush1.msra.mxu0 0.0
        %1591 = vmatprep.subr.mxu0 0.0
        %1592 = vmatpush1.msra.mxu0 0.0
        %1593 = vmatprep.subr.mxu0 0.0
        %1594 = vmatpush1.msra.mxu0 0.0
        %1595 = vmatprep.subr.mxu0 0.0
        %1596 = vmatpush1.msra.mxu0 0.0
        %1597 = vmatprep.subr.mxu0 0.0
        %1598 = vmatpush1.msra.mxu0 0.0
        %v1599 = vand.u32 %v1117, 4294901760
        %v1600 = vsub.f32 %v1117, %v1599
        %v1601 = vand.u32 %v1600, 4294901760
        %1602 = vmatprep.subr.mxu0 %v1601
        %v1603 = vand.u32 %v1116, 4294901760
        %v1604 = vsub.f32 %v1116, %v1603
        %v1605 = vand.u32 %v1604, 4294901760
        %1606 = vmatpush1.msra.mxu0 %v1605
        %v1607 = vand.u32 %v1115, 4294901760
        %v1608 = vsub.f32 %v1115, %v1607
        %v1609 = vand.u32 %v1608, 4294901760
        %1610 = vmatprep.subr.mxu0 %v1609
        %v1611 = vand.u32 %v1114, 4294901760
        %v1612 = vsub.f32 %v1114, %v1611
        %v1613 = vand.u32 %v1612, 4294901760
        %1614 = vmatpush1.msra.mxu0 %v1613
        %v1615 = vand.u32 %v1113, 4294901760
        %v1616 = vsub.f32 %v1113, %v1615
        %v1617 = vand.u32 %v1616, 4294901760
        %1618 = vmatprep.subr.mxu0 %v1617
        %v1619 = vand.u32 %v1112, 4294901760
        %v1620 = vsub.f32 %v1112, %v1619
        %v1621 = vand.u32 %v1620, 4294901760
        %1622 = vmatpush1.msra.mxu0 %v1621
        %v1623 = vand.u32 %v1111, 4294901760
        %v1624 = vsub.f32 %v1111, %v1623
        %v1625 = vand.u32 %v1624, 4294901760
        %1626 = vmatprep.subr.mxu0 %v1625
        %v1627 = vand.u32 %v1110, 4294901760
        %v1628 = vsub.f32 %v1110, %v1627
        %v1629 = vand.u32 %v1628, 4294901760
        %1630 = vmatpush1.msra.mxu0 %v1629
        %v1631 = vand.u32 %v1109, 4294901760
        %v1632 = vsub.f32 %v1109, %v1631
        %v1633 = vand.u32 %v1632, 4294901760
        %1634 = vmatprep.subr.mxu0 %v1633
        %v1635 = vand.u32 %v1108, 4294901760
        %v1636 = vsub.f32 %v1108, %v1635
        %v1637 = vand.u32 %v1636, 4294901760
        %1638 = vmatpush1.msra.mxu0 %v1637
        %v1639 = vand.u32 %v1107, 4294901760
        %v1640 = vsub.f32 %v1107, %v1639
        %v1641 = vand.u32 %v1640, 4294901760
        %1642 = vmatprep.subr.mxu0 %v1641
        %v1643 = vand.u32 %v1106, 4294901760
        %v1644 = vsub.f32 %v1106, %v1643
        %v1645 = vand.u32 %v1644, 4294901760
        %1646 = vmatpush1.msra.mxu0 %v1645
        %v1647 = vand.u32 %v1105, 4294901760
        %v1648 = vsub.f32 %v1105, %v1647
        %v1649 = vand.u32 %v1648, 4294901760
        %1650 = vmatprep.subr.mxu0 %v1649
        %v1651 = vand.u32 %v1104, 4294901760
        %v1652 = vsub.f32 %v1104, %v1651
        %v1653 = vand.u32 %v1652, 4294901760
        %1654 = vmatpush1.msra.mxu0 %v1653
        %v1655 = vand.u32 %v1103, 4294901760
        %v1656 = vsub.f32 %v1103, %v1655
        %v1657 = vand.u32 %v1656, 4294901760
        %1658 = vmatprep.subr.mxu0 %v1657
        %v1659 = vand.u32 %v1102, 4294901760
        %v1660 = vsub.f32 %v1102, %v1659
        %v1661 = vand.u32 %v1660, 4294901760
        %1662 = vmatpush1.msra.mxu0 %v1661
        %v1663 = vand.u32 %v1101, 4294901760
        %v1664 = vsub.f32 %v1101, %v1663
        %v1665 = vand.u32 %v1664, 4294901760
        %1666 = vmatprep.subr.mxu0 %v1665
        %v1667 = vand.u32 %v1100, 4294901760
        %v1668 = vsub.f32 %v1100, %v1667
        %v1669 = vand.u32 %v1668, 4294901760
        %1670 = vmatpush1.msra.mxu0 %v1669
        %1671 = vmatprep.subr.mxu0 0.0
        %1672 = vmatpush2.msra.mxu0 0.0
        %1673 = vmatprep.subr.mxu0 0.0
        %1674 = vmatpush2.msra.mxu0 0.0
        %1675 = vmatprep.subr.mxu0 0.0
        %1676 = vmatpush2.msra.mxu0 0.0
        %1677 = vmatprep.subr.mxu0 0.0
        %1678 = vmatpush2.msra.mxu0 0.0
        %1679 = vmatprep.subr.mxu0 0.0
        %1680 = vmatpush2.msra.mxu0 0.0
        %1681 = vmatprep.subr.mxu0 0.0
        %1682 = vmatpush2.msra.mxu0 0.0
        %1683 = vmatprep.subr.mxu0 0.0
        %1684 = vmatpush2.msra.mxu0 0.0
        %1685 = vmatprep.subr.mxu0 0.0
        %1686 = vmatpush2.msra.mxu0 0.0
        %1687 = vmatprep.subr.mxu0 0.0
        %1688 = vmatpush2.msra.mxu0 0.0
        %1689 = vmatprep.subr.mxu0 0.0
        %1690 = vmatpush2.msra.mxu0 0.0
        %1691 = vmatprep.subr.mxu0 0.0
        %1692 = vmatpush2.msra.mxu0 0.0
        %1693 = vmatprep.subr.mxu0 0.0
        %1694 = vmatpush2.msra.mxu0 0.0
        %1695 = vmatprep.subr.mxu0 0.0
        %1696 = vmatpush2.msra.mxu0 0.0
        %1697 = vmatprep.subr.mxu0 0.0
        %1698 = vmatpush2.msra.mxu0 0.0
        %1699 = vmatprep.subr.mxu0 0.0
        %1700 = vmatpush2.msra.mxu0 0.0
        %1701 = vmatprep.subr.mxu0 0.0
        %1702 = vmatpush2.msra.mxu0 0.0
        %1703 = vmatprep.mubr.f32.mxu0 0.0
        %v1704 = vand.u32 %v1126, 4294901760
        %1705 = vmatmul.mubr.f32.gmra.mxu0 %v1704
        %v1706 = vpop.f32.mrf.mxu0
        %v1707 = vadd.f32 %v1581, %v1706
        %v1708 = vpop.f32.mrf.mxu0
        %v1709 = vadd.f32 %v1583, %v1708
        %1710 = vdwg.mxu0
        %1711 = vmatprep.subr.mxu0 0.0
        %1712 = vmatpush1.msra.mxu0 0.0
        %1713 = vmatprep.subr.mxu0 0.0
        %1714 = vmatpush1.msra.mxu0 0.0
        %1715 = vmatprep.subr.mxu0 0.0
        %1716 = vmatpush1.msra.mxu0 0.0
        %1717 = vmatprep.subr.mxu0 0.0
        %1718 = vmatpush1.msra.mxu0 0.0
        %1719 = vmatprep.subr.mxu0 0.0
        %1720 = vmatpush1.msra.mxu0 0.0
        %1721 = vmatprep.subr.mxu0 0.0
        %1722 = vmatpush1.msra.mxu0 0.0
        %1723 = vmatprep.subr.mxu0 0.0
        %1724 = vmatpush1.msra.mxu0 0.0
        %v1725 = vand.u32 %v1117, 4294901760
        %1726 = vmatprep.subr.mxu0 %v1725
        %v1727 = vand.u32 %v1116, 4294901760
        %1728 = vmatpush1.msra.mxu0 %v1727
        %v1729 = vand.u32 %v1115, 4294901760
        %1730 = vmatprep.subr.mxu0 %v1729
        %v1731 = vand.u32 %v1114, 4294901760
        %1732 = vmatpush1.msra.mxu0 %v1731
        %v1733 = vand.u32 %v1113, 4294901760
        %1734 = vmatprep.subr.mxu0 %v1733
        %v1735 = vand.u32 %v1112, 4294901760
        %1736 = vmatpush1.msra.mxu0 %v1735
        %v1737 = vand.u32 %v1111, 4294901760
        %1738 = vmatprep.subr.mxu0 %v1737
        %v1739 = vand.u32 %v1110, 4294901760
        %1740 = vmatpush1.msra.mxu0 %v1739
        %v1741 = vand.u32 %v1109, 4294901760
        %1742 = vmatprep.subr.mxu0 %v1741
        %v1743 = vand.u32 %v1108, 4294901760
        %1744 = vmatpush1.msra.mxu0 %v1743
        %v1745 = vand.u32 %v1107, 4294901760
        %1746 = vmatprep.subr.mxu0 %v1745
        %v1747 = vand.u32 %v1106, 4294901760
        %1748 = vmatpush1.msra.mxu0 %v1747
        %v1749 = vand.u32 %v1105, 4294901760
        %1750 = vmatprep.subr.mxu0 %v1749
        %v1751 = vand.u32 %v1104, 4294901760
        %1752 = vmatpush1.msra.mxu0 %v1751
        %v1753 = vand.u32 %v1103, 4294901760
        %1754 = vmatprep.subr.mxu0 %v1753
        %v1755 = vand.u32 %v1102, 4294901760
        %1756 = vmatpush1.msra.mxu0 %v1755
        %v1757 = vand.u32 %v1101, 4294901760
        %1758 = vmatprep.subr.mxu0 %v1757
        %v1759 = vand.u32 %v1100, 4294901760
        %1760 = vmatpush1.msra.mxu0 %v1759
        %1761 = vmatprep.subr.mxu0 0.0
        %1762 = vmatpush2.msra.mxu0 0.0
        %1763 = vmatprep.subr.mxu0 0.0
        %1764 = vmatpush2.msra.mxu0 0.0
        %1765 = vmatprep.subr.mxu0 0.0
        %1766 = vmatpush2.msra.mxu0 0.0
        %1767 = vmatprep.subr.mxu0 0.0
        %1768 = vmatpush2.msra.mxu0 0.0
        %1769 = vmatprep.subr.mxu0 0.0
        %1770 = vmatpush2.msra.mxu0 0.0
        %1771 = vmatprep.subr.mxu0 0.0
        %1772 = vmatpush2.msra.mxu0 0.0
        %1773 = vmatprep.subr.mxu0 0.0
        %1774 = vmatpush2.msra.mxu0 0.0
        %1775 = vmatprep.subr.mxu0 0.0
        %1776 = vmatpush2.msra.mxu0 0.0
        %1777 = vmatprep.subr.mxu0 0.0
        %1778 = vmatpush2.msra.mxu0 0.0
        %1779 = vmatprep.subr.mxu0 0.0
        %1780 = vmatpush2.msra.mxu0 0.0
        %1781 = vmatprep.subr.mxu0 0.0
        %1782 = vmatpush2.msra.mxu0 0.0
        %1783 = vmatprep.subr.mxu0 0.0
        %1784 = vmatpush2.msra.mxu0 0.0
        %1785 = vmatprep.subr.mxu0 0.0
        %1786 = vmatpush2.msra.mxu0 0.0
        %1787 = vmatprep.subr.mxu0 0.0
        %1788 = vmatpush2.msra.mxu0 0.0
        %1789 = vmatprep.subr.mxu0 0.0
        %1790 = vmatpush2.msra.mxu0 0.0
        %1791 = vmatprep.subr.mxu0 0.0
        %1792 = vmatpush2.msra.mxu0 0.0
        %1793 = vmatprep.mubr.f32.mxu0 0.0
        %v1794 = vand.u32 %v1126, 4294901760
        %1795 = vmatmul.mubr.f32.gmra.mxu0 %v1794
        %v1796 = vpop.f32.mrf.mxu0
        %v1797 = vadd.f32 %v1707, %v1796
        %v1798 = vpop.f32.mrf.mxu0
        %v1799 = vadd.f32 %v1709, %v1798
        %1800 = vdwg.mxu0
        %v1801 = vsub.f32 0.0, %v1797
        %v1802 = vsub.f32 0.0, %v1799
        %v1803 = vmul.f32 %v1801, 1.442695
        %v1804 = vpow.pop %v1803
        %v1805 = vmul.f32 %v1802, 1.442695
        %v1806 = vpow.pop %v1805
        %v1807 = vadd.f32 %v1804, 1.0
        %v1808 = vadd.f32 %v1806, 1.0
        %v1809 = vrcp.pop %v1807
        %v1810 = vmul.f32 1.0, %v1809
        %v1811 = vrcp.pop %v1808
        %v1812 = vmul.f32 1.0, %v1811
        %v1813 = vmul.f32 %v1797, %v1810
        %v1814 = vmul.f32 %v1799, %v1812
        %1815 = vst [vmem:[#allocation2 + $0x8] sm:$0xff] %v1813
        %1816 = vst [vmem:[#allocation2 + $0x10] sm:$0xff] %v1814
        %v1817 = vld [vmem:[#allocation2] sm:$0xff]
        %v1818 = vld [vmem:[#allocation2 + $0x8] sm:$0xff]
        %v1819 = vld [vmem:[#allocation2 + $0x10] sm:$0xff]
        %1823 = vrot.lane.b32.xlu0 %v1817, 17
        %v1824 = vpop.permute.xlu0 %1823
        %1825 = vrot.lane.b32.xlu0 %v1818, 17
        %v1826 = vpop.permute.xlu0 %1825
        %1827 = vrot.lane.b32.xlu0 %v1819, 17
        %v1828 = vpop.permute.xlu0 %1827
        %v1829 = vsel %vm943, %v1824, %v1826
        %v1830 = vsel %vm943, %v1826, %v1828
        %v1833 = vsel %vm362, %v1829, 0.0
        %v1834 = vsel %vm363, %v1830, 0.0
        %1835 = vst [vmem:[#allocation3] sm:$0xff] %v1833
        %1836 = vst [vmem:[#allocation3 + $0x8] sm:$0xff] %v1834
        %v1837 = vld [vmem:[#allocation2] sm:$0xff]
        %v1838 = vld [vmem:[#allocation2 + $0x8] sm:$0xff]
        %v1839 = vld [vmem:[#allocation2 + $0x10] sm:$0xff]
        %1843 = vrot.lane.b32.xlu0 %v1837, 16
        %v1844 = vpop.permute.xlu0 %1843
        %1845 = vrot.lane.b32.xlu0 %v1838, 16
        %v1846 = vpop.permute.xlu0 %1845
        %1847 = vrot.lane.b32.xlu0 %v1839, 16
        %v1848 = vpop.permute.xlu0 %1847
        %v1849 = vsel %vm964, %v1844, %v1846
        %v1850 = vsel %vm964, %v1846, %v1848
        %1853 = vst [vmem:[#allocation3 + $0x10] sm:$0xff] %v1849
        %1854 = vst [vmem:[#allocation3 + $0x18] sm:$0xff] %v1850
        %v1855 = vld [vmem:[#allocation2] sm:$0xff]
        %v1856 = vld [vmem:[#allocation2 + $0x8] sm:$0xff]
        %v1857 = vld [vmem:[#allocation2 + $0x10] sm:$0xff]
        %1861 = vrot.lane.b32.xlu0 %v1855, 15
        %v1862 = vpop.permute.xlu0 %1861
        %1863 = vrot.lane.b32.xlu0 %v1856, 15
        %v1864 = vpop.permute.xlu0 %1863
        %1865 = vrot.lane.b32.xlu0 %v1857, 15
        %v1866 = vpop.permute.xlu0 %1865
        %v1867 = vsel %vm983, %v1862, %v1864
        %v1868 = vsel %vm983, %v1864, %v1866
        %v1871 = vsel %vm364, %v1867, 0.0
        %v1872 = vsel %vm365, %v1868, 0.0
        %1873 = vst [vmem:[#allocation3 + $0x20] sm:$0xff] %v1871
        %1874 = vst [vmem:[#allocation3 + $0x28] sm:$0xff] %v1872
        %v1875 = vld [vmem:[#allocation2] sm:$0xff]
        %v1876 = vld [vmem:[#allocation2 + $0x8] sm:$0xff]
        %v1877 = vld [vmem:[#allocation2 + $0x10] sm:$0xff]
        %1881 = vrot.lane.b32.xlu0 %v1875, 1
        %v1882 = vpop.permute.xlu0 %1881
        %1883 = vrot.lane.b32.xlu0 %v1876, 1
        %v1884 = vpop.permute.xlu0 %1883
        %1885 = vrot.lane.b32.xlu0 %v1877, 1
        %v1886 = vpop.permute.xlu0 %1885
        %v1887 = vsel %vm1004, %v1882, %v1884
        %v1888 = vsel %vm1004, %v1884, %v1886
        %v1891 = vsel %vm362, %v1887, 0.0
        %v1892 = vsel %vm363, %v1888, 0.0
        %1893 = vst [vmem:[#allocation3 + $0x30] sm:$0xff] %v1891
        %1894 = vst [vmem:[#allocation3 + $0x38] sm:$0xff] %v1892
        %v1895 = vld [vmem:[#allocation2 + $0x8] sm:$0xff]
        %v1896 = vld [vmem:[#allocation2 + $0x10] sm:$0xff]
        %1897 = vst [vmem:[#allocation3 + $0x40] sm:$0xff] %v1895
        %1898 = vst [vmem:[#allocation3 + $0x48] sm:$0xff] %v1896
        %v1899 = vld [vmem:[#allocation2 + $0x8] sm:$0xff]
        %v1900 = vld [vmem:[#allocation2 + $0x10] sm:$0xff]
        %v1901 = vld [vmem:[#allocation2 + $0x18] sm:$0xff]
        %1905 = vrot.lane.b32.xlu0 %v1899, 127
        %v1906 = vpop.permute.xlu0 %1905
        %1907 = vrot.lane.b32.xlu0 %v1900, 127
        %v1908 = vpop.permute.xlu0 %1907
        %1909 = vrot.lane.b32.xlu0 %v1901, 127
        %v1910 = vpop.permute.xlu0 %1909
        %v1911 = vsel %vm1029, %v1906, %v1908
        %v1912 = vsel %vm1029, %v1908, %v1910
        %v1915 = vsel %vm364, %v1911, 0.0
        %v1916 = vsel %vm365, %v1912, 0.0
        %1917 = vst [vmem:[#allocation3 + $0x50] sm:$0xff] %v1915
        %1918 = vst [vmem:[#allocation3 + $0x58] sm:$0xff] %v1916
        %v1919 = vld [vmem:[#allocation2 + $0x8] sm:$0xff]
        %v1920 = vld [vmem:[#allocation2 + $0x10] sm:$0xff]
        %v1921 = vld [vmem:[#allocation2 + $0x18] sm:$0xff]
        %1925 = vrot.lane.b32.xlu0 %v1919, 113
        %v1926 = vpop.permute.xlu0 %1925
        %1927 = vrot.lane.b32.xlu0 %v1920, 113
        %v1928 = vpop.permute.xlu0 %1927
        %1929 = vrot.lane.b32.xlu0 %v1921, 113
        %v1930 = vpop.permute.xlu0 %1929
        %v1931 = vsel %vm1050, %v1926, %v1928
        %v1932 = vsel %vm1050, %v1928, %v1930
        %v1935 = vsel %vm362, %v1931, 0.0
        %v1936 = vsel %vm363, %v1932, 0.0
        %1937 = vst [vmem:[#allocation3 + $0x60] sm:$0xff] %v1935
        %1938 = vst [vmem:[#allocation3 + $0x68] sm:$0xff] %v1936
        %v1939 = vld [vmem:[#allocation2 + $0x8] sm:$0xff]
        %v1940 = vld [vmem:[#allocation2 + $0x10] sm:$0xff]
        %v1941 = vld [vmem:[#allocation2 + $0x18] sm:$0xff]
        %1945 = vrot.lane.b32.xlu0 %v1939, 112
        %v1946 = vpop.permute.xlu0 %1945
        %1947 = vrot.lane.b32.xlu0 %v1940, 112
        %v1948 = vpop.permute.xlu0 %1947
        %1949 = vrot.lane.b32.xlu0 %v1941, 112
        %v1950 = vpop.permute.xlu0 %1949
        %v1951 = vsel %vm1071, %v1946, %v1948
        %v1952 = vsel %vm1071, %v1948, %v1950
        %1955 = vst [vmem:[#allocation3 + $0x70] sm:$0xff] %v1951
        %1956 = vst [vmem:[#allocation3 + $0x78] sm:$0xff] %v1952
        %v1957 = vld [vmem:[#allocation2 + $0x8] sm:$0xff]
        %v1958 = vld [vmem:[#allocation2 + $0x10] sm:$0xff]
        %v1959 = vld [vmem:[#allocation2 + $0x18] sm:$0xff]
        %1963 = vrot.lane.b32.xlu0 %v1957, 111
        %v1964 = vpop.permute.xlu0 %1963
        %1965 = vrot.lane.b32.xlu0 %v1958, 111
        %v1966 = vpop.permute.xlu0 %1965
        %1967 = vrot.lane.b32.xlu0 %v1959, 111
        %v1968 = vpop.permute.xlu0 %1967
        %v1969 = vsel %vm1090, %v1964, %v1966
        %v1970 = vsel %vm1090, %v1966, %v1968
        %v1973 = vsel %vm364, %v1969, 0.0
        %v1974 = vsel %vm365, %v1970, 0.0
        %1975 = vst [vmem:[#allocation3 + $0x80] sm:$0xff] %v1973
        %1976 = vst [vmem:[#allocation3 + $0x88] sm:$0xff] %v1974
        %v1977 = vld [vmem:[%s5] sm:$0xff]
        %v1978 = vld [vmem:[#allocation3] sm:$0xff]
        %v1979 = vld [vmem:[#allocation3 + $0x8] sm:$0xff]
        %v1980 = vld [vmem:[#allocation3 + $0x10] sm:$0xff]
        %v1981 = vld [vmem:[#allocation3 + $0x18] sm:$0xff]
        %v1982 = vld [vmem:[#allocation3 + $0x20] sm:$0xff]
        %v1983 = vld [vmem:[#allocation3 + $0x28] sm:$0xff]
        %v1984 = vld [vmem:[#allocation3 + $0x30] sm:$0xff]
        %v1985 = vld [vmem:[#allocation3 + $0x38] sm:$0xff]
        %v1986 = vld [vmem:[#allocation3 + $0x40] sm:$0xff]
        %v1987 = vld [vmem:[#allocation3 + $0x48] sm:$0xff]
        %v1988 = vld [vmem:[#allocation3 + $0x50] sm:$0xff]
        %v1989 = vld [vmem:[#allocation3 + $0x58] sm:$0xff]
        %v1990 = vld [vmem:[#allocation3 + $0x60] sm:$0xff]
        %v1991 = vld [vmem:[#allocation3 + $0x68] sm:$0xff]
        %v1992 = vld [vmem:[#allocation3 + $0x70] sm:$0xff]
        %v1993 = vld [vmem:[#allocation3 + $0x78] sm:$0xff]
        %v1994 = vld [vmem:[#allocation3 + $0x80] sm:$0xff]
        %v1995 = vld [vmem:[#allocation3 + $0x88] sm:$0xff]
        %v1996 = vld [vmem:[%s6] sm:$0xff]
        %1998 = vset.pattern.permute.xlu0 0
        %1999 = vperm.xlu0 %1998, %v1996
        %v2000 = vpop.permute.xlu0 %1999
        %v2003 = vsel %vm1124, %v1977, 0
        %2005 = vmatprep.subr.mxu0 0.0
        %2006 = vmatpush1.msra.mxu0 0.0
        %2007 = vmatprep.subr.mxu0 0.0
        %2008 = vmatpush1.msra.mxu0 0.0
        %2009 = vmatprep.subr.mxu0 0.0
        %2010 = vmatpush1.msra.mxu0 0.0
        %2011 = vmatprep.subr.mxu0 0.0
        %2012 = vmatpush1.msra.mxu0 0.0
        %2013 = vmatprep.subr.mxu0 0.0
        %2014 = vmatpush1.msra.mxu0 0.0
        %2015 = vmatprep.subr.mxu0 0.0
        %2016 = vmatpush1.msra.mxu0 0.0
        %2017 = vmatprep.subr.mxu0 0.0
        %2018 = vmatpush1.msra.mxu0 0.0
        %v2019 = vand.u32 %v1995, 4294901760
        %2020 = vmatprep.subr.mxu0 %v2019
        %v2021 = vand.u32 %v1994, 4294901760
        %2022 = vmatpush1.msra.mxu0 %v2021
        %v2023 = vand.u32 %v1993, 4294901760
        %2024 = vmatprep.subr.mxu0 %v2023
        %v2025 = vand.u32 %v1992, 4294901760
        %2026 = vmatpush1.msra.mxu0 %v2025
        %v2027 = vand.u32 %v1991, 4294901760
        %2028 = vmatprep.subr.mxu0 %v2027
        %v2029 = vand.u32 %v1990, 4294901760
        %2030 = vmatpush1.msra.mxu0 %v2029
        %v2031 = vand.u32 %v1989, 4294901760
        %2032 = vmatprep.subr.mxu0 %v2031
        %v2033 = vand.u32 %v1988, 4294901760
        %2034 = vmatpush1.msra.mxu0 %v2033
        %v2035 = vand.u32 %v1987, 4294901760
        %2036 = vmatprep.subr.mxu0 %v2035
        %v2037 = vand.u32 %v1986, 4294901760
        %2038 = vmatpush1.msra.mxu0 %v2037
        %v2039 = vand.u32 %v1985, 4294901760
        %2040 = vmatprep.subr.mxu0 %v2039
        %v2041 = vand.u32 %v1984, 4294901760
        %2042 = vmatpush1.msra.mxu0 %v2041
        %v2043 = vand.u32 %v1983, 4294901760
        %2044 = vmatprep.subr.mxu0 %v2043
        %v2045 = vand.u32 %v1982, 4294901760
        %2046 = vmatpush1.msra.mxu0 %v2045
        %v2047 = vand.u32 %v1981, 4294901760
        %2048 = vmatprep.subr.mxu0 %v2047
        %v2049 = vand.u32 %v1980, 4294901760
        %2050 = vmatpush1.msra.mxu0 %v2049
        %v2051 = vand.u32 %v1979, 4294901760
        %2052 = vmatprep.subr.mxu0 %v2051
        %v2053 = vand.u32 %v1978, 4294901760
        %2054 = vmatpush1.msra.mxu0 %v2053
        %2055 = vmatprep.subr.mxu0 0.0
        %2056 = vmatpush2.msra.mxu0 0.0
        %2057 = vmatprep.subr.mxu0 0.0
        %2058 = vmatpush2.msra.mxu0 0.0
        %2059 = vmatprep.subr.mxu0 0.0
        %2060 = vmatpush2.msra.mxu0 0.0
        %2061 = vmatprep.subr.mxu0 0.0
        %2062 = vmatpush2.msra.mxu0 0.0
        %2063 = vmatprep.subr.mxu0 0.0
        %2064 = vmatpush2.msra.mxu0 0.0
        %2065 = vmatprep.subr.mxu0 0.0
        %2066 = vmatpush2.msra.mxu0 0.0
        %2067 = vmatprep.subr.mxu0 0.0
        %2068 = vmatpush2.msra.mxu0 0.0
        %2069 = vmatprep.subr.mxu0 0.0
        %2070 = vmatpush2.msra.mxu0 0.0
        %2071 = vmatprep.subr.mxu0 0.0
        %2072 = vmatpush2.msra.mxu0 0.0
        %2073 = vmatprep.subr.mxu0 0.0
        %2074 = vmatpush2.msra.mxu0 0.0
        %2075 = vmatprep.subr.mxu0 0.0
        %2076 = vmatpush2.msra.mxu0 0.0
        %2077 = vmatprep.subr.mxu0 0.0
        %2078 = vmatpush2.msra.mxu0 0.0
        %2079 = vmatprep.subr.mxu0 0.0
        %2080 = vmatpush2.msra.mxu0 0.0
        %2081 = vmatprep.subr.mxu0 0.0
        %2082 = vmatpush2.msra.mxu0 0.0
        %2083 = vmatprep.subr.mxu0 0.0
        %2084 = vmatpush2.msra.mxu0 0.0
        %2085 = vmatprep.subr.mxu0 0.0
        %2086 = vmatpush2.msra.mxu0 0.0
        %2087 = vmatprep.mubr.f32.mxu0 0.0
        %v2088 = vand.u32 %v2003, 4294901760
        %v2089 = vsub.f32 %v2003, %v2088
        %v2090 = vand.u32 %v2089, 4294901760
        %v2091 = vsub.f32 %v2089, %v2090
        %v2092 = vand.u32 %v2091, 4294901760
        %2093 = vmatmul.mubr.f32.gmra.mxu0 %v2092
        %v2094 = vpop.f32.mrf.mxu0
        %v2095 = vadd.f32 %v2000, %v2094
        %v2096 = vpop.f32.mrf.mxu0
        %v2097 = vadd.f32 %v2000, %v2096
        %2098 = vdwg.mxu0
        %2099 = vmatprep.subr.mxu0 0.0
        %2100 = vmatpush1.msra.mxu0 0.0
        %2101 = vmatprep.subr.mxu0 0.0
        %2102 = vmatpush1.msra.mxu0 0.0
        %2103 = vmatprep.subr.mxu0 0.0
        %2104 = vmatpush1.msra.mxu0 0.0
        %2105 = vmatprep.subr.mxu0 0.0
        %2106 = vmatpush1.msra.mxu0 0.0
        %2107 = vmatprep.subr.mxu0 0.0
        %2108 = vmatpush1.msra.mxu0 0.0
        %2109 = vmatprep.subr.mxu0 0.0
        %2110 = vmatpush1.msra.mxu0 0.0
        %2111 = vmatprep.subr.mxu0 0.0
        %2112 = vmatpush1.msra.mxu0 0.0
        %v2113 = vand.u32 %v1995, 4294901760
        %v2114 = vsub.f32 %v1995, %v2113
        %v2115 = vand.u32 %v2114, 4294901760
        %v2116 = vsub.f32 %v2114, %v2115
        %v2117 = vand.u32 %v2116, 4294901760
        %2118 = vmatprep.subr.mxu0 %v2117
        %v2119 = vand.u32 %v1994, 4294901760
        %v2120 = vsub.f32 %v1994, %v2119
        %v2121 = vand.u32 %v2120, 4294901760
        %v2122 = vsub.f32 %v2120, %v2121
        %v2123 = vand.u32 %v2122, 4294901760
        %2124 = vmatpush1.msra.mxu0 %v2123
        %v2125 = vand.u32 %v1993, 4294901760
        %v2126 = vsub.f32 %v1993, %v2125
        %v2127 = vand.u32 %v2126, 4294901760
        %v2128 = vsub.f32 %v2126, %v2127
        %v2129 = vand.u32 %v2128, 4294901760
        %2130 = vmatprep.subr.mxu0 %v2129
        %v2131 = vand.u32 %v1992, 4294901760
        %v2132 = vsub.f32 %v1992, %v2131
        %v2133 = vand.u32 %v2132, 4294901760
        %v2134 = vsub.f32 %v2132, %v2133
        %v2135 = vand.u32 %v2134, 4294901760
        %2136 = vmatpush1.msra.mxu0 %v2135
        %v2137 = vand.u32 %v1991, 4294901760
        %v2138 = vsub.f32 %v1991, %v2137
        %v2139 = vand.u32 %v2138, 4294901760
        %v2140 = vsub.f32 %v2138, %v2139
        %v2141 = vand.u32 %v2140, 4294901760
        %2142 = vmatprep.subr.mxu0 %v2141
        %v2143 = vand.u32 %v1990, 4294901760
        %v2144 = vsub.f32 %v1990, %v2143
        %v2145 = vand.u32 %v2144, 4294901760
        %v2146 = vsub.f32 %v2144, %v2145
        %v2147 = vand.u32 %v2146, 4294901760
        %2148 = vmatpush1.msra.mxu0 %v2147
        %v2149 = vand.u32 %v1989, 4294901760
        %v2150 = vsub.f32 %v1989, %v2149
        %v2151 = vand.u32 %v2150, 4294901760
        %v2152 = vsub.f32 %v2150, %v2151
        %v2153 = vand.u32 %v2152, 4294901760
        %2154 = vmatprep.subr.mxu0 %v2153
        %v2155 = vand.u32 %v1988, 4294901760
        %v2156 = vsub.f32 %v1988, %v2155
        %v2157 = vand.u32 %v2156, 4294901760
        %v2158 = vsub.f32 %v2156, %v2157
        %v2159 = vand.u32 %v2158, 4294901760
        %2160 = vmatpush1.msra.mxu0 %v2159
        %v2161 = vand.u32 %v1987, 4294901760
        %v2162 = vsub.f32 %v1987, %v2161
        %v2163 = vand.u32 %v2162, 4294901760
        %v2164 = vsub.f32 %v2162, %v2163
        %v2165 = vand.u32 %v2164, 4294901760
        %2166 = vmatprep.subr.mxu0 %v2165
        %v2167 = vand.u32 %v1986, 4294901760
        %v2168 = vsub.f32 %v1986, %v2167
        %v2169 = vand.u32 %v2168, 4294901760
        %v2170 = vsub.f32 %v2168, %v2169
        %v2171 = vand.u32 %v2170, 4294901760
        %2172 = vmatpush1.msra.mxu0 %v2171
        %v2173 = vand.u32 %v1985, 4294901760
        %v2174 = vsub.f32 %v1985, %v2173
        %v2175 = vand.u32 %v2174, 4294901760
        %v2176 = vsub.f32 %v2174, %v2175
        %v2177 = vand.u32 %v2176, 4294901760
        %2178 = vmatprep.subr.mxu0 %v2177
        %v2179 = vand.u32 %v1984, 4294901760
        %v2180 = vsub.f32 %v1984, %v2179
        %v2181 = vand.u32 %v2180, 4294901760
        %v2182 = vsub.f32 %v2180, %v2181
        %v2183 = vand.u32 %v2182, 4294901760
        %2184 = vmatpush1.msra.mxu0 %v2183
        %v2185 = vand.u32 %v1983, 4294901760
        %v2186 = vsub.f32 %v1983, %v2185
        %v2187 = vand.u32 %v2186, 4294901760
        %v2188 = vsub.f32 %v2186, %v2187
        %v2189 = vand.u32 %v2188, 4294901760
        %2190 = vmatprep.subr.mxu0 %v2189
        %v2191 = vand.u32 %v1982, 4294901760
        %v2192 = vsub.f32 %v1982, %v2191
        %v2193 = vand.u32 %v2192, 4294901760
        %v2194 = vsub.f32 %v2192, %v2193
        %v2195 = vand.u32 %v2194, 4294901760
        %2196 = vmatpush1.msra.mxu0 %v2195
        %v2197 = vand.u32 %v1981, 4294901760
        %v2198 = vsub.f32 %v1981, %v2197
        %v2199 = vand.u32 %v2198, 4294901760
        %v2200 = vsub.f32 %v2198, %v2199
        %v2201 = vand.u32 %v2200, 4294901760
        %2202 = vmatprep.subr.mxu0 %v2201
        %v2203 = vand.u32 %v1980, 4294901760
        %v2204 = vsub.f32 %v1980, %v2203
        %v2205 = vand.u32 %v2204, 4294901760
        %v2206 = vsub.f32 %v2204, %v2205
        %v2207 = vand.u32 %v2206, 4294901760
        %2208 = vmatpush1.msra.mxu0 %v2207
        %v2209 = vand.u32 %v1979, 4294901760
        %v2210 = vsub.f32 %v1979, %v2209
        %v2211 = vand.u32 %v2210, 4294901760
        %v2212 = vsub.f32 %v2210, %v2211
        %v2213 = vand.u32 %v2212, 4294901760
        %2214 = vmatprep.subr.mxu0 %v2213
        %v2215 = vand.u32 %v1978, 4294901760
        %v2216 = vsub.f32 %v1978, %v2215
        %v2217 = vand.u32 %v2216, 4294901760
        %v2218 = vsub.f32 %v2216, %v2217
        %v2219 = vand.u32 %v2218, 4294901760
        %2220 = vmatpush1.msra.mxu0 %v2219
        %2221 = vmatprep.subr.mxu0 0.0
        %2222 = vmatpush2.msra.mxu0 0.0
        %2223 = vmatprep.subr.mxu0 0.0
        %2224 = vmatpush2.msra.mxu0 0.0
        %2225 = vmatprep.subr.mxu0 0.0
        %2226 = vmatpush2.msra.mxu0 0.0
        %2227 = vmatprep.subr.mxu0 0.0
        %2228 = vmatpush2.msra.mxu0 0.0
        %2229 = vmatprep.subr.mxu0 0.0
        %2230 = vmatpush2.msra.mxu0 0.0
        %2231 = vmatprep.subr.mxu0 0.0
        %2232 = vmatpush2.msra.mxu0 0.0
        %2233 = vmatprep.subr.mxu0 0.0
        %2234 = vmatpush2.msra.mxu0 0.0
        %2235 = vmatprep.subr.mxu0 0.0
        %2236 = vmatpush2.msra.mxu0 0.0
        %2237 = vmatprep.subr.mxu0 0.0
        %2238 = vmatpush2.msra.mxu0 0.0
        %2239 = vmatprep.subr.mxu0 0.0
        %2240 = vmatpush2.msra.mxu0 0.0
        %2241 = vmatprep.subr.mxu0 0.0
        %2242 = vmatpush2.msra.mxu0 0.0
        %2243 = vmatprep.subr.mxu0 0.0
        %2244 = vmatpush2.msra.mxu0 0.0
        %2245 = vmatprep.subr.mxu0 0.0
        %2246 = vmatpush2.msra.mxu0 0.0
        %2247 = vmatprep.subr.mxu0 0.0
        %2248 = vmatpush2.msra.mxu0 0.0
        %2249 = vmatprep.subr.mxu0 0.0
        %2250 = vmatpush2.msra.mxu0 0.0
        %2251 = vmatprep.subr.mxu0 0.0
        %2252 = vmatpush2.msra.mxu0 0.0
        %2253 = vmatprep.mubr.f32.mxu0 0.0
        %v2254 = vand.u32 %v2003, 4294901760
        %2255 = vmatmul.mubr.f32.gmra.mxu0 %v2254
        %v2256 = vpop.f32.mrf.mxu0
        %v2257 = vadd.f32 %v2095, %v2256
        %v2258 = vpop.f32.mrf.mxu0
        %v2259 = vadd.f32 %v2097, %v2258
        %2260 = vdwg.mxu0
        %2261 = vmatprep.subr.mxu0 0.0
        %2262 = vmatpush1.msra.mxu0 0.0
        %2263 = vmatprep.subr.mxu0 0.0
        %2264 = vmatpush1.msra.mxu0 0.0
        %2265 = vmatprep.subr.mxu0 0.0
        %2266 = vmatpush1.msra.mxu0 0.0
        %2267 = vmatprep.subr.mxu0 0.0
        %2268 = vmatpush1.msra.mxu0 0.0
        %2269 = vmatprep.subr.mxu0 0.0
        %2270 = vmatpush1.msra.mxu0 0.0
        %2271 = vmatprep.subr.mxu0 0.0
        %2272 = vmatpush1.msra.mxu0 0.0
        %2273 = vmatprep.subr.mxu0 0.0
        %2274 = vmatpush1.msra.mxu0 0.0
        %v2275 = vand.u32 %v1995, 4294901760
        %v2276 = vsub.f32 %v1995, %v2275
        %2277 = vmatprep.subr.mxu0 %v2276
        %v2278 = vand.u32 %v1994, 4294901760
        %v2279 = vsub.f32 %v1994, %v2278
        %2280 = vmatpush1.msra.mxu0 %v2279
        %v2281 = vand.u32 %v1993, 4294901760
        %v2282 = vsub.f32 %v1993, %v2281
        %2283 = vmatprep.subr.mxu0 %v2282
        %v2284 = vand.u32 %v1992, 4294901760
        %v2285 = vsub.f32 %v1992, %v2284
        %2286 = vmatpush1.msra.mxu0 %v2285
        %v2287 = vand.u32 %v1991, 4294901760
        %v2288 = vsub.f32 %v1991, %v2287
        %2289 = vmatprep.subr.mxu0 %v2288
        %v2290 = vand.u32 %v1990, 4294901760
        %v2291 = vsub.f32 %v1990, %v2290
        %2292 = vmatpush1.msra.mxu0 %v2291
        %v2293 = vand.u32 %v1989, 4294901760
        %v2294 = vsub.f32 %v1989, %v2293
        %2295 = vmatprep.subr.mxu0 %v2294
        %v2296 = vand.u32 %v1988, 4294901760
        %v2297 = vsub.f32 %v1988, %v2296
        %2298 = vmatpush1.msra.mxu0 %v2297
        %v2299 = vand.u32 %v1987, 4294901760
        %v2300 = vsub.f32 %v1987, %v2299
        %2301 = vmatprep.subr.mxu0 %v2300
        %v2302 = vand.u32 %v1986, 4294901760
        %v2303 = vsub.f32 %v1986, %v2302
        %2304 = vmatpush1.msra.mxu0 %v2303
        %v2305 = vand.u32 %v1985, 4294901760
        %v2306 = vsub.f32 %v1985, %v2305
        %2307 = vmatprep.subr.mxu0 %v2306
        %v2308 = vand.u32 %v1984, 4294901760
        %v2309 = vsub.f32 %v1984, %v2308
        %2310 = vmatpush1.msra.mxu0 %v2309
        %v2311 = vand.u32 %v1983, 4294901760
        %v2312 = vsub.f32 %v1983, %v2311
        %2313 = vmatprep.subr.mxu0 %v2312
        %v2314 = vand.u32 %v1982, 4294901760
        %v2315 = vsub.f32 %v1982, %v2314
        %2316 = vmatpush1.msra.mxu0 %v2315
        %v2317 = vand.u32 %v1981, 4294901760
        %v2318 = vsub.f32 %v1981, %v2317
        %2319 = vmatprep.subr.mxu0 %v2318
        %v2320 = vand.u32 %v1980, 4294901760
        %v2321 = vsub.f32 %v1980, %v2320
        %2322 = vmatpush1.msra.mxu0 %v2321
        %v2323 = vand.u32 %v1979, 4294901760
        %v2324 = vsub.f32 %v1979, %v2323
        %2325 = vmatprep.subr.mxu0 %v2324
        %v2326 = vand.u32 %v1978, 4294901760
        %v2327 = vsub.f32 %v1978, %v2326
        %2328 = vmatpush1.msra.mxu0 %v2327
        %2329 = vmatprep.subr.mxu0 0.0
        %2330 = vmatpush2.msra.mxu0 0.0
        %2331 = vmatprep.subr.mxu0 0.0
        %2332 = vmatpush2.msra.mxu0 0.0
        %2333 = vmatprep.subr.mxu0 0.0
        %2334 = vmatpush2.msra.mxu0 0.0
        %2335 = vmatprep.subr.mxu0 0.0
        %2336 = vmatpush2.msra.mxu0 0.0
        %2337 = vmatprep.subr.mxu0 0.0
        %2338 = vmatpush2.msra.mxu0 0.0
        %2339 = vmatprep.subr.mxu0 0.0
        %2340 = vmatpush2.msra.mxu0 0.0
        %2341 = vmatprep.subr.mxu0 0.0
        %2342 = vmatpush2.msra.mxu0 0.0
        %2343 = vmatprep.subr.mxu0 0.0
        %2344 = vmatpush2.msra.mxu0 0.0
        %2345 = vmatprep.subr.mxu0 0.0
        %2346 = vmatpush2.msra.mxu0 0.0
        %2347 = vmatprep.subr.mxu0 0.0
        %2348 = vmatpush2.msra.mxu0 0.0
        %2349 = vmatprep.subr.mxu0 0.0
        %2350 = vmatpush2.msra.mxu0 0.0
        %2351 = vmatprep.subr.mxu0 0.0
        %2352 = vmatpush2.msra.mxu0 0.0
        %2353 = vmatprep.subr.mxu0 0.0
        %2354 = vmatpush2.msra.mxu0 0.0
        %2355 = vmatprep.subr.mxu0 0.0
        %2356 = vmatpush2.msra.mxu0 0.0
        %2357 = vmatprep.subr.mxu0 0.0
        %2358 = vmatpush2.msra.mxu0 0.0
        %2359 = vmatprep.subr.mxu0 0.0
        %2360 = vmatpush2.msra.mxu0 0.0
        %2361 = vmatprep.mubr.f32.mxu0 0.0
        %v2362 = vand.u32 %v2003, 4294901760
        %v2363 = vsub.f32 %v2003, %v2362
        %2364 = vmatmul.mubr.f32.gmra.mxu0 %v2363
        %v2365 = vpop.f32.mrf.mxu0
        %v2366 = vadd.f32 %v2257, %v2365
        %v2367 = vpop.f32.mrf.mxu0
        %v2368 = vadd.f32 %v2259, %v2367
        %2369 = vdwg.mxu0
        %2370 = vmatprep.subr.mxu0 0.0
        %2371 = vmatpush1.msra.mxu0 0.0
        %2372 = vmatprep.subr.mxu0 0.0
        %2373 = vmatpush1.msra.mxu0 0.0
        %2374 = vmatprep.subr.mxu0 0.0
        %2375 = vmatpush1.msra.mxu0 0.0
        %2376 = vmatprep.subr.mxu0 0.0
        %2377 = vmatpush1.msra.mxu0 0.0
        %2378 = vmatprep.subr.mxu0 0.0
        %2379 = vmatpush1.msra.mxu0 0.0
        %2380 = vmatprep.subr.mxu0 0.0
        %2381 = vmatpush1.msra.mxu0 0.0
        %2382 = vmatprep.subr.mxu0 0.0
        %2383 = vmatpush1.msra.mxu0 0.0
        %v2384 = vand.u32 %v1995, 4294901760
        %2385 = vmatprep.subr.mxu0 %v2384
        %v2386 = vand.u32 %v1994, 4294901760
        %2387 = vmatpush1.msra.mxu0 %v2386
        %v2388 = vand.u32 %v1993, 4294901760
        %2389 = vmatprep.subr.mxu0 %v2388
        %v2390 = vand.u32 %v1992, 4294901760
        %2391 = vmatpush1.msra.mxu0 %v2390
        %v2392 = vand.u32 %v1991, 4294901760
        %2393 = vmatprep.subr.mxu0 %v2392
        %v2394 = vand.u32 %v1990, 4294901760
        %2395 = vmatpush1.msra.mxu0 %v2394
        %v2396 = vand.u32 %v1989, 4294901760
        %2397 = vmatprep.subr.mxu0 %v2396
        %v2398 = vand.u32 %v1988, 4294901760
        %2399 = vmatpush1.msra.mxu0 %v2398
        %v2400 = vand.u32 %v1987, 4294901760
        %2401 = vmatprep.subr.mxu0 %v2400
        %v2402 = vand.u32 %v1986, 4294901760
        %2403 = vmatpush1.msra.mxu0 %v2402
        %v2404 = vand.u32 %v1985, 4294901760
        %2405 = vmatprep.subr.mxu0 %v2404
        %v2406 = vand.u32 %v1984, 4294901760
        %2407 = vmatpush1.msra.mxu0 %v2406
        %v2408 = vand.u32 %v1983, 4294901760
        %2409 = vmatprep.subr.mxu0 %v2408
        %v2410 = vand.u32 %v1982, 4294901760
        %2411 = vmatpush1.msra.mxu0 %v2410
        %v2412 = vand.u32 %v1981, 4294901760
        %2413 = vmatprep.subr.mxu0 %v2412
        %v2414 = vand.u32 %v1980, 4294901760
        %2415 = vmatpush1.msra.mxu0 %v2414
        %v2416 = vand.u32 %v1979, 4294901760
        %2417 = vmatprep.subr.mxu0 %v2416
        %v2418 = vand.u32 %v1978, 4294901760
        %2419 = vmatpush1.msra.mxu0 %v2418
        %2420 = vmatprep.subr.mxu0 0.0
        %2421 = vmatpush2.msra.mxu0 0.0
        %2422 = vmatprep.subr.mxu0 0.0
        %2423 = vmatpush2.msra.mxu0 0.0
        %2424 = vmatprep.subr.mxu0 0.0
        %2425 = vmatpush2.msra.mxu0 0.0
        %2426 = vmatprep.subr.mxu0 0.0
        %2427 = vmatpush2.msra.mxu0 0.0
        %2428 = vmatprep.subr.mxu0 0.0
        %2429 = vmatpush2.msra.mxu0 0.0
        %2430 = vmatprep.subr.mxu0 0.0
        %2431 = vmatpush2.msra.mxu0 0.0
        %2432 = vmatprep.subr.mxu0 0.0
        %2433 = vmatpush2.msra.mxu0 0.0
        %2434 = vmatprep.subr.mxu0 0.0
        %2435 = vmatpush2.msra.mxu0 0.0
        %2436 = vmatprep.subr.mxu0 0.0
        %2437 = vmatpush2.msra.mxu0 0.0
        %2438 = vmatprep.subr.mxu0 0.0
        %2439 = vmatpush2.msra.mxu0 0.0
        %2440 = vmatprep.subr.mxu0 0.0
        %2441 = vmatpush2.msra.mxu0 0.0
        %2442 = vmatprep.subr.mxu0 0.0
        %2443 = vmatpush2.msra.mxu0 0.0
        %2444 = vmatprep.subr.mxu0 0.0
        %2445 = vmatpush2.msra.mxu0 0.0
        %2446 = vmatprep.subr.mxu0 0.0
        %2447 = vmatpush2.msra.mxu0 0.0
        %2448 = vmatprep.subr.mxu0 0.0
        %2449 = vmatpush2.msra.mxu0 0.0
        %2450 = vmatprep.subr.mxu0 0.0
        %2451 = vmatpush2.msra.mxu0 0.0
        %2452 = vmatprep.mubr.f32.mxu0 0.0
        %v2453 = vand.u32 %v2003, 4294901760
        %v2454 = vsub.f32 %v2003, %v2453
        %v2455 = vand.u32 %v2454, 4294901760
        %2456 = vmatmul.mubr.f32.gmra.mxu0 %v2455
        %v2457 = vpop.f32.mrf.mxu0
        %v2458 = vadd.f32 %v2366, %v2457
        %v2459 = vpop.f32.mrf.mxu0
        %v2460 = vadd.f32 %v2368, %v2459
        %2461 = vdwg.mxu0
        %2462 = vmatprep.subr.mxu0 0.0
        %2463 = vmatpush1.msra.mxu0 0.0
        %2464 = vmatprep.subr.mxu0 0.0
        %2465 = vmatpush1.msra.mxu0 0.0
        %2466 = vmatprep.subr.mxu0 0.0
        %2467 = vmatpush1.msra.mxu0 0.0
        %2468 = vmatprep.subr.mxu0 0.0
        %2469 = vmatpush1.msra.mxu0 0.0
        %2470 = vmatprep.subr.mxu0 0.0
        %2471 = vmatpush1.msra.mxu0 0.0
        %2472 = vmatprep.subr.mxu0 0.0
        %2473 = vmatpush1.msra.mxu0 0.0
        %2474 = vmatprep.subr.mxu0 0.0
        %2475 = vmatpush1.msra.mxu0 0.0
        %v2476 = vand.u32 %v1995, 4294901760
        %v2477 = vsub.f32 %v1995, %v2476
        %v2478 = vand.u32 %v2477, 4294901760
        %2479 = vmatprep.subr.mxu0 %v2478
        %v2480 = vand.u32 %v1994, 4294901760
        %v2481 = vsub.f32 %v1994, %v2480
        %v2482 = vand.u32 %v2481, 4294901760
        %2483 = vmatpush1.msra.mxu0 %v2482
        %v2484 = vand.u32 %v1993, 4294901760
        %v2485 = vsub.f32 %v1993, %v2484
        %v2486 = vand.u32 %v2485, 4294901760
        %2487 = vmatprep.subr.mxu0 %v2486
        %v2488 = vand.u32 %v1992, 4294901760
        %v2489 = vsub.f32 %v1992, %v2488
        %v2490 = vand.u32 %v2489, 4294901760
        %2491 = vmatpush1.msra.mxu0 %v2490
        %v2492 = vand.u32 %v1991, 4294901760
        %v2493 = vsub.f32 %v1991, %v2492
        %v2494 = vand.u32 %v2493, 4294901760
        %2495 = vmatprep.subr.mxu0 %v2494
        %v2496 = vand.u32 %v1990, 4294901760
        %v2497 = vsub.f32 %v1990, %v2496
        %v2498 = vand.u32 %v2497, 4294901760
        %2499 = vmatpush1.msra.mxu0 %v2498
        %v2500 = vand.u32 %v1989, 4294901760
        %v2501 = vsub.f32 %v1989, %v2500
        %v2502 = vand.u32 %v2501, 4294901760
        %2503 = vmatprep.subr.mxu0 %v2502
        %v2504 = vand.u32 %v1988, 4294901760
        %v2505 = vsub.f32 %v1988, %v2504
        %v2506 = vand.u32 %v2505, 4294901760
        %2507 = vmatpush1.msra.mxu0 %v2506
        %v2508 = vand.u32 %v1987, 4294901760
        %v2509 = vsub.f32 %v1987, %v2508
        %v2510 = vand.u32 %v2509, 4294901760
        %2511 = vmatprep.subr.mxu0 %v2510
        %v2512 = vand.u32 %v1986, 4294901760
        %v2513 = vsub.f32 %v1986, %v2512
        %v2514 = vand.u32 %v2513, 4294901760
        %2515 = vmatpush1.msra.mxu0 %v2514
        %v2516 = vand.u32 %v1985, 4294901760
        %v2517 = vsub.f32 %v1985, %v2516
        %v2518 = vand.u32 %v2517, 4294901760
        %2519 = vmatprep.subr.mxu0 %v2518
        %v2520 = vand.u32 %v1984, 4294901760
        %v2521 = vsub.f32 %v1984, %v2520
        %v2522 = vand.u32 %v2521, 4294901760
        %2523 = vmatpush1.msra.mxu0 %v2522
        %v2524 = vand.u32 %v1983, 4294901760
        %v2525 = vsub.f32 %v1983, %v2524
        %v2526 = vand.u32 %v2525, 4294901760
        %2527 = vmatprep.subr.mxu0 %v2526
        %v2528 = vand.u32 %v1982, 4294901760
        %v2529 = vsub.f32 %v1982, %v2528
        %v2530 = vand.u32 %v2529, 4294901760
        %2531 = vmatpush1.msra.mxu0 %v2530
        %v2532 = vand.u32 %v1981, 4294901760
        %v2533 = vsub.f32 %v1981, %v2532
        %v2534 = vand.u32 %v2533, 4294901760
        %2535 = vmatprep.subr.mxu0 %v2534
        %v2536 = vand.u32 %v1980, 4294901760
        %v2537 = vsub.f32 %v1980, %v2536
        %v2538 = vand.u32 %v2537, 4294901760
        %2539 = vmatpush1.msra.mxu0 %v2538
        %v2540 = vand.u32 %v1979, 4294901760
        %v2541 = vsub.f32 %v1979, %v2540
        %v2542 = vand.u32 %v2541, 4294901760
        %2543 = vmatprep.subr.mxu0 %v2542
        %v2544 = vand.u32 %v1978, 4294901760
        %v2545 = vsub.f32 %v1978, %v2544
        %v2546 = vand.u32 %v2545, 4294901760
        %2547 = vmatpush1.msra.mxu0 %v2546
        %2548 = vmatprep.subr.mxu0 0.0
        %2549 = vmatpush2.msra.mxu0 0.0
        %2550 = vmatprep.subr.mxu0 0.0
        %2551 = vmatpush2.msra.mxu0 0.0
        %2552 = vmatprep.subr.mxu0 0.0
        %2553 = vmatpush2.msra.mxu0 0.0
        %2554 = vmatprep.subr.mxu0 0.0
        %2555 = vmatpush2.msra.mxu0 0.0
        %2556 = vmatprep.subr.mxu0 0.0
        %2557 = vmatpush2.msra.mxu0 0.0
        %2558 = vmatprep.subr.mxu0 0.0
        %2559 = vmatpush2.msra.mxu0 0.0
        %2560 = vmatprep.subr.mxu0 0.0
        %2561 = vmatpush2.msra.mxu0 0.0
        %2562 = vmatprep.subr.mxu0 0.0
        %2563 = vmatpush2.msra.mxu0 0.0
        %2564 = vmatprep.subr.mxu0 0.0
        %2565 = vmatpush2.msra.mxu0 0.0
        %2566 = vmatprep.subr.mxu0 0.0
        %2567 = vmatpush2.msra.mxu0 0.0
        %2568 = vmatprep.subr.mxu0 0.0
        %2569 = vmatpush2.msra.mxu0 0.0
        %2570 = vmatprep.subr.mxu0 0.0
        %2571 = vmatpush2.msra.mxu0 0.0
        %2572 = vmatprep.subr.mxu0 0.0
        %2573 = vmatpush2.msra.mxu0 0.0
        %2574 = vmatprep.subr.mxu0 0.0
        %2575 = vmatpush2.msra.mxu0 0.0
        %2576 = vmatprep.subr.mxu0 0.0
        %2577 = vmatpush2.msra.mxu0 0.0
        %2578 = vmatprep.subr.mxu0 0.0
        %2579 = vmatpush2.msra.mxu0 0.0
        %2580 = vmatprep.mubr.f32.mxu0 0.0
        %v2581 = vand.u32 %v2003, 4294901760
        %2582 = vmatmul.mubr.f32.gmra.mxu0 %v2581
        %v2583 = vpop.f32.mrf.mxu0
        %v2584 = vadd.f32 %v2458, %v2583
        %v2585 = vpop.f32.mrf.mxu0
        %v2586 = vadd.f32 %v2460, %v2585
        %2587 = vdwg.mxu0
        %2588 = vmatprep.subr.mxu0 0.0
        %2589 = vmatpush1.msra.mxu0 0.0
        %2590 = vmatprep.subr.mxu0 0.0
        %2591 = vmatpush1.msra.mxu0 0.0
        %2592 = vmatprep.subr.mxu0 0.0
        %2593 = vmatpush1.msra.mxu0 0.0
        %2594 = vmatprep.subr.mxu0 0.0
        %2595 = vmatpush1.msra.mxu0 0.0
        %2596 = vmatprep.subr.mxu0 0.0
        %2597 = vmatpush1.msra.mxu0 0.0
        %2598 = vmatprep.subr.mxu0 0.0
        %2599 = vmatpush1.msra.mxu0 0.0
        %2600 = vmatprep.subr.mxu0 0.0
        %2601 = vmatpush1.msra.mxu0 0.0
        %v2602 = vand.u32 %v1995, 4294901760
        %2603 = vmatprep.subr.mxu0 %v2602
        %v2604 = vand.u32 %v1994, 4294901760
        %2605 = vmatpush1.msra.mxu0 %v2604
        %v2606 = vand.u32 %v1993, 4294901760
        %2607 = vmatprep.subr.mxu0 %v2606
        %v2608 = vand.u32 %v1992, 4294901760
        %2609 = vmatpush1.msra.mxu0 %v2608
        %v2610 = vand.u32 %v1991, 4294901760
        %2611 = vmatprep.subr.mxu0 %v2610
        %v2612 = vand.u32 %v1990, 4294901760
        %2613 = vmatpush1.msra.mxu0 %v2612
        %v2614 = vand.u32 %v1989, 4294901760
        %2615 = vmatprep.subr.mxu0 %v2614
        %v2616 = vand.u32 %v1988, 4294901760
        %2617 = vmatpush1.msra.mxu0 %v2616
        %v2618 = vand.u32 %v1987, 4294901760
        %2619 = vmatprep.subr.mxu0 %v2618
        %v2620 = vand.u32 %v1986, 4294901760
        %2621 = vmatpush1.msra.mxu0 %v2620
        %v2622 = vand.u32 %v1985, 4294901760
        %2623 = vmatprep.subr.mxu0 %v2622
        %v2624 = vand.u32 %v1984, 4294901760
        %2625 = vmatpush1.msra.mxu0 %v2624
        %v2626 = vand.u32 %v1983, 4294901760
        %2627 = vmatprep.subr.mxu0 %v2626
        %v2628 = vand.u32 %v1982, 4294901760
        %2629 = vmatpush1.msra.mxu0 %v2628
        %v2630 = vand.u32 %v1981, 4294901760
        %2631 = vmatprep.subr.mxu0 %v2630
        %v2632 = vand.u32 %v1980, 4294901760
        %2633 = vmatpush1.msra.mxu0 %v2632
        %v2634 = vand.u32 %v1979, 4294901760
        %2635 = vmatprep.subr.mxu0 %v2634
        %v2636 = vand.u32 %v1978, 4294901760
        %2637 = vmatpush1.msra.mxu0 %v2636
        %2638 = vmatprep.subr.mxu0 0.0
        %2639 = vmatpush2.msra.mxu0 0.0
        %2640 = vmatprep.subr.mxu0 0.0
        %2641 = vmatpush2.msra.mxu0 0.0
        %2642 = vmatprep.subr.mxu0 0.0
        %2643 = vmatpush2.msra.mxu0 0.0
        %2644 = vmatprep.subr.mxu0 0.0
        %2645 = vmatpush2.msra.mxu0 0.0
        %2646 = vmatprep.subr.mxu0 0.0
        %2647 = vmatpush2.msra.mxu0 0.0
        %2648 = vmatprep.subr.mxu0 0.0
        %2649 = vmatpush2.msra.mxu0 0.0
        %2650 = vmatprep.subr.mxu0 0.0
        %2651 = vmatpush2.msra.mxu0 0.0
        %2652 = vmatprep.subr.mxu0 0.0
        %2653 = vmatpush2.msra.mxu0 0.0
        %2654 = vmatprep.subr.mxu0 0.0
        %2655 = vmatpush2.msra.mxu0 0.0
        %2656 = vmatprep.subr.mxu0 0.0
        %2657 = vmatpush2.msra.mxu0 0.0
        %2658 = vmatprep.subr.mxu0 0.0
        %2659 = vmatpush2.msra.mxu0 0.0
        %2660 = vmatprep.subr.mxu0 0.0
        %2661 = vmatpush2.msra.mxu0 0.0
        %2662 = vmatprep.subr.mxu0 0.0
        %2663 = vmatpush2.msra.mxu0 0.0
        %2664 = vmatprep.subr.mxu0 0.0
        %2665 = vmatpush2.msra.mxu0 0.0
        %2666 = vmatprep.subr.mxu0 0.0
        %2667 = vmatpush2.msra.mxu0 0.0
        %2668 = vmatprep.subr.mxu0 0.0
        %2669 = vmatpush2.msra.mxu0 0.0
        %2670 = vmatprep.mubr.f32.mxu0 0.0
        %v2671 = vand.u32 %v2003, 4294901760
        %2672 = vmatmul.mubr.f32.gmra.mxu0 %v2671
        %v2673 = vpop.f32.mrf.mxu0
        %v2674 = vadd.f32 %v2584, %v2673
        %v2675 = vpop.f32.mrf.mxu0
        %v2676 = vadd.f32 %v2586, %v2675
        %2677 = vdwg.mxu0
        %v2678 = vsub.f32 0.0, %v2674
        %v2679 = vsub.f32 0.0, %v2676
        %v2680 = vmul.f32 %v2678, 1.442695
        %v2681 = vpow.pop %v2680
        %v2682 = vmul.f32 %v2679, 1.442695
        %v2683 = vpow.pop %v2682
        %v2684 = vadd.f32 %v2681, 1.0
        %v2685 = vadd.f32 %v2683, 1.0
        %v2686 = vrcp.pop %v2684
        %v2687 = vmul.f32 1.0, %v2686
        %v2688 = vrcp.pop %v2685
        %v2689 = vmul.f32 1.0, %v2688
        %v2690 = vmul.f32 %v2674, %v2687
        %v2691 = vmul.f32 %v2676, %v2689
        %2692 = vst [vmem:[#allocation3] sm:$0xff] %v925
        %2693 = vst [vmem:[#allocation3 + $0x8] sm:$0xff] %v926
        %2694 = vst [vmem:[#allocation3 + $0x10] sm:$0xff] %v927
        %2695 = vst [vmem:[#allocation3 + $0x18] sm:$0xff] %v928
        %2696 = vst [vmem:[#allocation3 + $0x20] sm:$0xff] %v2690
        %2697 = vst [vmem:[#allocation3 + $0x28] sm:$0xff] %v2691
        %v2698 = vld [vmem:[%s7] sm:$0xff]
        %v2699 = vld [vmem:[#allocation3] sm:$0xff]
        %v2700 = vld [vmem:[#allocation3 + $0x8] sm:$0xff]
        %v2701 = vld [vmem:[#allocation3 + $0x10] sm:$0xff]
        %v2702 = vld [vmem:[#allocation3 + $0x18] sm:$0xff]
        %v2703 = vld [vmem:[#allocation3 + $0x20] sm:$0xff]
        %v2704 = vld [vmem:[#allocation3 + $0x28] sm:$0xff]
        %v2705 = vld [vmem:[%s8] sm:$0xff]
        %2707 = vset.pattern.permute.xlu0 0
        %2708 = vperm.xlu0 %2707, %v2705
        %v2709 = vpop.permute.xlu0 %2708
        %vm2711 = vcmask 195584
        %v2713 = vsel %vm2711, %v2698, 0
        %2715 = vmatprep.subr.mxu0 0.0
        %2716 = vmatpush1.msra.mxu0 0.0
        %2717 = vmatprep.subr.mxu0 0.0
        %2718 = vmatpush1.msra.mxu0 0.0
        %2719 = vmatprep.subr.mxu0 0.0
        %2720 = vmatpush1.msra.mxu0 0.0
        %2721 = vmatprep.subr.mxu0 0.0
        %2722 = vmatpush1.msra.mxu0 0.0
        %2723 = vmatprep.subr.mxu0 0.0
        %2724 = vmatpush1.msra.mxu0 0.0
        %2725 = vmatprep.subr.mxu0 0.0
        %2726 = vmatpush1.msra.mxu0 0.0
        %2727 = vmatprep.subr.mxu0 0.0
        %2728 = vmatpush1.msra.mxu0 0.0
        %2729 = vmatprep.subr.mxu0 0.0
        %2730 = vmatpush1.msra.mxu0 0.0
        %2731 = vmatprep.subr.mxu0 0.0
        %2732 = vmatpush1.msra.mxu0 0.0
        %2733 = vmatprep.subr.mxu0 0.0
        %2734 = vmatpush1.msra.mxu0 0.0
        %2735 = vmatprep.subr.mxu0 0.0
        %2736 = vmatpush1.msra.mxu0 0.0
        %2737 = vmatprep.subr.mxu0 0.0
        %2738 = vmatpush1.msra.mxu0 0.0
        %2739 = vmatprep.subr.mxu0 0.0
        %2740 = vmatpush1.msra.mxu0 0.0
        %v2741 = vand.u32 %v2704, 4294901760
        %2742 = vmatprep.subr.mxu0 %v2741
        %v2743 = vand.u32 %v2703, 4294901760
        %2744 = vmatpush1.msra.mxu0 %v2743
        %v2745 = vand.u32 %v2702, 4294901760
        %2746 = vmatprep.subr.mxu0 %v2745
        %v2747 = vand.u32 %v2701, 4294901760
        %2748 = vmatpush1.msra.mxu0 %v2747
        %v2749 = vand.u32 %v2700, 4294901760
        %2750 = vmatprep.subr.mxu0 %v2749
        %v2751 = vand.u32 %v2699, 4294901760
        %2752 = vmatpush1.msra.mxu0 %v2751
        %2753 = vmatprep.subr.mxu0 0.0
        %2754 = vmatpush2.msra.mxu0 0.0
        %2755 = vmatprep.subr.mxu0 0.0
        %2756 = vmatpush2.msra.mxu0 0.0
        %2757 = vmatprep.subr.mxu0 0.0
        %2758 = vmatpush2.msra.mxu0 0.0
        %2759 = vmatprep.subr.mxu0 0.0
        %2760 = vmatpush2.msra.mxu0 0.0
        %2761 = vmatprep.subr.mxu0 0.0
        %2762 = vmatpush2.msra.mxu0 0.0
        %2763 = vmatprep.subr.mxu0 0.0
        %2764 = vmatpush2.msra.mxu0 0.0
        %2765 = vmatprep.subr.mxu0 0.0
        %2766 = vmatpush2.msra.mxu0 0.0
        %2767 = vmatprep.subr.mxu0 0.0
        %2768 = vmatpush2.msra.mxu0 0.0
        %2769 = vmatprep.subr.mxu0 0.0
        %2770 = vmatpush2.msra.mxu0 0.0
        %2771 = vmatprep.subr.mxu0 0.0
        %2772 = vmatpush2.msra.mxu0 0.0
        %2773 = vmatprep.subr.mxu0 0.0
        %2774 = vmatpush2.msra.mxu0 0.0
        %2775 = vmatprep.subr.mxu0 0.0
        %2776 = vmatpush2.msra.mxu0 0.0
        %2777 = vmatprep.subr.mxu0 0.0
        %2778 = vmatpush2.msra.mxu0 0.0
        %2779 = vmatprep.subr.mxu0 0.0
        %2780 = vmatpush2.msra.mxu0 0.0
        %2781 = vmatprep.subr.mxu0 0.0
        %2782 = vmatpush2.msra.mxu0 0.0
        %2783 = vmatprep.subr.mxu0 0.0
        %2784 = vmatpush2.msra.mxu0 0.0
        %2785 = vmatprep.mubr.f32.mxu0 0.0
        %v2786 = vand.u32 %v2713, 4294901760
        %v2787 = vsub.f32 %v2713, %v2786
        %v2788 = vand.u32 %v2787, 4294901760
        %v2789 = vsub.f32 %v2787, %v2788
        %v2790 = vand.u32 %v2789, 4294901760
        %2791 = vmatmul.mubr.f32.gmra.mxu0 %v2790
        %v2792 = vpop.f32.mrf.mxu0
        %v2793 = vadd.f32 %v2709, %v2792
        %v2794 = vpop.f32.mrf.mxu0
        %v2795 = vadd.f32 %v2709, %v2794
        %2796 = vdwg.mxu0
        %2797 = vmatprep.subr.mxu0 0.0
        %2798 = vmatpush1.msra.mxu0 0.0
        %2799 = vmatprep.subr.mxu0 0.0
        %2800 = vmatpush1.msra.mxu0 0.0
        %2801 = vmatprep.subr.mxu0 0.0
        %2802 = vmatpush1.msra.mxu0 0.0
        %2803 = vmatprep.subr.mxu0 0.0
        %2804 = vmatpush1.msra.mxu0 0.0
        %2805 = vmatprep.subr.mxu0 0.0
        %2806 = vmatpush1.msra.mxu0 0.0
        %2807 = vmatprep.subr.mxu0 0.0
        %2808 = vmatpush1.msra.mxu0 0.0
        %2809 = vmatprep.subr.mxu0 0.0
        %2810 = vmatpush1.msra.mxu0 0.0
        %2811 = vmatprep.subr.mxu0 0.0
        %2812 = vmatpush1.msra.mxu0 0.0
        %2813 = vmatprep.subr.mxu0 0.0
        %2814 = vmatpush1.msra.mxu0 0.0
        %2815 = vmatprep.subr.mxu0 0.0
        %2816 = vmatpush1.msra.mxu0 0.0
        %2817 = vmatprep.subr.mxu0 0.0
        %2818 = vmatpush1.msra.mxu0 0.0
        %2819 = vmatprep.subr.mxu0 0.0
        %2820 = vmatpush1.msra.mxu0 0.0
        %2821 = vmatprep.subr.mxu0 0.0
        %2822 = vmatpush1.msra.mxu0 0.0
        %v2823 = vand.u32 %v2704, 4294901760
        %v2824 = vsub.f32 %v2704, %v2823
        %v2825 = vand.u32 %v2824, 4294901760
        %v2826 = vsub.f32 %v2824, %v2825
        %v2827 = vand.u32 %v2826, 4294901760
        %2828 = vmatprep.subr.mxu0 %v2827
        %v2829 = vand.u32 %v2703, 4294901760
        %v2830 = vsub.f32 %v2703, %v2829
        %v2831 = vand.u32 %v2830, 4294901760
        %v2832 = vsub.f32 %v2830, %v2831
        %v2833 = vand.u32 %v2832, 4294901760
        %2834 = vmatpush1.msra.mxu0 %v2833
        %v2835 = vand.u32 %v2702, 4294901760
        %v2836 = vsub.f32 %v2702, %v2835
        %v2837 = vand.u32 %v2836, 4294901760
        %v2838 = vsub.f32 %v2836, %v2837
        %v2839 = vand.u32 %v2838, 4294901760
        %2840 = vmatprep.subr.mxu0 %v2839
        %v2841 = vand.u32 %v2701, 4294901760
        %v2842 = vsub.f32 %v2701, %v2841
        %v2843 = vand.u32 %v2842, 4294901760
        %v2844 = vsub.f32 %v2842, %v2843
        %v2845 = vand.u32 %v2844, 4294901760
        %2846 = vmatpush1.msra.mxu0 %v2845
        %v2847 = vand.u32 %v2700, 4294901760
        %v2848 = vsub.f32 %v2700, %v2847
        %v2849 = vand.u32 %v2848, 4294901760
        %v2850 = vsub.f32 %v2848, %v2849
        %v2851 = vand.u32 %v2850, 4294901760
        %2852 = vmatprep.subr.mxu0 %v2851
        %v2853 = vand.u32 %v2699, 4294901760
        %v2854 = vsub.f32 %v2699, %v2853
        %v2855 = vand.u32 %v2854, 4294901760
        %v2856 = vsub.f32 %v2854, %v2855
        %v2857 = vand.u32 %v2856, 4294901760
        %2858 = vmatpush1.msra.mxu0 %v2857
        %2859 = vmatprep.subr.mxu0 0.0
        %2860 = vmatpush2.msra.mxu0 0.0
        %2861 = vmatprep.subr.mxu0 0.0
        %2862 = vmatpush2.msra.mxu0 0.0
        %2863 = vmatprep.subr.mxu0 0.0
        %2864 = vmatpush2.msra.mxu0 0.0
        %2865 = vmatprep.subr.mxu0 0.0
        %2866 = vmatpush2.msra.mxu0 0.0
        %2867 = vmatprep.subr.mxu0 0.0
        %2868 = vmatpush2.msra.mxu0 0.0
        %2869 = vmatprep.subr.mxu0 0.0
        %2870 = vmatpush2.msra.mxu0 0.0
        %2871 = vmatprep.subr.mxu0 0.0
        %2872 = vmatpush2.msra.mxu0 0.0
        %2873 = vmatprep.subr.mxu0 0.0
        %2874 = vmatpush2.msra.mxu0 0.0
        %2875 = vmatprep.subr.mxu0 0.0
        %2876 = vmatpush2.msra.mxu0 0.0
        %2877 = vmatprep.subr.mxu0 0.0
        %2878 = vmatpush2.msra.mxu0 0.0
        %2879 = vmatprep.subr.mxu0 0.0
        %2880 = vmatpush2.msra.mxu0 0.0
        %2881 = vmatprep.subr.mxu0 0.0
        %2882 = vmatpush2.msra.mxu0 0.0
        %2883 = vmatprep.subr.mxu0 0.0
        %2884 = vmatpush2.msra.mxu0 0.0
        %2885 = vmatprep.subr.mxu0 0.0
        %2886 = vmatpush2.msra.mxu0 0.0
        %2887 = vmatprep.subr.mxu0 0.0
        %2888 = vmatpush2.msra.mxu0 0.0
        %2889 = vmatprep.subr.mxu0 0.0
        %2890 = vmatpush2.msra.mxu0 0.0
        %2891 = vmatprep.mubr.f32.mxu0 0.0
        %v2892 = vand.u32 %v2713, 4294901760
        %2893 = vmatmul.mubr.f32.gmra.mxu0 %v2892
        %v2894 = vpop.f32.mrf.mxu0
        %v2895 = vadd.f32 %v2793, %v2894
        %v2896 = vpop.f32.mrf.mxu0
        %v2897 = vadd.f32 %v2795, %v2896
        %2898 = vdwg.mxu0
        %2899 = vmatprep.subr.mxu0 0.0
        %2900 = vmatpush1.msra.mxu0 0.0
        %2901 = vmatprep.subr.mxu0 0.0
        %2902 = vmatpush1.msra.mxu0 0.0
        %2903 = vmatprep.subr.mxu0 0.0
        %2904 = vmatpush1.msra.mxu0 0.0
        %2905 = vmatprep.subr.mxu0 0.0
        %2906 = vmatpush1.msra.mxu0 0.0
        %2907 = vmatprep.subr.mxu0 0.0
        %2908 = vmatpush1.msra.mxu0 0.0
        %2909 = vmatprep.subr.mxu0 0.0
        %2910 = vmatpush1.msra.mxu0 0.0
        %2911 = vmatprep.subr.mxu0 0.0
        %2912 = vmatpush1.msra.mxu0 0.0
        %2913 = vmatprep.subr.mxu0 0.0
        %2914 = vmatpush1.msra.mxu0 0.0
        %2915 = vmatprep.subr.mxu0 0.0
        %2916 = vmatpush1.msra.mxu0 0.0
        %2917 = vmatprep.subr.mxu0 0.0
        %2918 = vmatpush1.msra.mxu0 0.0
        %2919 = vmatprep.subr.mxu0 0.0
        %2920 = vmatpush1.msra.mxu0 0.0
        %2921 = vmatprep.subr.mxu0 0.0
        %2922 = vmatpush1.msra.mxu0 0.0
        %2923 = vmatprep.subr.mxu0 0.0
        %2924 = vmatpush1.msra.mxu0 0.0
        %v2925 = vand.u32 %v2704, 4294901760
        %v2926 = vsub.f32 %v2704, %v2925
        %2927 = vmatprep.subr.mxu0 %v2926
        %v2928 = vand.u32 %v2703, 4294901760
        %v2929 = vsub.f32 %v2703, %v2928
        %2930 = vmatpush1.msra.mxu0 %v2929
        %v2931 = vand.u32 %v2702, 4294901760
        %v2932 = vsub.f32 %v2702, %v2931
        %2933 = vmatprep.subr.mxu0 %v2932
        %v2934 = vand.u32 %v2701, 4294901760
        %v2935 = vsub.f32 %v2701, %v2934
        %2936 = vmatpush1.msra.mxu0 %v2935
        %v2937 = vand.u32 %v2700, 4294901760
        %v2938 = vsub.f32 %v2700, %v2937
        %2939 = vmatprep.subr.mxu0 %v2938
        %v2940 = vand.u32 %v2699, 4294901760
        %v2941 = vsub.f32 %v2699, %v2940
        %2942 = vmatpush1.msra.mxu0 %v2941
        %2943 = vmatprep.subr.mxu0 0.0
        %2944 = vmatpush2.msra.mxu0 0.0
        %2945 = vmatprep.subr.mxu0 0.0
        %2946 = vmatpush2.msra.mxu0 0.0
        %2947 = vmatprep.subr.mxu0 0.0
        %2948 = vmatpush2.msra.mxu0 0.0
        %2949 = vmatprep.subr.mxu0 0.0
        %2950 = vmatpush2.msra.mxu0 0.0
        %2951 = vmatprep.subr.mxu0 0.0
        %2952 = vmatpush2.msra.mxu0 0.0
        %2953 = vmatprep.subr.mxu0 0.0
        %2954 = vmatpush2.msra.mxu0 0.0
        %2955 = vmatprep.subr.mxu0 0.0
        %2956 = vmatpush2.msra.mxu0 0.0
        %2957 = vmatprep.subr.mxu0 0.0
        %2958 = vmatpush2.msra.mxu0 0.0
        %2959 = vmatprep.subr.mxu0 0.0
        %2960 = vmatpush2.msra.mxu0 0.0
        %2961 = vmatprep.subr.mxu0 0.0
        %2962 = vmatpush2.msra.mxu0 0.0
        %2963 = vmatprep.subr.mxu0 0.0
        %2964 = vmatpush2.msra.mxu0 0.0
        %2965 = vmatprep.subr.mxu0 0.0
        %2966 = vmatpush2.msra.mxu0 0.0
        %2967 = vmatprep.subr.mxu0 0.0
        %2968 = vmatpush2.msra.mxu0 0.0
        %2969 = vmatprep.subr.mxu0 0.0
        %2970 = vmatpush2.msra.mxu0 0.0
        %2971 = vmatprep.subr.mxu0 0.0
        %2972 = vmatpush2.msra.mxu0 0.0
        %2973 = vmatprep.subr.mxu0 0.0
        %2974 = vmatpush2.msra.mxu0 0.0
        %2975 = vmatprep.mubr.f32.mxu0 0.0
        %v2976 = vand.u32 %v2713, 4294901760
        %v2977 = vsub.f32 %v2713, %v2976
        %2978 = vmatmul.mubr.f32.gmra.mxu0 %v2977
        %v2979 = vpop.f32.mrf.mxu0
        %v2980 = vadd.f32 %v2895, %v2979
        %v2981 = vpop.f32.mrf.mxu0
        %v2982 = vadd.f32 %v2897, %v2981
        %2983 = vdwg.mxu0
        %2984 = vmatprep.subr.mxu0 0.0
        %2985 = vmatpush1.msra.mxu0 0.0
        %2986 = vmatprep.subr.mxu0 0.0
        %2987 = vmatpush1.msra.mxu0 0.0
        %2988 = vmatprep.subr.mxu0 0.0
        %2989 = vmatpush1.msra.mxu0 0.0
        %2990 = vmatprep.subr.mxu0 0.0
        %2991 = vmatpush1.msra.mxu0 0.0
        %2992 = vmatprep.subr.mxu0 0.0
        %2993 = vmatpush1.msra.mxu0 0.0
        %2994 = vmatprep.subr.mxu0 0.0
        %2995 = vmatpush1.msra.mxu0 0.0
        %2996 = vmatprep.subr.mxu0 0.0
        %2997 = vmatpush1.msra.mxu0 0.0
        %2998 = vmatprep.subr.mxu0 0.0
        %2999 = vmatpush1.msra.mxu0 0.0
        %3000 = vmatprep.subr.mxu0 0.0
        %3001 = vmatpush1.msra.mxu0 0.0
        %3002 = vmatprep.subr.mxu0 0.0
        %3003 = vmatpush1.msra.mxu0 0.0
        %3004 = vmatprep.subr.mxu0 0.0
        %3005 = vmatpush1.msra.mxu0 0.0
        %3006 = vmatprep.subr.mxu0 0.0
        %3007 = vmatpush1.msra.mxu0 0.0
        %3008 = vmatprep.subr.mxu0 0.0
        %3009 = vmatpush1.msra.mxu0 0.0
        %v3010 = vand.u32 %v2704, 4294901760
        %3011 = vmatprep.subr.mxu0 %v3010
        %v3012 = vand.u32 %v2703, 4294901760
        %3013 = vmatpush1.msra.mxu0 %v3012
        %v3014 = vand.u32 %v2702, 4294901760
        %3015 = vmatprep.subr.mxu0 %v3014
        %v3016 = vand.u32 %v2701, 4294901760
        %3017 = vmatpush1.msra.mxu0 %v3016
        %v3018 = vand.u32 %v2700, 4294901760
        %3019 = vmatprep.subr.mxu0 %v3018
        %v3020 = vand.u32 %v2699, 4294901760
        %3021 = vmatpush1.msra.mxu0 %v3020
        %3022 = vmatprep.subr.mxu0 0.0
        %3023 = vmatpush2.msra.mxu0 0.0
        %3024 = vmatprep.subr.mxu0 0.0
        %3025 = vmatpush2.msra.mxu0 0.0
        %3026 = vmatprep.subr.mxu0 0.0
        %3027 = vmatpush2.msra.mxu0 0.0
        %3028 = vmatprep.subr.mxu0 0.0
        %3029 = vmatpush2.msra.mxu0 0.0
        %3030 = vmatprep.subr.mxu0 0.0
        %3031 = vmatpush2.msra.mxu0 0.0
        %3032 = vmatprep.subr.mxu0 0.0
        %3033 = vmatpush2.msra.mxu0 0.0
        %3034 = vmatprep.subr.mxu0 0.0
        %3035 = vmatpush2.msra.mxu0 0.0
        %3036 = vmatprep.subr.mxu0 0.0
        %3037 = vmatpush2.msra.mxu0 0.0
        %3038 = vmatprep.subr.mxu0 0.0
        %3039 = vmatpush2.msra.mxu0 0.0
        %3040 = vmatprep.subr.mxu0 0.0
        %3041 = vmatpush2.msra.mxu0 0.0
        %3042 = vmatprep.subr.mxu0 0.0
        %3043 = vmatpush2.msra.mxu0 0.0
        %3044 = vmatprep.subr.mxu0 0.0
        %3045 = vmatpush2.msra.mxu0 0.0
        %3046 = vmatprep.subr.mxu0 0.0
        %3047 = vmatpush2.msra.mxu0 0.0
        %3048 = vmatprep.subr.mxu0 0.0
        %3049 = vmatpush2.msra.mxu0 0.0
        %3050 = vmatprep.subr.mxu0 0.0
        %3051 = vmatpush2.msra.mxu0 0.0
        %3052 = vmatprep.subr.mxu0 0.0
        %3053 = vmatpush2.msra.mxu0 0.0
        %3054 = vmatprep.mubr.f32.mxu0 0.0
        %v3055 = vand.u32 %v2713, 4294901760
        %v3056 = vsub.f32 %v2713, %v3055
        %v3057 = vand.u32 %v3056, 4294901760
        %3058 = vmatmul.mubr.f32.gmra.mxu0 %v3057
        %v3059 = vpop.f32.mrf.mxu0
        %v3060 = vadd.f32 %v2980, %v3059
        %v3061 = vpop.f32.mrf.mxu0
        %v3062 = vadd.f32 %v2982, %v3061
        %3063 = vdwg.mxu0
        %3064 = vmatprep.subr.mxu0 0.0
        %3065 = vmatpush1.msra.mxu0 0.0
        %3066 = vmatprep.subr.mxu0 0.0
        %3067 = vmatpush1.msra.mxu0 0.0
        %3068 = vmatprep.subr.mxu0 0.0
        %3069 = vmatpush1.msra.mxu0 0.0
        %3070 = vmatprep.subr.mxu0 0.0
        %3071 = vmatpush1.msra.mxu0 0.0
        %3072 = vmatprep.subr.mxu0 0.0
        %3073 = vmatpush1.msra.mxu0 0.0
        %3074 = vmatprep.subr.mxu0 0.0
        %3075 = vmatpush1.msra.mxu0 0.0
        %3076 = vmatprep.subr.mxu0 0.0
        %3077 = vmatpush1.msra.mxu0 0.0
        %3078 = vmatprep.subr.mxu0 0.0
        %3079 = vmatpush1.msra.mxu0 0.0
        %3080 = vmatprep.subr.mxu0 0.0
        %3081 = vmatpush1.msra.mxu0 0.0
        %3082 = vmatprep.subr.mxu0 0.0
        %3083 = vmatpush1.msra.mxu0 0.0
        %3084 = vmatprep.subr.mxu0 0.0
        %3085 = vmatpush1.msra.mxu0 0.0
        %3086 = vmatprep.subr.mxu0 0.0
        %3087 = vmatpush1.msra.mxu0 0.0
        %3088 = vmatprep.subr.mxu0 0.0
        %3089 = vmatpush1.msra.mxu0 0.0
        %v3090 = vand.u32 %v2704, 4294901760
        %v3091 = vsub.f32 %v2704, %v3090
        %v3092 = vand.u32 %v3091, 4294901760
        %3093 = vmatprep.subr.mxu0 %v3092
        %v3094 = vand.u32 %v2703, 4294901760
        %v3095 = vsub.f32 %v2703, %v3094
        %v3096 = vand.u32 %v3095, 4294901760
        %3097 = vmatpush1.msra.mxu0 %v3096
        %v3098 = vand.u32 %v2702, 4294901760
        %v3099 = vsub.f32 %v2702, %v3098
        %v3100 = vand.u32 %v3099, 4294901760
        %3101 = vmatprep.subr.mxu0 %v3100
        %v3102 = vand.u32 %v2701, 4294901760
        %v3103 = vsub.f32 %v2701, %v3102
        %v3104 = vand.u32 %v3103, 4294901760
        %3105 = vmatpush1.msra.mxu0 %v3104
        %v3106 = vand.u32 %v2700, 4294901760
        %v3107 = vsub.f32 %v2700, %v3106
        %v3108 = vand.u32 %v3107, 4294901760
        %3109 = vmatprep.subr.mxu0 %v3108
        %v3110 = vand.u32 %v2699, 4294901760
        %v3111 = vsub.f32 %v2699, %v3110
        %v3112 = vand.u32 %v3111, 4294901760
        %3113 = vmatpush1.msra.mxu0 %v3112
        %3114 = vmatprep.subr.mxu0 0.0
        %3115 = vmatpush2.msra.mxu0 0.0
        %3116 = vmatprep.subr.mxu0 0.0
        %3117 = vmatpush2.msra.mxu0 0.0
        %3118 = vmatprep.subr.mxu0 0.0
        %3119 = vmatpush2.msra.mxu0 0.0
        %3120 = vmatprep.subr.mxu0 0.0
        %3121 = vmatpush2.msra.mxu0 0.0
        %3122 = vmatprep.subr.mxu0 0.0
        %3123 = vmatpush2.msra.mxu0 0.0
        %3124 = vmatprep.subr.mxu0 0.0
        %3125 = vmatpush2.msra.mxu0 0.0
        %3126 = vmatprep.subr.mxu0 0.0
        %3127 = vmatpush2.msra.mxu0 0.0
        %3128 = vmatprep.subr.mxu0 0.0
        %3129 = vmatpush2.msra.mxu0 0.0
        %3130 = vmatprep.subr.mxu0 0.0
        %3131 = vmatpush2.msra.mxu0 0.0
        %3132 = vmatprep.subr.mxu0 0.0
        %3133 = vmatpush2.msra.mxu0 0.0
        %3134 = vmatprep.subr.mxu0 0.0
        %3135 = vmatpush2.msra.mxu0 0.0
        %3136 = vmatprep.subr.mxu0 0.0
        %3137 = vmatpush2.msra.mxu0 0.0
        %3138 = vmatprep.subr.mxu0 0.0
        %3139 = vmatpush2.msra.mxu0 0.0
        %3140 = vmatprep.subr.mxu0 0.0
        %3141 = vmatpush2.msra.mxu0 0.0
        %3142 = vmatprep.subr.mxu0 0.0
        %3143 = vmatpush2.msra.mxu0 0.0
        %3144 = vmatprep.subr.mxu0 0.0
        %3145 = vmatpush2.msra.mxu0 0.0
        %3146 = vmatprep.mubr.f32.mxu0 0.0
        %v3147 = vand.u32 %v2713, 4294901760
        %3148 = vmatmul.mubr.f32.gmra.mxu0 %v3147
        %v3149 = vpop.f32.mrf.mxu0
        %v3150 = vadd.f32 %v3060, %v3149
        %v3151 = vpop.f32.mrf.mxu0
        %v3152 = vadd.f32 %v3062, %v3151
        %3153 = vdwg.mxu0
        %3154 = vmatprep.subr.mxu0 0.0
        %3155 = vmatpush1.msra.mxu0 0.0
        %3156 = vmatprep.subr.mxu0 0.0
        %3157 = vmatpush1.msra.mxu0 0.0
        %3158 = vmatprep.subr.mxu0 0.0
        %3159 = vmatpush1.msra.mxu0 0.0
        %3160 = vmatprep.subr.mxu0 0.0
        %3161 = vmatpush1.msra.mxu0 0.0
        %3162 = vmatprep.subr.mxu0 0.0
        %3163 = vmatpush1.msra.mxu0 0.0
        %3164 = vmatprep.subr.mxu0 0.0
        %3165 = vmatpush1.msra.mxu0 0.0
        %3166 = vmatprep.subr.mxu0 0.0
        %3167 = vmatpush1.msra.mxu0 0.0
        %3168 = vmatprep.subr.mxu0 0.0
        %3169 = vmatpush1.msra.mxu0 0.0
        %3170 = vmatprep.subr.mxu0 0.0
        %3171 = vmatpush1.msra.mxu0 0.0
        %3172 = vmatprep.subr.mxu0 0.0
        %3173 = vmatpush1.msra.mxu0 0.0
        %3174 = vmatprep.subr.mxu0 0.0
        %3175 = vmatpush1.msra.mxu0 0.0
        %3176 = vmatprep.subr.mxu0 0.0
        %3177 = vmatpush1.msra.mxu0 0.0
        %3178 = vmatprep.subr.mxu0 0.0
        %3179 = vmatpush1.msra.mxu0 0.0
        %v3180 = vand.u32 %v2704, 4294901760
        %3181 = vmatprep.subr.mxu0 %v3180
        %v3182 = vand.u32 %v2703, 4294901760
        %3183 = vmatpush1.msra.mxu0 %v3182
        %v3184 = vand.u32 %v2702, 4294901760
        %3185 = vmatprep.subr.mxu0 %v3184
        %v3186 = vand.u32 %v2701, 4294901760
        %3187 = vmatpush1.msra.mxu0 %v3186
        %v3188 = vand.u32 %v2700, 4294901760
        %3189 = vmatprep.subr.mxu0 %v3188
        %v3190 = vand.u32 %v2699, 4294901760
        %3191 = vmatpush1.msra.mxu0 %v3190
        %3192 = vmatprep.subr.mxu0 0.0
        %3193 = vmatpush2.msra.mxu0 0.0
        %3194 = vmatprep.subr.mxu0 0.0
        %3195 = vmatpush2.msra.mxu0 0.0
        %3196 = vmatprep.subr.mxu0 0.0
        %3197 = vmatpush2.msra.mxu0 0.0
        %3198 = vmatprep.subr.mxu0 0.0
        %3199 = vmatpush2.msra.mxu0 0.0
        %3200 = vmatprep.subr.mxu0 0.0
        %3201 = vmatpush2.msra.mxu0 0.0
        %3202 = vmatprep.subr.mxu0 0.0
        %3203 = vmatpush2.msra.mxu0 0.0
        %3204 = vmatprep.subr.mxu0 0.0
        %3205 = vmatpush2.msra.mxu0 0.0
        %3206 = vmatprep.subr.mxu0 0.0
        %3207 = vmatpush2.msra.mxu0 0.0
        %3208 = vmatprep.subr.mxu0 0.0
        %3209 = vmatpush2.msra.mxu0 0.0
        %3210 = vmatprep.subr.mxu0 0.0
        %3211 = vmatpush2.msra.mxu0 0.0
        %3212 = vmatprep.subr.mxu0 0.0
        %3213 = vmatpush2.msra.mxu0 0.0
        %3214 = vmatprep.subr.mxu0 0.0
        %3215 = vmatpush2.msra.mxu0 0.0
        %3216 = vmatprep.subr.mxu0 0.0
        %3217 = vmatpush2.msra.mxu0 0.0
        %3218 = vmatprep.subr.mxu0 0.0
        %3219 = vmatpush2.msra.mxu0 0.0
        %3220 = vmatprep.subr.mxu0 0.0
        %3221 = vmatpush2.msra.mxu0 0.0
        %3222 = vmatprep.subr.mxu0 0.0
        %3223 = vmatpush2.msra.mxu0 0.0
        %3224 = vmatprep.mubr.f32.mxu0 0.0
        %v3225 = vand.u32 %v2713, 4294901760
        %3226 = vmatmul.mubr.f32.gmra.mxu0 %v3225
        %v3227 = vpop.f32.mrf.mxu0
        %v3228 = vadd.f32 %v3150, %v3227
        %v3229 = vpop.f32.mrf.mxu0
        %v3230 = vadd.f32 %v3152, %v3229
        %3231 = vdwg.mxu0
        %v3232 = vsub.f32 0.0, %v3228
        %v3233 = vsub.f32 0.0, %v3230
        %v3234 = vmul.f32 %v3232, 1.442695
        %v3235 = vpow.pop %v3234
        %v3236 = vmul.f32 %v3233, 1.442695
        %v3237 = vpow.pop %v3236
        %v3238 = vadd.f32 %v3235, 1.0
        %v3239 = vadd.f32 %v3237, 1.0
        %v3240 = vrcp.pop %v3238
        %v3241 = vmul.f32 1.0, %v3240
        %v3242 = vrcp.pop %v3239
        %v3243 = vmul.f32 1.0, %v3242
        %v3244 = vmul.f32 %v3228, %v3241
        %v3245 = vmul.f32 %v3230, %v3243
        %v3246 = vadd.f32 %v3244, %v3245
        %3247 = vadd.xlane.f32.xlu0 %v3246
        %v3248 = vpop.xlane.xlu0 %3247
        %v3249 = vrcp.pop 256.0
        %v3250 = vmul.f32 %v3248, %v3249
        %v3251 = vsub.f32 %v3244, %v3250
        %v3252 = vsub.f32 %v3245, %v3250
        %v3253 = vmul.f32 %v3251, %v3251
        %v3254 = vmul.f32 %v3252, %v3252
        %v3255 = vadd.f32 %v3253, %v3254
        %3256 = vadd.xlane.f32.xlu0 %v3255
        %v3257 = vpop.xlane.xlu0 %3256
        %v3258 = vrcp.pop 255.0
        %v3259 = vmul.f32 %v3257, %v3258
        %v3260 = vadd.f32 %v3259, 0.0001
        %v3261 = vmul.f32 %v3260, 4.0
        %v3262 = vrcp.pop %v3261
        %v3263 = vmul.f32 %v3253, %v3262
        %v3264 = vmul.f32 %v3254, %v3262
        %v3265 = vadd.f32 %v3263, 0.5
        %v3266 = vadd.f32 %v3264, 0.5
        %v3267 = vsub.f32 0.0, %v3265
        %v3268 = vsub.f32 0.0, %v3266
        %v3269 = vmul.f32 %v3267, 1.442695
        %v3270 = vpow.pop %v3269
        %v3271 = vmul.f32 %v3268, 1.442695
        %v3272 = vpow.pop %v3271
        %v3273 = vadd.f32 %v3270, 1.0
        %v3274 = vadd.f32 %v3272, 1.0
        %v3275 = vrcp.pop %v3273
        %v3276 = vmul.f32 1.0, %v3275
        %v3277 = vrcp.pop %v3274
        %v3278 = vmul.f32 1.0, %v3277
        %v3279 = vmul.f32 %v3244, %v3276
        %v3280 = vmul.f32 %v3245, %v3278
        %3281 = vst [vmem:[%s325] sm:$0xff] %v3279
        %3282 = vst [vmem:[%s325 + $0x8] sm:$0xff] %v3280
        %s3283 = sand.u32 %s225, 1
        %s3284 = scalar_lea.sflag [#allocation5], %s3283
        %s3285 = sand.u32 %s225, 1
        %s3286 = smul.addr %s3285, 16
        %s3287 = scalar_lea.vmem [#allocation4], %s3286
        // Predicated region
        $region57: #{tpu_custom_call.1} parent=55 // pred_check
          %p3288 = pneg %p235
        $region58: #{tpu_custom_call.1} parent=55 // pred_check_branch
          %3290 = sbr.rel (%p3288) target = $region60
        $region59: #{tpu_custom_call.1} parent=55 // pred_region
          %s3292 = ssub.s32 256, 256
          %3293 = vsyncadd %s3284, %s3292
          %s3294 = smul.addr %s23, 2
          %s3295 = smul.addr %s3294, 128
          %s3296 = scalar_lea.hbm %s9, %s3295
          %s3298 = sshll.u32 %s3287, 4
          %s3299 = int_to_ptr.vmem [resolvable:$true] %s3298
          %3301 = dma.vmem_to_hbm [thread:$0]  %s3299, 256, %s3296, %s3284
        $region60: #{tpu_custom_call.1} parent=55 // pred_fallthru
          _
      $region56: #{tpu_custom_call.1} parent=5 // pred_fallthru
        _
      %p3302 = scmp.le.s32.totalorder 2, %s18
      // Predicated region
      $region61: #{tpu_custom_call.1} parent=5 // pred_check
        %p3303 = pneg %p3302
      $region62: #{tpu_custom_call.1} parent=5 // pred_check_branch
        %3305 = sbr.rel (%p3303) target = $region64
      $region63: #{tpu_custom_call.1} parent=5 // pred_region
        %s3306 = ssub.s32 %s18, 2
        // Predicated region
        $region65: #{tpu_custom_call.1} parent=63 // pred_check
          %p3307 = pneg %p241
        $region66: #{tpu_custom_call.1} parent=63 // pred_check_branch
          %3309 = sbr.rel (%p3307) target = $region68
        $region67: #{tpu_custom_call.1} parent=63 // pred_region
          %s3310 = sand.u32 %s226, 1
          %s3311 = scalar_lea.sflag [#allocation5], %s3310
          %s3312 = sand.u32 %s226, 1
          %s3313 = smul.addr %s3312, 16
          %s3314 = scalar_lea.vmem [#allocation4], %s3313
          %3315 = dma.done %s3311, 256
        $region68: #{tpu_custom_call.1} parent=63 // pred_fallthru
          _
      $region64: #{tpu_custom_call.1} parent=5 // pred_fallthru
        _
    $region6: #{tpu_custom_call.1} parent=1 // loop_footer
      %s22 = sadd.s32 1, %s18
    $region7: #{tpu_custom_call.1} parent=1 // loop_footer_branch
      %17 = sbr.rel target = $region3
    $region8: #{tpu_custom_call.1} parent=1 // loop_exit
      _
    %3316 = vsyncpa [#allocation5], 1
    %s3317 = scalar_lea.sflag [#allocation5], 1
    %3318 = vsyncpa %s3317, 1

</llo_original>
